<compile_context>
chip_gen: v6e
topology: v6e:2x2x1
jax: 0.10.0
libtpu: 0.0.40
codegen_flags: <defaults>
</compile_context>

<pallas_src>
import jax
import jax.numpy as jnp
from jax.experimental import pallas as pl
from jax.experimental.pallas import tpu as pltpu

EPS = 1e-5


# ----------------------------- fused Pallas kernel --------------------------

def _bottleneck_kernel(xt_ref, xc_ref, xb_ref, w1_ref, b1_ref, w2_ref, b2_ref,
                       w3_ref, b3_ref, o_ref):
    r = pl.program_id(1)
    nr = pl.num_programs(1)
    _, TH, WPAD, CP = xc_ref.shape          # row-block + padded width + padded channels
    W = o_ref.shape[2]                      # true image width
    PP = w1_ref.shape[1]                    # padded bottleneck ("planes") width

    # ---- conv1 (1x1) + bn1 + relu over the TH-row block plus one halo row above/below.
    x_all = jnp.concatenate([xt_ref[0], xc_ref[0], xb_ref[0]], axis=0)   # (TH+2, WPAD, CP) bf16
    a1 = jnp.dot(x_all.reshape((TH + 2) * WPAD, CP), w1_ref[...],
                 preferred_element_type=jnp.float32)
    a1 = jnp.maximum(a1 + b1_ref[...], 0.0).reshape(TH + 2, WPAD, PP)

    # conv2's zero padding lives in bn1-output space: zero the out-of-image border
    # (left/right pad columns always; halo rows only at the top/bottom of the image).
    row = jax.lax.broadcasted_iota(jnp.int32, (TH + 2, WPAD, PP), 0)
    col = jax.lax.broadcasted_iota(jnp.int32, (TH + 2, WPAD, PP), 1)
    valid = ((col >= 1) & (col <= W)
             & ((row >= 1) | (r > 0)) & ((row <= TH) | (r < nr - 1)))
    a1 = jnp.where(valid, a1, 0.0).astype(jnp.bfloat16)

    # ---- conv2 (3x3, stride 1, pad 1) + bn2 + relu as 9 shifted MXU matmuls (all in VMEM).
    acc = jnp.zeros((TH * W, PP), jnp.float32)
    for kh in range(3):
        for kw in range(3):
            patch = a1[kh:kh + TH, kw:kw + W, :].reshape(TH * W, PP)
            acc = acc + jnp.dot(patch, w2_ref[kh * 3 + kw],
                                preferred_element_type=jnp.float32)
    a2 = jnp.maximum(acc + b2_ref[...], 0.0).astype(jnp.bfloat16)

    # ---- conv3 (1x1) + bn3 + residual + relu (downsample=None => residual is x itself).
    out = jnp.dot(a2, w3_ref[...], preferred_element_type=jnp.float32) + b3_ref[...]
    res = x_all[1:TH + 1, 1:W + 1, :].reshape(TH * W, CP).astype(jnp.float32)
    out = jnp.maximum(out + res, 0.0)
    o_ref[0] = out.reshape(TH, W, CP).astype(o_ref.dtype)


# ------------------------------ JAX glue ------------------------------------

def _round_up(v, m):
    return (v + m - 1) // m * m


def _bn_fold(gamma, beta, mean, var):
    scale = gamma / jnp.sqrt(var + EPS)
    bias = beta - mean * scale
    return scale.astype(jnp.float32), bias.astype(jnp.float32)


def bottleneck_forward(x_nchw, params, stride=1, block_h=8):
    """Fused Pallas implementation of Bottleneck.forward (downsample=None)."""
    N, Cin, H, W = x_nchw.shape
    planes = params["w1"].shape[0]
    c4 = 4 * planes
    # downsample is None => residual = x; that only type-checks when stride == 1
    # and inplanes == 4*planes (same constraint as the PyTorch module).
    assert stride == 1 and Cin == c4, \
        "downsample=None requires stride==1 and inplanes==4*planes"

    CP = _round_up(c4, 128)            # lane-dense input / output channels
    PP = _round_up(planes, 128)        # lane-dense bottleneck channels
    TH = block_h if H % block_h == 0 else H
    R = H // TH
    WPAD = _round_up(W + 2, 16)        # width + conv2 pad, sublane aligned for bf16

    # Fold BN (running stats) into the conv weights + per-channel bias.
    s1, b1 = _bn_fold(params["g1"], params["be1"], params["m1"], params["v1"])
    s2, b2 = _bn_fold(params["g2"], params["be2"], params["m2"], params["v2"])
    s3, b3 = _bn_fold(params["g3"], params["be3"], params["m3"], params["v3"])

    w1m = jnp.transpose(params["w1"].reshape(planes, Cin), (1, 0)) * s1[None, :]
    w2m = (jnp.transpose(params["w2"], (2, 3, 1, 0)).reshape(9, planes, planes)
           * s2[None, None, :])
    w3m = jnp.transpose(params["w3"].reshape(c4, planes), (1, 0)) * s3[None, :]

    w1p = jnp.zeros((CP, PP), jnp.float32).at[:Cin, :planes].set(w1m).astype(jnp.bfloat16)
    w2p = jnp.zeros((9, PP, PP), jnp.float32).at[:, :planes, :planes].set(w2m).astype(jnp.bfloat16)
    w3p = jnp.zeros((PP, CP), jnp.float32).at[:planes, :c4].set(w3m).astype(jnp.bfloat16)
    b1p = jnp.zeros((1, PP), jnp.float32).at[0, :planes].set(b1)
    b2p = jnp.zeros((1, PP), jnp.float32).at[0, :planes].set(b2)
    b3p = jnp.zeros((1, CP), jnp.float32).at[0, :c4].set(b3)

    # NHWC, zero-pad width (conv2 halo) and channels (lane density), bf16 for the MXU.
    x = jnp.transpose(x_nchw, (0, 2, 3, 1))
    x = jnp.pad(x, ((0, 0), (0, 0), (1, WPAD - W - 1), (0, CP - Cin))).astype(jnp.bfloat16)

    # One halo row above / below every TH-row block (zeros at the image border;
    # the kernel re-zeros them in bn1-output space so conv2 sees true zero pad).
    x_dn = jnp.pad(x, ((0, 0), (1, 0), (0, 0), (0, 0)))[:, :H]
    x_up = jnp.pad(x, ((0, 0), (0, 1), (0, 0), (0, 0)))[:, 1:]
    x_top = x_dn[:, ::TH]              # (N, R, WPAD, CP): row above each block
    x_bot = x_up[:, TH - 1::TH]        # (N, R, WPAD, CP): row below each block

    out = pl.pallas_call(
        _bottleneck_kernel,
        out_shape=jax.ShapeDtypeStruct((N, H, W, CP), jnp.float32),
        grid=(N, R),
        in_specs=[
            pl.BlockSpec((1, 1, WPAD, CP), lambda n, r: (n, r, 0, 0)),    # halo row above
            pl.BlockSpec((1, TH, WPAD, CP), lambda n, r: (n, r, 0, 0)),   # core rows
            pl.BlockSpec((1, 1, WPAD, CP), lambda n, r: (n, r, 0, 0)),    # halo row below
            pl.BlockSpec((CP, PP), lambda n, r: (0, 0)),                  # w1 (VMEM resident)
            pl.BlockSpec((1, PP), lambda n, r: (0, 0)),                   # b1
            pl.BlockSpec((9, PP, PP), lambda n, r: (0, 0, 0)),            # w2
            pl.BlockSpec((1, PP), lambda n, r: (0, 0)),                   # b2
            pl.BlockSpec((PP, CP), lambda n, r: (0, 0)),                  # w3
            pl.BlockSpec((1, CP), lambda n, r: (0, 0)),                   # b3
        ],
        out_specs=pl.BlockSpec((1, TH, W, CP), lambda n, r: (n, r, 0, 0)),
        compiler_params=pltpu.CompilerParams(
            dimension_semantics=("parallel", "parallel"),
            vmem_limit_bytes=32 * 1024 * 1024,   # tune per generation (v7x: keep <= half of 64 MiB)
        ),
    )(x_top, x, x_bot, w1p, b1p, w2p, b2p, w3p, b3p)

    out = out[..., :c4]                                   # drop channel padding
    return jnp.transpose(out, (0, 3, 1, 2))               # back to NCHW


# --------------------------- pure-JAX reference ------------------------------

def _ref_forward(x, params, stride=1):
    def conv(inp, w, s, pad):
        return jax.lax.conv_general_dilated(
            inp, w, window_strides=(s, s), padding=pad,
            dimension_numbers=("NCHW", "OIHW", "NCHW"))

    def bn(inp, g, be, m, v):
        sc = g / jnp.sqrt(v + EPS)
        return inp * sc[None, :, None, None] + (be - m * sc)[None, :, None, None]

    out = jnp.maximum(bn(conv(x, params["w1"], 1, [(0, 0), (0, 0)]),
                         params["g1"], params["be1"], params["m1"], params["v1"]), 0.0)
    out = jnp.maximum(bn(conv(out, params["w2"], stride, [(1, 1), (1, 1)]),
                         params["g2"], params["be2"], params["m2"], params["v2"]), 0.0)
    out = bn(conv(out, params["w3"], 1, [(0, 0), (0, 0)]),
             params["g3"], params["be3"], params["m3"], params["v3"])
    out = out + x
    return jnp.maximum(out, 0.0)


# --------------------------------- main ---------------------------------------

def _init_params(key, inplanes, planes):
    ks = jax.random.split(key, 16)
    expansion = 4
    return {
        "w1": 0.1 * jax.random.normal(ks[0], (planes, inplanes, 1, 1), jnp.float32),
        "w2": 0.1 * jax.random.normal(ks[1], (planes, planes, 3, 3), jnp.float32),
        "w3": 0.1 * jax.random.normal(ks[2], (planes * expansion, planes, 1, 1), jnp.float32),
        "g1": jax.random.uniform(ks[3], (planes,), jnp.float32, 0.5, 1.5),
        "be1": 0.1 * jax.random.normal(ks[4], (planes,), jnp.float32),
        "m1": 0.1 * jax.random.normal(ks[5], (planes,), jnp.float32),
        "v1": jax.random.uniform(ks[6], (planes,), jnp.float32, 0.5, 1.5),
        "g2": jax.random.uniform(ks[7], (planes,), jnp.float32, 0.5, 1.5),
        "be2": 0.1 * jax.random.normal(ks[8], (planes,), jnp.float32),
        "m2": 0.1 * jax.random.normal(ks[9], (planes,), jnp.float32),
        "v2": jax.random.uniform(ks[10], (planes,), jnp.float32, 0.5, 1.5),
        "g3": jax.random.uniform(ks[11], (planes * expansion,), jnp.float32, 0.5, 1.5),
        "be3": 0.1 * jax.random.normal(ks[12], (planes * expansion,), jnp.float32),
        "m3": 0.1 * jax.random.normal(ks[13], (planes * expansion,), jnp.float32),
        "v3": jax.random.uniform(ks[14], (planes * expansion,), jnp.float32, 0.5, 1.5),
    }


if __name__ == "__main__":
    key = jax.random.PRNGKey(0)
    kx, kp = jax.random.split(key)

    # Bottleneck(inplanes=32, planes=8, stride=1, downsample=None)
    inplanes, planes, stride = 32, 8, 1
    N, H, W = 2, 16, 16

    x = jax.random.normal(kx, (N, inplanes, H, W), jnp.float32)   # NCHW like PyTorch
    params = _init_params(kp, inplanes, planes)

    fwd = jax.jit(bottleneck_forward, static_argnames=("stride", "block_h"))
    out = jax.block_until_ready(fwd(x, params, stride=stride))
    ref = jax.block_until_ready(_ref_forward(x, params, stride=stride))

    assert out.shape == (N, planes * 4, H, W), out.shape
    # bf16 MXU inputs (f32 accumulation) => relaxed tolerance vs the f32 reference.
    max_err = float(jnp.max(jnp.abs(out - ref)))
    assert jnp.allclose(out, ref, atol=5e-2, rtol=5e-2), max_err

    print("KERNEL_OK")
</pallas_src>

<mosaic_0001>
module attributes {stable_mosaic.version = 11 : i64} {
  func.func @_bottleneck_kernel(%arg0: i32, %arg1: i32, %arg2: memref<1x1x32x128xbf16, #tpu.memory_space<vmem>>, %arg3: memref<1x8x32x128xbf16, #tpu.memory_space<vmem>>, %arg4: memref<1x1x32x128xbf16, #tpu.memory_space<vmem>>, %arg5: memref<128x128xbf16, #tpu.memory_space<vmem>>, %arg6: memref<1x128xf32, #tpu.memory_space<vmem>>, %arg7: memref<9x128x128xbf16, #tpu.memory_space<vmem>>, %arg8: memref<1x128xf32, #tpu.memory_space<vmem>>, %arg9: memref<128x128xbf16, #tpu.memory_space<vmem>>, %arg10: memref<1x128xf32, #tpu.memory_space<vmem>>, %arg11: memref<1x8x16x128xf32, #tpu.memory_space<vmem>>) attributes {dimension_semantics = [#tpu.dimension_semantics<parallel>, #tpu.dimension_semantics<parallel>], iteration_bounds = array<i64: 2, 2>, scalar_prefetch = 0 : i64, scratch_operands = 0 : i64, tpu.core_type = #tpu.core_type<tc>, window_params = [{transform_indices = @transform_0, window_bounds = array<i64: 1, 1, 32, 128>}, {transform_indices = @transform_1, window_bounds = array<i64: 1, 8, 32, 128>}, {transform_indices = @transform_2, window_bounds = array<i64: 1, 1, 32, 128>}, {pipeline_mode = #tpu.pipeline_mode<synchronous>, transform_indices = @transform_3, window_bounds = array<i64: 128, 128>}, {pipeline_mode = #tpu.pipeline_mode<synchronous>, transform_indices = @transform_4, window_bounds = array<i64: 1, 128>}, {pipeline_mode = #tpu.pipeline_mode<synchronous>, transform_indices = @transform_5, window_bounds = array<i64: 9, 128, 128>}, {pipeline_mode = #tpu.pipeline_mode<synchronous>, transform_indices = @transform_6, window_bounds = array<i64: 1, 128>}, {pipeline_mode = #tpu.pipeline_mode<synchronous>, transform_indices = @transform_7, window_bounds = array<i64: 128, 128>}, {pipeline_mode = #tpu.pipeline_mode<synchronous>, transform_indices = @transform_8, window_bounds = array<i64: 1, 128>}, {transform_indices = @transform_9, window_bounds = array<i64: 1, 8, 16, 128>}]} {
    %c0 = arith.constant 0 : index
    %c0_0 = arith.constant 0 : index
    %c0_1 = arith.constant 0 : index
    %c0_2 = arith.constant 0 : index
    %0 = vector.load %arg2[%c0, %c0_0, %c0_1, %c0_2] : memref<1x1x32x128xbf16, #tpu.memory_space<vmem>>, vector<1x1x32x128xbf16>
    %1 = vector.shape_cast %0 : vector<1x1x32x128xbf16> to vector<1x32x128xbf16>
    %c0_3 = arith.constant 0 : index
    %c0_4 = arith.constant 0 : index
    %c0_5 = arith.constant 0 : index
    %c0_6 = arith.constant 0 : index
    %2 = vector.load %arg3[%c0_3, %c0_4, %c0_5, %c0_6] : memref<1x8x32x128xbf16, #tpu.memory_space<vmem>>, vector<1x8x32x128xbf16>
    %3 = vector.shape_cast %2 : vector<1x8x32x128xbf16> to vector<8x32x128xbf16>
    %c0_7 = arith.constant 0 : index
    %c0_8 = arith.constant 0 : index
    %c0_9 = arith.constant 0 : index
    %c0_10 = arith.constant 0 : index
    %4 = vector.load %arg4[%c0_7, %c0_8, %c0_9, %c0_10] : memref<1x1x32x128xbf16, #tpu.memory_space<vmem>>, vector<1x1x32x128xbf16>
    %5 = vector.shape_cast %4 : vector<1x1x32x128xbf16> to vector<1x32x128xbf16>
    %6 = tpu.concatenate %1, %3, %5 in 0 : vector<1x32x128xbf16>, vector<8x32x128xbf16>, vector<1x32x128xbf16> -> vector<10x32x128xbf16>
    %7 = vector.shape_cast %6 : vector<10x32x128xbf16> to vector<320x128xbf16>
    %c0_11 = arith.constant 0 : index
    %c0_12 = arith.constant 0 : index
    %8 = vector.load %arg5[%c0_11, %c0_12] : memref<128x128xbf16, #tpu.memory_space<vmem>>, vector<128x128xbf16>
    %cst = arith.constant dense<0.000000e+00> : vector<320x128xf32>
    %9 = tpu.matmul %7, %8, %cst {dimension_numbers = #tpu.dot_dimension_numbers<[1], [0], [0], [1], [0, 0, 1, 1], [], []>} : vector<320x128xbf16>, vector<128x128xbf16>, vector<320x128xf32> -> vector<320x128xf32>
    %c0_13 = arith.constant 0 : index
    %c0_14 = arith.constant 0 : index
    %10 = vector.load %arg6[%c0_13, %c0_14] : memref<1x128xf32, #tpu.memory_space<vmem>>, vector<1x128xf32>
    %11 = vector.broadcast %10 : vector<1x128xf32> to vector<320x128xf32>
    %12 = arith.addf %9, %11 : vector<320x128xf32>
    %cst_15 = arith.constant 0.000000e+00 : f32
    %13 = vector.broadcast %cst_15 : f32 to vector<320x128xf32>
    %14 = arith.maximumf %12, %13 : vector<320x128xf32>
    %15 = vector.shape_cast %14 : vector<320x128xf32> to vector<10x32x128xf32>
    %16 = tpu.iota {dimensions = array<i32: 0>} : vector<10x32x128xi32>
    %17 = tpu.iota {dimensions = array<i32: 1>} : vector<10x32x128xi32>
    %c1_i32 = arith.constant 1 : i32
    %18 = vector.broadcast %c1_i32 : i32 to vector<10x32x128xi32>
    %19 = arith.cmpi sge, %17, %18 : vector<10x32x128xi32>
    %c16_i32 = arith.constant 16 : i32
    %20 = vector.broadcast %c16_i32 : i32 to vector<10x32x128xi32>
    %21 = arith.cmpi sle, %17, %20 : vector<10x32x128xi32>
    %22 = arith.andi %19, %21 : vector<10x32x128xi1>
    %c1_i32_16 = arith.constant 1 : i32
    %23 = vector.broadcast %c1_i32_16 : i32 to vector<10x32x128xi32>
    %24 = arith.cmpi sge, %16, %23 : vector<10x32x128xi32>
    %c0_i32 = arith.constant 0 : i32
    %25 = arith.cmpi sgt, %arg1, %c0_i32 : i32
    %26 = vector.broadcast %25 : i1 to vector<10x32x128xi1>
    %27 = arith.ori %24, %26 : vector<10x32x128xi1>
    %28 = arith.andi %22, %27 : vector<10x32x128xi1>
    %c8_i32 = arith.constant 8 : i32
    %29 = vector.broadcast %c8_i32 : i32 to vector<10x32x128xi32>
    %30 = arith.cmpi sle, %16, %29 : vector<10x32x128xi32>
    %c1_i32_17 = arith.constant 1 : i32
    %31 = arith.cmpi slt, %arg1, %c1_i32_17 : i32
    %32 = vector.broadcast %31 : i1 to vector<10x32x128xi1>
    %33 = arith.ori %30, %32 : vector<10x32x128xi1>
    %34 = arith.andi %28, %33 : vector<10x32x128xi1>
    %cst_18 = arith.constant 0.000000e+00 : f32
    %35 = vector.broadcast %cst_18 : f32 to vector<10x32x128xf32>
    %36 = arith.select %34, %15, %35 : vector<10x32x128xi1>, vector<10x32x128xf32>
    %37 = arith.truncf %36 : vector<10x32x128xf32> to vector<10x32x128xbf16>
    %cst_19 = arith.constant 0.000000e+00 : f32
    %38 = vector.broadcast %cst_19 : f32 to vector<128x128xf32>
    %39 = vector.extract_strided_slice %37 {offsets = [0, 0, 0], sizes = [8, 16, 128], strides = [1, 1, 1]} : vector<10x32x128xbf16> to vector<8x16x128xbf16>
    %40 = vector.shape_cast %39 : vector<8x16x128xbf16> to vector<128x128xbf16>
    %c0_20 = arith.constant 0 : index
    %c0_21 = arith.constant 0 : index
    %c0_22 = arith.constant 0 : index
    %41 = vector.load %arg7[%c0_20, %c0_21, %c0_22] : memref<9x128x128xbf16, #tpu.memory_space<vmem>>, vector<1x128x128xbf16>
    %42 = vector.shape_cast %41 : vector<1x128x128xbf16> to vector<128x128xbf16>
    %cst_23 = arith.constant dense<0.000000e+00> : vector<128x128xf32>
    %43 = tpu.matmul %40, %42, %cst_23 {dimension_numbers = #tpu.dot_dimension_numbers<[1], [0], [0], [1], [0, 0, 1, 1], [], []>} : vector<128x128xbf16>, vector<128x128xbf16>, vector<128x128xf32> -> vector<128x128xf32>
    %44 = arith.addf %38, %43 : vector<128x128xf32>
    %45 = vector.extract_strided_slice %37 {offsets = [0, 1, 0], sizes = [8, 16, 128], strides = [1, 1, 1]} : vector<10x32x128xbf16> to vector<8x16x128xbf16>
    %46 = vector.shape_cast %45 : vector<8x16x128xbf16> to vector<128x128xbf16>
    %c1 = arith.constant 1 : index
    %c0_24 = arith.constant 0 : index
    %c0_25 = arith.constant 0 : index
    %47 = vector.load %arg7[%c1, %c0_24, %c0_25] : memref<9x128x128xbf16, #tpu.memory_space<vmem>>, vector<1x128x128xbf16>
    %48 = vector.shape_cast %47 : vector<1x128x128xbf16> to vector<128x128xbf16>
    %cst_26 = arith.constant dense<0.000000e+00> : vector<128x128xf32>
    %49 = tpu.matmul %46, %48, %cst_26 {dimension_numbers = #tpu.dot_dimension_numbers<[1], [0], [0], [1], [0, 0, 1, 1], [], []>} : vector<128x128xbf16>, vector<128x128xbf16>, vector<128x128xf32> -> vector<128x128xf32>
    %50 = arith.addf %44, %49 : vector<128x128xf32>
    %51 = vector.extract_strided_slice %37 {offsets = [0, 2, 0], sizes = [8, 16, 128], strides = [1, 1, 1]} : vector<10x32x128xbf16> to vector<8x16x128xbf16>
    %52 = vector.shape_cast %51 : vector<8x16x128xbf16> to vector<128x128xbf16>
    %c2 = arith.constant 2 : index
    %c0_27 = arith.constant 0 : index
    %c0_28 = arith.constant 0 : index
    %53 = vector.load %arg7[%c2, %c0_27, %c0_28] : memref<9x128x128xbf16, #tpu.memory_space<vmem>>, vector<1x128x128xbf16>
    %54 = vector.shape_cast %53 : vector<1x128x128xbf16> to vector<128x128xbf16>
    %cst_29 = arith.constant dense<0.000000e+00> : vector<128x128xf32>
    %55 = tpu.matmul %52, %54, %cst_29 {dimension_numbers = #tpu.dot_dimension_numbers<[1], [0], [0], [1], [0, 0, 1, 1], [], []>} : vector<128x128xbf16>, vector<128x128xbf16>, vector<128x128xf32> -> vector<128x128xf32>
    %56 = arith.addf %50, %55 : vector<128x128xf32>
    %57 = vector.extract_strided_slice %37 {offsets = [1, 0, 0], sizes = [8, 16, 128], strides = [1, 1, 1]} : vector<10x32x128xbf16> to vector<8x16x128xbf16>
    %58 = vector.shape_cast %57 : vector<8x16x128xbf16> to vector<128x128xbf16>
    %c3 = arith.constant 3 : index
    %c0_30 = arith.constant 0 : index
    %c0_31 = arith.constant 0 : index
    %59 = vector.load %arg7[%c3, %c0_30, %c0_31] : memref<9x128x128xbf16, #tpu.memory_space<vmem>>, vector<1x128x128xbf16>
    %60 = vector.shape_cast %59 : vector<1x128x128xbf16> to vector<128x128xbf16>
    %cst_32 = arith.constant dense<0.000000e+00> : vector<128x128xf32>
    %61 = tpu.matmul %58, %60, %cst_32 {dimension_numbers = #tpu.dot_dimension_numbers<[1], [0], [0], [1], [0, 0, 1, 1], [], []>} : vector<128x128xbf16>, vector<128x128xbf16>, vector<128x128xf32> -> vector<128x128xf32>
    %62 = arith.addf %56, %61 : vector<128x128xf32>
    %63 = vector.extract_strided_slice %37 {offsets = [1, 1, 0], sizes = [8, 16, 128], strides = [1, 1, 1]} : vector<10x32x128xbf16> to vector<8x16x128xbf16>
    %64 = vector.shape_cast %63 : vector<8x16x128xbf16> to vector<128x128xbf16>
    %c4 = arith.constant 4 : index
    %c0_33 = arith.constant 0 : index
    %c0_34 = arith.constant 0 : index
    %65 = vector.load %arg7[%c4, %c0_33, %c0_34] : memref<9x128x128xbf16, #tpu.memory_space<vmem>>, vector<1x128x128xbf16>
    %66 = vector.shape_cast %65 : vector<1x128x128xbf16> to vector<128x128xbf16>
    %cst_35 = arith.constant dense<0.000000e+00> : vector<128x128xf32>
    %67 = tpu.matmul %64, %66, %cst_35 {dimension_numbers = #tpu.dot_dimension_numbers<[1], [0], [0], [1], [0, 0, 1, 1], [], []>} : vector<128x128xbf16>, vector<128x128xbf16>, vector<128x128xf32> -> vector<128x128xf32>
    %68 = arith.addf %62, %67 : vector<128x128xf32>
    %69 = vector.extract_strided_slice %37 {offsets = [1, 2, 0], sizes = [8, 16, 128], strides = [1, 1, 1]} : vector<10x32x128xbf16> to vector<8x16x128xbf16>
    %70 = vector.shape_cast %69 : vector<8x16x128xbf16> to vector<128x128xbf16>
    %c5 = arith.constant 5 : index
    %c0_36 = arith.constant 0 : index
    %c0_37 = arith.constant 0 : index
    %71 = vector.load %arg7[%c5, %c0_36, %c0_37] : memref<9x128x128xbf16, #tpu.memory_space<vmem>>, vector<1x128x128xbf16>
    %72 = vector.shape_cast %71 : vector<1x128x128xbf16> to vector<128x128xbf16>
    %cst_38 = arith.constant dense<0.000000e+00> : vector<128x128xf32>
    %73 = tpu.matmul %70, %72, %cst_38 {dimension_numbers = #tpu.dot_dimension_numbers<[1], [0], [0], [1], [0, 0, 1, 1], [], []>} : vector<128x128xbf16>, vector<128x128xbf16>, vector<128x128xf32> -> vector<128x128xf32>
    %74 = arith.addf %68, %73 : vector<128x128xf32>
    %75 = vector.extract_strided_slice %37 {offsets = [2, 0, 0], sizes = [8, 16, 128], strides = [1, 1, 1]} : vector<10x32x128xbf16> to vector<8x16x128xbf16>
    %76 = vector.shape_cast %75 : vector<8x16x128xbf16> to vector<128x128xbf16>
    %c6 = arith.constant 6 : index
    %c0_39 = arith.constant 0 : index
    %c0_40 = arith.constant 0 : index
    %77 = vector.load %arg7[%c6, %c0_39, %c0_40] : memref<9x128x128xbf16, #tpu.memory_space<vmem>>, vector<1x128x128xbf16>
    %78 = vector.shape_cast %77 : vector<1x128x128xbf16> to vector<128x128xbf16>
    %cst_41 = arith.constant dense<0.000000e+00> : vector<128x128xf32>
    %79 = tpu.matmul %76, %78, %cst_41 {dimension_numbers = #tpu.dot_dimension_numbers<[1], [0], [0], [1], [0, 0, 1, 1], [], []>} : vector<128x128xbf16>, vector<128x128xbf16>, vector<128x128xf32> -> vector<128x128xf32>
    %80 = arith.addf %74, %79 : vector<128x128xf32>
    %81 = vector.extract_strided_slice %37 {offsets = [2, 1, 0], sizes = [8, 16, 128], strides = [1, 1, 1]} : vector<10x32x128xbf16> to vector<8x16x128xbf16>
    %82 = vector.shape_cast %81 : vector<8x16x128xbf16> to vector<128x128xbf16>
    %c7 = arith.constant 7 : index
    %c0_42 = arith.constant 0 : index
    %c0_43 = arith.constant 0 : index
    %83 = vector.load %arg7[%c7, %c0_42, %c0_43] : memref<9x128x128xbf16, #tpu.memory_space<vmem>>, vector<1x128x128xbf16>
    %84 = vector.shape_cast %83 : vector<1x128x128xbf16> to vector<128x128xbf16>
    %cst_44 = arith.constant dense<0.000000e+00> : vector<128x128xf32>
    %85 = tpu.matmul %82, %84, %cst_44 {dimension_numbers = #tpu.dot_dimension_numbers<[1], [0], [0], [1], [0, 0, 1, 1], [], []>} : vector<128x128xbf16>, vector<128x128xbf16>, vector<128x128xf32> -> vector<128x128xf32>
    %86 = arith.addf %80, %85 : vector<128x128xf32>
    %87 = vector.extract_strided_slice %37 {offsets = [2, 2, 0], sizes = [8, 16, 128], strides = [1, 1, 1]} : vector<10x32x128xbf16> to vector<8x16x128xbf16>
    %88 = vector.shape_cast %87 : vector<8x16x128xbf16> to vector<128x128xbf16>
    %c8 = arith.constant 8 : index
    %c0_45 = arith.constant 0 : index
    %c0_46 = arith.constant 0 : index
    %89 = vector.load %arg7[%c8, %c0_45, %c0_46] : memref<9x128x128xbf16, #tpu.memory_space<vmem>>, vector<1x128x128xbf16>
    %90 = vector.shape_cast %89 : vector<1x128x128xbf16> to vector<128x128xbf16>
    %cst_47 = arith.constant dense<0.000000e+00> : vector<128x128xf32>
    %91 = tpu.matmul %88, %90, %cst_47 {dimension_numbers = #tpu.dot_dimension_numbers<[1], [0], [0], [1], [0, 0, 1, 1], [], []>} : vector<128x128xbf16>, vector<128x128xbf16>, vector<128x128xf32> -> vector<128x128xf32>
    %92 = arith.addf %86, %91 : vector<128x128xf32>
    %c0_48 = arith.constant 0 : index
    %c0_49 = arith.constant 0 : index
    %93 = vector.load %arg8[%c0_48, %c0_49] : memref<1x128xf32, #tpu.memory_space<vmem>>, vector<1x128xf32>
    %94 = vector.broadcast %93 : vector<1x128xf32> to vector<128x128xf32>
    %95 = arith.addf %92, %94 : vector<128x128xf32>
    %cst_50 = arith.constant 0.000000e+00 : f32
    %96 = vector.broadcast %cst_50 : f32 to vector<128x128xf32>
    %97 = arith.maximumf %95, %96 : vector<128x128xf32>
    %98 = arith.truncf %97 : vector<128x128xf32> to vector<128x128xbf16>
    %c0_51 = arith.constant 0 : index
    %c0_52 = arith.constant 0 : index
    %99 = vector.load %arg9[%c0_51, %c0_52] : memref<128x128xbf16, #tpu.memory_space<vmem>>, vector<128x128xbf16>
    %cst_53 = arith.constant dense<0.000000e+00> : vector<128x128xf32>
    %100 = tpu.matmul %98, %99, %cst_53 {dimension_numbers = #tpu.dot_dimension_numbers<[1], [0], [0], [1], [0, 0, 1, 1], [], []>} : vector<128x128xbf16>, vector<128x128xbf16>, vector<128x128xf32> -> vector<128x128xf32>
    %c0_54 = arith.constant 0 : index
    %c0_55 = arith.constant 0 : index
    %101 = vector.load %arg10[%c0_54, %c0_55] : memref<1x128xf32, #tpu.memory_space<vmem>>, vector<1x128xf32>
    %102 = vector.broadcast %101 : vector<1x128xf32> to vector<128x128xf32>
    %103 = arith.addf %100, %102 : vector<128x128xf32>
    %104 = vector.extract_strided_slice %6 {offsets = [1, 1, 0], sizes = [8, 16, 128], strides = [1, 1, 1]} : vector<10x32x128xbf16> to vector<8x16x128xbf16>
    %105 = vector.shape_cast %104 : vector<8x16x128xbf16> to vector<128x128xbf16>
    %106 = arith.extf %105 : vector<128x128xbf16> to vector<128x128xf32>
    %107 = arith.addf %103, %106 : vector<128x128xf32>
    %cst_56 = arith.constant 0.000000e+00 : f32
    %108 = vector.broadcast %cst_56 : f32 to vector<128x128xf32>
    %109 = arith.maximumf %107, %108 : vector<128x128xf32>
    %110 = vector.shape_cast %109 : vector<128x128xf32> to vector<8x16x128xf32>
    %c0_57 = arith.constant 0 : index
    %c0_58 = arith.constant 0 : index
    %c0_59 = arith.constant 0 : index
    %c0_60 = arith.constant 0 : index
    %111 = vector.load %arg11[%c0_57, %c0_58, %c0_59, %c0_60] : memref<1x8x16x128xf32, #tpu.memory_space<vmem>>, vector<1x8x16x128xf32>
    %112 = vector.shape_cast %111 : vector<1x8x16x128xf32> to vector<8x16x128xf32>
    %113 = vector.shape_cast %110 : vector<8x16x128xf32> to vector<1x8x16x128xf32>
    tpu.vector_store %arg11[%c0_57, %c0_58, %c0_59, %c0_60], %113 {strides = array<i32>} : memref<1x8x16x128xf32, #tpu.memory_space<vmem>>, vector<1x8x16x128xf32>,
    return
  }
  func.func @transform_0(%arg0: i32, %arg1: i32) -> (i32, i32, i32, i32) {
    %c0_i32 = arith.constant 0 : i32
    %c0_i32_0 = arith.constant 0 : i32
    %c0_i32_1 = arith.constant 0 : i32
    return %arg0, %arg1, %c0_i32, %c0_i32_0 : i32, i32, i32, i32
  }
  func.func @transform_1(%arg0: i32, %arg1: i32) -> (i32, i32, i32, i32) {
    %c0_i32 = arith.constant 0 : i32
    %c0_i32_0 = arith.constant 0 : i32
    %c0_i32_1 = arith.constant 0 : i32
    return %arg0, %arg1, %c0_i32, %c0_i32_0 : i32, i32, i32, i32
  }
  func.func @transform_2(%arg0: i32, %arg1: i32) -> (i32, i32, i32, i32) {
    %c0_i32 = arith.constant 0 : i32
    %c0_i32_0 = arith.constant 0 : i32
    %c0_i32_1 = arith.constant 0 : i32
    return %arg0, %arg1, %c0_i32, %c0_i32_0 : i32, i32, i32, i32
  }
  func.func @transform_3(%arg0: i32, %arg1: i32) -> (i32, i32) {
    %c0_i32 = arith.constant 0 : i32
    %c0_i32_0 = arith.constant 0 : i32
    %c0_i32_1 = arith.constant 0 : i32
    return %c0_i32, %c0_i32_0 : i32, i32
  }
  func.func @transform_4(%arg0: i32, %arg1: i32) -> (i32, i32) {
    %c0_i32 = arith.constant 0 : i32
    %c0_i32_0 = arith.constant 0 : i32
    %c0_i32_1 = arith.constant 0 : i32
    return %c0_i32, %c0_i32_0 : i32, i32
  }
  func.func @transform_5(%arg0: i32, %arg1: i32) -> (i32, i32, i32) {
    %c0_i32 = arith.constant 0 : i32
    %c0_i32_0 = arith.constant 0 : i32
    %c0_i32_1 = arith.constant 0 : i32
    %c0_i32_2 = arith.constant 0 : i32
    return %c0_i32, %c0_i32_0, %c0_i32_1 : i32, i32, i32
  }
  func.func @transform_6(%arg0: i32, %arg1: i32) -> (i32, i32) {
    %c0_i32 = arith.constant 0 : i32
    %c0_i32_0 = arith.constant 0 : i32
    %c0_i32_1 = arith.constant 0 : i32
    return %c0_i32, %c0_i32_0 : i32, i32
  }
  func.func @transform_7(%arg0: i32, %arg1: i32) -> (i32, i32) {
    %c0_i32 = arith.constant 0 : i32
    %c0_i32_0 = arith.constant 0 : i32
    %c0_i32_1 = arith.constant 0 : i32
    return %c0_i32, %c0_i32_0 : i32, i32
  }
  func.func @transform_8(%arg0: i32, %arg1: i32) -> (i32, i32) {
    %c0_i32 = arith.constant 0 : i32
    %c0_i32_0 = arith.constant 0 : i32
    %c0_i32_1 = arith.constant 0 : i32
    return %c0_i32, %c0_i32_0 : i32, i32
  }
  func.func @transform_9(%arg0: i32, %arg1: i32) -> (i32, i32, i32, i32) {
    %c0_i32 = arith.constant 0 : i32
    %c0_i32_0 = arith.constant 0 : i32
    %c0_i32_1 = arith.constant 0 : i32
    return %arg0, %arg1, %c0_i32, %c0_i32_0 : i32, i32, i32, i32
  }
}

</mosaic_0001>

<llo_original>
// kernel: bottleneck_forward.1
$region0: #{bottleneck_forward.1}
  #allocation0 [shape = 'u32[]', space=smem, size = 0x4, offset = 0x4, fixed_abs, tag = 'smem constant byte address 0x4 - core index']
  #allocation1 [shape = 'u32[144,128]{1,0:T(1,128)}', space=vmem, size = 0x12000, scoped, tag = 'internal scratch']
  %s0 = inlined_call_operand.vmem [shape: bf16[2,2,32,128], index: 0, kind: input, shape index: {}]
  %s1 = inlined_call_operand.vmem [shape: bf16[2,16,32,128], index: 1, kind: input, shape index: {}]
  %s2 = inlined_call_operand.vmem [shape: bf16[2,2,32,128], index: 2, kind: input, shape index: {}]
  %s3 = inlined_call_operand.vmem [shape: bf16[128,128], index: 3, kind: input, shape index: {}]
  %s4 = inlined_call_operand.vmem [shape: f32[1,128], index: 4, kind: input, shape index: {}]
  %s5 = inlined_call_operand.vmem [shape: bf16[9,128,128], index: 5, kind: input, shape index: {}]
  %s6 = inlined_call_operand.vmem [shape: f32[1,128], index: 6, kind: input, shape index: {}]
  %s7 = inlined_call_operand.vmem [shape: bf16[128,128], index: 7, kind: input, shape index: {}]
  %s8 = inlined_call_operand.vmem [shape: f32[1,128], index: 8, kind: input, shape index: {}]
  %s9 = inlined_call_operand.vmem [shape: f32[2,16,16,128], index: 9, kind: output, shape index: {}]
  %s10 = sld [smem:[#allocation0]]
  $region69: #{bottleneck_forward.1} parent=0
    _
  %s12 = ssub.s32 1, %s10
  %s13 = scalar_select 0, %s12, %s10
  loop: start=0, step=1, limit=6
  $region2: #{bottleneck_forward.1} parent=0 // loop_pre_header
    _
  $region3: #{bottleneck_forward.1} parent=0 // loop_header
    %s15 = sphi 0, %s19
    %p16 = scmp.ge.s32.totalorder %s15, 6
    %s22 = sphi 0, %s34
    %s23 = sphi 0, %s30
    %s24 = sphi 0, %s22
    %s25 = sphi 0, %s23
    %s26 = sphi 0, %s24
    %s27 = sphi 0, %s25
    %s39 = sphi 0, %s41
    %s42 = sphi 0, %s39
    %s43 = sphi 0, %s42
    %s59 = sphi 0, %s43
    %s67 = sphi 0, %s69
    %s70 = sphi 0, %s67
    %s71 = sphi 0, %s70
    %s87 = sphi 0, %s71
    %s95 = sphi 0, %s97
    %s98 = sphi 0, %s95
    %s99 = sphi 0, %s98
    %s115 = sphi 0, %s99
    %s119 = sphi 0, %s119
    %s121 = sphi 0, %s119
    %s122 = sphi 0, %s121
    %s136 = sphi 0, %s122
    %s140 = sphi 0, %s140
    %s142 = sphi 0, %s140
    %s143 = sphi 0, %s142
    %s157 = sphi 0, %s143
    %s161 = sphi 0, %s161
    %s163 = sphi 0, %s161
    %s164 = sphi 0, %s163
    %s178 = sphi 0, %s164
    %s182 = sphi 0, %s182
    %s184 = sphi 0, %s182
    %s185 = sphi 0, %s184
    %s199 = sphi 0, %s185
    %s203 = sphi 0, %s203
    %s205 = sphi 0, %s203
    %s206 = sphi 0, %s205
    %s220 = sphi 0, %s206
    %s224 = sphi 0, %s224
    %s226 = sphi 0, %s224
    %s227 = sphi 0, %s226
    %s241 = sphi 0, %s227
    %s249 = sphi 0, %s251
    %s252 = sphi 0, %s249
    %s253 = sphi 0, %s252
    %s269 = sphi 0, %s253
  $region4: #{bottleneck_forward.1} parent=0 // loop_header_branch
    %18 = sbr.rel (%p16) target = $region8
  $region5: #{bottleneck_forward.1} parent=0 // loop_body
    %s20 = ssub.s32 %s15, 1
    %s21 = ssub.s32 %s15, 2
    %s28 = sadd.s32 1, %s23
    %p29 = scmp.ge.s32.totalorder %s28, 2
    %s30 = scalar_select %p29, 0, %s28
    %s31 = sadd.s32 1, %s22
    %s32 = scalar_select %p29, %s31, %s22
    %p33 = scmp.ge.s32.totalorder %s32, 2
    %s34 = scalar_select %p33, 0, %s32
    %s35 = ssub.s32 %s22, %s34
    %s36 = ssub.s32 %s23, %s30
    %s37 = sor.u32 %s35, %s36
    %p38 = scmp.eq.s32.totalorder %s37, 0
    %s40 = sadd.s32 %s39, 1
    %s41 = scalar_select %p38, %s39, %s40
    %p44 = pneg %p38
    %p45 = scmp.eq.s32.totalorder %s15, 3
    %p46 = por %p44, %p45
    %p47 = scmp.ne.s32.totalorder %s39, %s42
    %p48 = scmp.eq.s32.totalorder %s15, 0
    %p49 = por %p47, %p48
    %p50 = scmp.ne.s32.totalorder %s39, %s42
    %p51 = scmp.eq.s32.totalorder %s20, 3
    %p52 = por %p50, %p51
    %p53 = scmp.ne.s32.totalorder %s42, %s43
    %p54 = scmp.eq.s32.totalorder %s20, 0
    %p55 = por %p53, %p54
    %p56 = scmp.ne.s32.totalorder %s42, %s43
    %p57 = scmp.eq.s32.totalorder %s21, 3
    %p58 = por %p56, %p57
    %p60 = scmp.ne.s32.totalorder %s43, %s59
    %p61 = scmp.eq.s32.totalorder %s21, 0
    %p62 = por %p60, %p61
    %s63 = ssub.s32 %s22, %s34
    %s64 = ssub.s32 %s23, %s30
    %s65 = sor.u32 %s63, %s64
    %p66 = scmp.eq.s32.totalorder %s65, 0
    %s68 = sadd.s32 %s67, 1
    %s69 = scalar_select %p66, %s67, %s68
    %p72 = pneg %p66
    %p73 = scmp.eq.s32.totalorder %s15, 3
    %p74 = por %p72, %p73
    %p75 = scmp.ne.s32.totalorder %s67, %s70
    %p76 = scmp.eq.s32.totalorder %s15, 0
    %p77 = por %p75, %p76
    %p78 = scmp.ne.s32.totalorder %s67, %s70
    %p79 = scmp.eq.s32.totalorder %s20, 3
    %p80 = por %p78, %p79
    %p81 = scmp.ne.s32.totalorder %s70, %s71
    %p82 = scmp.eq.s32.totalorder %s20, 0
    %p83 = por %p81, %p82
    %p84 = scmp.ne.s32.totalorder %s70, %s71
    %p85 = scmp.eq.s32.totalorder %s21, 3
    %p86 = por %p84, %p85
    %p88 = scmp.ne.s32.totalorder %s71, %s87
    %p89 = scmp.eq.s32.totalorder %s21, 0
    %p90 = por %p88, %p89
    %s91 = ssub.s32 %s22, %s34
    %s92 = ssub.s32 %s23, %s30
    %s93 = sor.u32 %s91, %s92
    %p94 = scmp.eq.s32.totalorder %s93, 0
    %s96 = sadd.s32 %s95, 1
    %s97 = scalar_select %p94, %s95, %s96
    %p100 = pneg %p94
    %p101 = scmp.eq.s32.totalorder %s15, 3
    %p102 = por %p100, %p101
    %p103 = scmp.ne.s32.totalorder %s95, %s98
    %p104 = scmp.eq.s32.totalorder %s15, 0
    %p105 = por %p103, %p104
    %p106 = scmp.ne.s32.totalorder %s95, %s98
    %p107 = scmp.eq.s32.totalorder %s20, 3
    %p108 = por %p106, %p107
    %p109 = scmp.ne.s32.totalorder %s98, %s99
    %p110 = scmp.eq.s32.totalorder %s20, 0
    %p111 = por %p109, %p110
    %p112 = scmp.ne.s32.totalorder %s98, %s99
    %p113 = scmp.eq.s32.totalorder %s21, 3
    %p114 = por %p112, %p113
    %p116 = scmp.ne.s32.totalorder %s99, %s115
    %p117 = scmp.eq.s32.totalorder %s21, 0
    %p118 = por %p116, %p117
    %s120 = sadd.s32 %s119, 1
    %p123 = scmp.eq.s32.totalorder %s15, 3
    %p124 = scmp.ne.s32.totalorder %s119, %s121
    %p125 = scmp.eq.s32.totalorder %s15, 0
    %p126 = por %p124, %p125
    %p127 = scmp.ne.s32.totalorder %s119, %s121
    %p128 = scmp.eq.s32.totalorder %s20, 3
    %p129 = por %p127, %p128
    %p130 = scmp.ne.s32.totalorder %s121, %s122
    %p131 = scmp.eq.s32.totalorder %s20, 0
    %p132 = por %p130, %p131
    %p133 = scmp.ne.s32.totalorder %s121, %s122
    %p134 = scmp.eq.s32.totalorder %s21, 3
    %p135 = por %p133, %p134
    %p137 = scmp.ne.s32.totalorder %s122, %s136
    %p138 = scmp.eq.s32.totalorder %s21, 0
    %p139 = por %p137, %p138
    %s141 = sadd.s32 %s140, 1
    %p144 = scmp.eq.s32.totalorder %s15, 3
    %p145 = scmp.ne.s32.totalorder %s140, %s142
    %p146 = scmp.eq.s32.totalorder %s15, 0
    %p147 = por %p145, %p146
    %p148 = scmp.ne.s32.totalorder %s140, %s142
    %p149 = scmp.eq.s32.totalorder %s20, 3
    %p150 = por %p148, %p149
    %p151 = scmp.ne.s32.totalorder %s142, %s143
    %p152 = scmp.eq.s32.totalorder %s20, 0
    %p153 = por %p151, %p152
    %p154 = scmp.ne.s32.totalorder %s142, %s143
    %p155 = scmp.eq.s32.totalorder %s21, 3
    %p156 = por %p154, %p155
    %p158 = scmp.ne.s32.totalorder %s143, %s157
    %p159 = scmp.eq.s32.totalorder %s21, 0
    %p160 = por %p158, %p159
    %s162 = sadd.s32 %s161, 1
    %p165 = scmp.eq.s32.totalorder %s15, 3
    %p166 = scmp.ne.s32.totalorder %s161, %s163
    %p167 = scmp.eq.s32.totalorder %s15, 0
    %p168 = por %p166, %p167
    %p169 = scmp.ne.s32.totalorder %s161, %s163
    %p170 = scmp.eq.s32.totalorder %s20, 3
    %p171 = por %p169, %p170
    %p172 = scmp.ne.s32.totalorder %s163, %s164
    %p173 = scmp.eq.s32.totalorder %s20, 0
    %p174 = por %p172, %p173
    %p175 = scmp.ne.s32.totalorder %s163, %s164
    %p176 = scmp.eq.s32.totalorder %s21, 3
    %p177 = por %p175, %p176
    %p179 = scmp.ne.s32.totalorder %s164, %s178
    %p180 = scmp.eq.s32.totalorder %s21, 0
    %p181 = por %p179, %p180
    %s183 = sadd.s32 %s182, 1
    %p186 = scmp.eq.s32.totalorder %s15, 3
    %p187 = scmp.ne.s32.totalorder %s182, %s184
    %p188 = scmp.eq.s32.totalorder %s15, 0
    %p189 = por %p187, %p188
    %p190 = scmp.ne.s32.totalorder %s182, %s184
    %p191 = scmp.eq.s32.totalorder %s20, 3
    %p192 = por %p190, %p191
    %p193 = scmp.ne.s32.totalorder %s184, %s185
    %p194 = scmp.eq.s32.totalorder %s20, 0
    %p195 = por %p193, %p194
    %p196 = scmp.ne.s32.totalorder %s184, %s185
    %p197 = scmp.eq.s32.totalorder %s21, 3
    %p198 = por %p196, %p197
    %p200 = scmp.ne.s32.totalorder %s185, %s199
    %p201 = scmp.eq.s32.totalorder %s21, 0
    %p202 = por %p200, %p201
    %s204 = sadd.s32 %s203, 1
    %p207 = scmp.eq.s32.totalorder %s15, 3
    %p208 = scmp.ne.s32.totalorder %s203, %s205
    %p209 = scmp.eq.s32.totalorder %s15, 0
    %p210 = por %p208, %p209
    %p211 = scmp.ne.s32.totalorder %s203, %s205
    %p212 = scmp.eq.s32.totalorder %s20, 3
    %p213 = por %p211, %p212
    %p214 = scmp.ne.s32.totalorder %s205, %s206
    %p215 = scmp.eq.s32.totalorder %s20, 0
    %p216 = por %p214, %p215
    %p217 = scmp.ne.s32.totalorder %s205, %s206
    %p218 = scmp.eq.s32.totalorder %s21, 3
    %p219 = por %p217, %p218
    %p221 = scmp.ne.s32.totalorder %s206, %s220
    %p222 = scmp.eq.s32.totalorder %s21, 0
    %p223 = por %p221, %p222
    %s225 = sadd.s32 %s224, 1
    %p228 = scmp.eq.s32.totalorder %s15, 3
    %p229 = scmp.ne.s32.totalorder %s224, %s226
    %p230 = scmp.eq.s32.totalorder %s15, 0
    %p231 = por %p229, %p230
    %p232 = scmp.ne.s32.totalorder %s224, %s226
    %p233 = scmp.eq.s32.totalorder %s20, 3
    %p234 = por %p232, %p233
    %p235 = scmp.ne.s32.totalorder %s226, %s227
    %p236 = scmp.eq.s32.totalorder %s20, 0
    %p237 = por %p235, %p236
    %p238 = scmp.ne.s32.totalorder %s226, %s227
    %p239 = scmp.eq.s32.totalorder %s21, 3
    %p240 = por %p238, %p239
    %p242 = scmp.ne.s32.totalorder %s227, %s241
    %p243 = scmp.eq.s32.totalorder %s21, 0
    %p244 = por %p242, %p243
    %s245 = ssub.s32 %s22, %s34
    %s246 = ssub.s32 %s23, %s30
    %s247 = sor.u32 %s245, %s246
    %p248 = scmp.eq.s32.totalorder %s247, 0
    %s250 = sadd.s32 %s249, 1
    %s251 = scalar_select %p248, %s249, %s250
    %p254 = pneg %p248
    %p255 = scmp.eq.s32.totalorder %s15, 3
    %p256 = por %p254, %p255
    %p257 = scmp.ne.s32.totalorder %s249, %s252
    %p258 = scmp.eq.s32.totalorder %s15, 0
    %p259 = por %p257, %p258
    %p260 = scmp.ne.s32.totalorder %s249, %s252
    %p261 = scmp.eq.s32.totalorder %s20, 3
    %p262 = por %p260, %p261
    %p263 = scmp.ne.s32.totalorder %s252, %s253
    %p264 = scmp.eq.s32.totalorder %s20, 0
    %p265 = por %p263, %p264
    %p266 = scmp.ne.s32.totalorder %s252, %s253
    %p267 = scmp.eq.s32.totalorder %s21, 3
    %p268 = por %p266, %p267
    %p270 = scmp.ne.s32.totalorder %s253, %s269
    %p271 = scmp.eq.s32.totalorder %s21, 0
    %p272 = por %p270, %p271
    %p273 = scmp.le.s32.totalorder 1, %s15
    %p274 = scmp.lt.s32.totalorder %s15, 5
    %p275 = pnand %p273, %p274
    %p276 = pneg %p275
    // Predicated region
    $region9: #{bottleneck_forward.1} parent=5 // pred_check
      _
    $region10: #{bottleneck_forward.1} parent=5 // pred_check_branch
      %278 = sbr.rel (%p275) target = $region12
    $region11: #{bottleneck_forward.1} parent=5 // pred_region
      %s279 = ssub.s32 %s15, 1
      // Predicated region
      $region13: #{bottleneck_forward.1} parent=11 // pred_check
        %p280 = pneg %p132
      $region14: #{bottleneck_forward.1} parent=11 // pred_check_branch
        %282 = sbr.rel (%p280) target = $region16
      $region15: #{bottleneck_forward.1} parent=11 // pred_region
        _
      $region16: #{bottleneck_forward.1} parent=11 // pred_fallthru
        _
      // Predicated region
      $region17: #{bottleneck_forward.1} parent=11 // pred_check
        %p283 = pneg %p153
      $region18: #{bottleneck_forward.1} parent=11 // pred_check_branch
        %285 = sbr.rel (%p283) target = $region20
      $region19: #{bottleneck_forward.1} parent=11 // pred_region
        _
      $region20: #{bottleneck_forward.1} parent=11 // pred_fallthru
        _
      // Predicated region
      $region21: #{bottleneck_forward.1} parent=11 // pred_check
        %p286 = pneg %p174
      $region22: #{bottleneck_forward.1} parent=11 // pred_check_branch
        %288 = sbr.rel (%p286) target = $region24
      $region23: #{bottleneck_forward.1} parent=11 // pred_region
        _
      $region24: #{bottleneck_forward.1} parent=11 // pred_fallthru
        _
      // Predicated region
      $region25: #{bottleneck_forward.1} parent=11 // pred_check
        %p289 = pneg %p195
      $region26: #{bottleneck_forward.1} parent=11 // pred_check_branch
        %291 = sbr.rel (%p289) target = $region28
      $region27: #{bottleneck_forward.1} parent=11 // pred_region
        _
      $region28: #{bottleneck_forward.1} parent=11 // pred_fallthru
        _
      // Predicated region
      $region29: #{bottleneck_forward.1} parent=11 // pred_check
        %p292 = pneg %p216
      $region30: #{bottleneck_forward.1} parent=11 // pred_check_branch
        %294 = sbr.rel (%p292) target = $region32
      $region31: #{bottleneck_forward.1} parent=11 // pred_region
        _
      $region32: #{bottleneck_forward.1} parent=11 // pred_fallthru
        _
      // Predicated region
      $region33: #{bottleneck_forward.1} parent=11 // pred_check
        %p295 = pneg %p237
      $region34: #{bottleneck_forward.1} parent=11 // pred_check_branch
        %297 = sbr.rel (%p295) target = $region36
      $region35: #{bottleneck_forward.1} parent=11 // pred_region
        _
      $region36: #{bottleneck_forward.1} parent=11 // pred_fallthru
        _
    $region12: #{bottleneck_forward.1} parent=5 // pred_fallthru
      _
    %p298 = scmp.lt.s32.totalorder %s15, 4
    // Predicated region
    $region37: #{bottleneck_forward.1} parent=5 // pred_check
      %p299 = pneg %p298
    $region38: #{bottleneck_forward.1} parent=5 // pred_check_branch
      %301 = sbr.rel (%p299) target = $region40
    $region39: #{bottleneck_forward.1} parent=5 // pred_region
      // Predicated region
      $region41: #{bottleneck_forward.1} parent=39 // pred_check
        %p302 = pneg %p49
      $region42: #{bottleneck_forward.1} parent=39 // pred_check_branch
        %304 = sbr.rel (%p302) target = $region44
      $region43: #{bottleneck_forward.1} parent=39 // pred_region
        %p305 = scmp.lt.s32.totalorder %s22, 1
        %s306 = scalar_select %p305, %s22, 1
        %p307 = scmp.lt.s32.totalorder %s23, 1
        %s308 = scalar_select %p307, %s23, 1
        %s309 = smul.addr %s308, 4
        %s310 = smul.addr %s306, 8
        %s311 = sadd.s32 %s309, %s310
        %s312 = smul.addr %s311, 4
        %s313 = scalar_lea.vmem %s0, %s312
      $region44: #{bottleneck_forward.1} parent=39 // pred_fallthru
        _
      // Predicated region
      $region45: #{bottleneck_forward.1} parent=39 // pred_check
        %p314 = pneg %p77
      $region46: #{bottleneck_forward.1} parent=39 // pred_check_branch
        %316 = sbr.rel (%p314) target = $region48
      $region47: #{bottleneck_forward.1} parent=39 // pred_region
        %s317 = smul.u32 8, %s23
        %p318 = scmp.lt.s32.totalorder %s22, 1
        %s319 = scalar_select %p318, %s22, 1
        %p320 = scmp.lt.s32.totalorder %s317, 15
        %s321 = scalar_select %p320, %s317, 15
        %s322 = smul.addr %s321, 4
        %s323 = smul.addr %s319, 64
        %s324 = sadd.s32 %s322, %s323
        %s325 = smul.addr %s324, 4
        %s326 = scalar_lea.vmem %s1, %s325
        %s327 = smul.u32 8, %s23
      $region48: #{bottleneck_forward.1} parent=39 // pred_fallthru
        _
      // Predicated region
      $region49: #{bottleneck_forward.1} parent=39 // pred_check
        %p328 = pneg %p105
      $region50: #{bottleneck_forward.1} parent=39 // pred_check_branch
        %330 = sbr.rel (%p328) target = $region52
      $region51: #{bottleneck_forward.1} parent=39 // pred_region
        %p331 = scmp.lt.s32.totalorder %s22, 1
        %s332 = scalar_select %p331, %s22, 1
        %p333 = scmp.lt.s32.totalorder %s23, 1
        %s334 = scalar_select %p333, %s23, 1
        %s335 = smul.addr %s334, 4
        %s336 = smul.addr %s332, 8
        %s337 = sadd.s32 %s335, %s336
        %s338 = smul.addr %s337, 4
        %s339 = scalar_lea.vmem %s2, %s338
      $region52: #{bottleneck_forward.1} parent=39 // pred_fallthru
        _
    $region40: #{bottleneck_forward.1} parent=5 // pred_fallthru
      _
    %p340 = scmp.le.s32.totalorder 1, %s15
    %p341 = scmp.lt.s32.totalorder %s15, 5
    %p342 = pnand %p340, %p341
    %p343 = pneg %p342
    // Predicated region
    $region53: #{bottleneck_forward.1} parent=5 // pred_check
      _
    $region54: #{bottleneck_forward.1} parent=5 // pred_check_branch
      %345 = sbr.rel (%p342) target = $region56
    $region55: #{bottleneck_forward.1} parent=5 // pred_region
      %s346 = ssub.s32 %s15, 1
      %p347 = scmp.lt.s32.totalorder %s24, 1
      %s348 = scalar_select %p347, %s24, 1
      %p349 = scmp.lt.s32.totalorder %s25, 1
      %s350 = scalar_select %p349, %s25, 1
      %s351 = smul.addr %s350, 4
      %s352 = smul.addr %s348, 8
      %s353 = sadd.s32 %s351, %s352
      %s354 = smul.addr %s353, 4
      %s355 = scalar_lea.vmem %s0, %s354
      %p356 = pneg %p55
      %p357 = pneg %p52
      %s358 = smul.u32 8, %s25
      %p359 = scmp.lt.s32.totalorder %s24, 1
      %s360 = scalar_select %p359, %s24, 1
      %p361 = scmp.lt.s32.totalorder %s358, 15
      %s362 = scalar_select %p361, %s358, 15
      %s363 = smul.addr %s362, 4
      %s364 = smul.addr %s360, 64
      %s365 = sadd.s32 %s363, %s364
      %s366 = smul.addr %s365, 4
      %s367 = scalar_lea.vmem %s1, %s366
      %p368 = pneg %p83
      %p369 = pneg %p80
      %p370 = scmp.lt.s32.totalorder %s24, 1
      %s371 = scalar_select %p370, %s24, 1
      %p372 = scmp.lt.s32.totalorder %s25, 1
      %s373 = scalar_select %p372, %s25, 1
      %s374 = smul.addr %s373, 4
      %s375 = smul.addr %s371, 8
      %s376 = sadd.s32 %s374, %s375
      %s377 = smul.addr %s376, 4
      %s378 = scalar_lea.vmem %s2, %s377
      %p379 = pneg %p111
      %p380 = pneg %p108
      %p381 = pneg %p132
      %p382 = pneg %p129
      %p383 = pneg %p153
      %p384 = pneg %p150
      %p385 = pneg %p174
      %p386 = pneg %p171
      %p387 = pneg %p195
      %p388 = pneg %p192
      %p389 = pneg %p216
      %p390 = pneg %p213
      %p391 = pneg %p237
      %p392 = pneg %p234
      %p393 = pneg %p265
      %p394 = pneg %p262
      %s395 = smul.u32 8, %s25
      %p396 = scmp.lt.s32.totalorder %s24, 1
      %s397 = scalar_select %p396, %s24, 1
      %p398 = scmp.lt.s32.totalorder %s395, 15
      %s399 = scalar_select %p398, %s395, 15
      %s400 = smul.addr %s399, 2
      %s401 = smul.addr %s397, 32
      %s402 = sadd.s32 %s400, %s401
      %s403 = smul.addr %s402, 8
      %s404 = scalar_lea.vmem %s9, %s403
      %p405 = scmp.lt.s32.totalorder %s24, 1
      %s406 = scalar_select %p405, %s24, 1
      %p407 = scmp.lt.s32.totalorder %s25, 1
      %s408 = scalar_select %p407, %s25, 1
      %s409 = smul.addr %s408, 4
      %s410 = smul.addr %s406, 8
      %s411 = sadd.s32 %s409, %s410
      %s412 = smul.addr %s411, 4
      %s413 = scalar_lea.vmem %s0, %s412
      %s414 = smul.u32 8, %s25
      %p415 = scmp.lt.s32.totalorder %s24, 1
      %s416 = scalar_select %p415, %s24, 1
      %p417 = scmp.lt.s32.totalorder %s414, 15
      %s418 = scalar_select %p417, %s414, 15
      %s419 = smul.addr %s418, 4
      %s420 = smul.addr %s416, 64
      %s421 = sadd.s32 %s419, %s420
      %s422 = smul.addr %s421, 4
      %s423 = scalar_lea.vmem %s1, %s422
      %s424 = smul.u32 8, %s25
      %p425 = scmp.lt.s32.totalorder %s24, 1
      %s426 = scalar_select %p425, %s24, 1
      %p427 = scmp.lt.s32.totalorder %s25, 1
      %s428 = scalar_select %p427, %s25, 1
      %s429 = smul.addr %s428, 4
      %s430 = smul.addr %s426, 8
      %s431 = sadd.s32 %s429, %s430
      %s432 = smul.addr %s431, 4
      %s433 = scalar_lea.vmem %s2, %s432
      %s434 = smul.u32 8, %s25
      %p435 = scmp.lt.s32.totalorder %s24, 1
      %s436 = scalar_select %p435, %s24, 1
      %p437 = scmp.lt.s32.totalorder %s434, 15
      %s438 = scalar_select %p437, %s434, 15
      %s439 = smul.addr %s438, 2
      %s440 = smul.addr %s436, 32
      %s441 = sadd.s32 %s439, %s440
      %s442 = smul.addr %s441, 8
      %s443 = scalar_lea.vmem %s9, %s442
      %s444 = smul.u32 8, %s25
      %v446 = vld [vmem:[%s413] sm:$0xf]
      %v447 = vld [vmem:[%s413 + $0x4] sm:$0xf]
      %v448 = vld [vmem:[%s413 + $0x8] sm:$0xf]
      %v449 = vld [vmem:[%s413 + $0xc] sm:$0xf]
      %v450 = vld [vmem:[%s423] sm:$0xf]
      %v451 = vld [vmem:[%s423 + $0x4] sm:$0xf]
      %v452 = vld [vmem:[%s423 + $0x8] sm:$0xf]
      %v453 = vld [vmem:[%s423 + $0xc] sm:$0xf]
      %v454 = vld [vmem:[%s423 + $0x10] sm:$0xf]
      %v455 = vld [vmem:[%s423 + $0x14] sm:$0xf]
      %v456 = vld [vmem:[%s423 + $0x18] sm:$0xf]
      %v457 = vld [vmem:[%s423 + $0x1c] sm:$0xf]
      %v458 = vld [vmem:[%s423 + $0x20] sm:$0xf]
      %v459 = vld [vmem:[%s423 + $0x24] sm:$0xf]
      %v460 = vld [vmem:[%s423 + $0x28] sm:$0xf]
      %v461 = vld [vmem:[%s423 + $0x2c] sm:$0xf]
      %v462 = vld [vmem:[%s423 + $0x30] sm:$0xf]
      %v463 = vld [vmem:[%s423 + $0x34] sm:$0xf]
      %v464 = vld [vmem:[%s423 + $0x38] sm:$0xf]
      %v465 = vld [vmem:[%s423 + $0x3c] sm:$0xf]
      %v466 = vld [vmem:[%s423 + $0x40] sm:$0xf]
      %v467 = vld [vmem:[%s423 + $0x44] sm:$0xf]
      %v468 = vld [vmem:[%s423 + $0x48] sm:$0xf]
      %v469 = vld [vmem:[%s423 + $0x4c] sm:$0xf]
      %v470 = vld [vmem:[%s423 + $0x50] sm:$0xf]
      %v471 = vld [vmem:[%s423 + $0x54] sm:$0xf]
      %v472 = vld [vmem:[%s423 + $0x58] sm:$0xf]
      %v473 = vld [vmem:[%s423 + $0x5c] sm:$0xf]
      %v474 = vld [vmem:[%s423 + $0x60] sm:$0xf]
      %v475 = vld [vmem:[%s423 + $0x64] sm:$0xf]
      %v476 = vld [vmem:[%s423 + $0x68] sm:$0xf]
      %v477 = vld [vmem:[%s423 + $0x6c] sm:$0xf]
      %v478 = vld [vmem:[%s423 + $0x70] sm:$0xf]
      %v479 = vld [vmem:[%s423 + $0x74] sm:$0xf]
      %v480 = vld [vmem:[%s423 + $0x78] sm:$0xf]
      %v481 = vld [vmem:[%s423 + $0x7c] sm:$0xf]
      %v482 = vld [vmem:[%s433] sm:$0xf]
      %v483 = vld [vmem:[%s433 + $0x4] sm:$0xf]
      %v484 = vld [vmem:[%s433 + $0x8] sm:$0xf]
      %v485 = vld [vmem:[%s433 + $0xc] sm:$0xf]
      %v486 = vld [vmem:[%s3] sm:$0xf]
      %v487 = vld [vmem:[%s3 + $0x4] sm:$0xf]
      %v488 = vld [vmem:[%s3 + $0x8] sm:$0xf]
      %v489 = vld [vmem:[%s3 + $0xc] sm:$0xf]
      %v490 = vld [vmem:[%s3 + $0x10] sm:$0xf]
      %v491 = vld [vmem:[%s3 + $0x14] sm:$0xf]
      %v492 = vld [vmem:[%s3 + $0x18] sm:$0xf]
      %v493 = vld [vmem:[%s3 + $0x1c] sm:$0xf]
      %v494 = vld [vmem:[%s3 + $0x20] sm:$0xf]
      %v495 = vld [vmem:[%s3 + $0x24] sm:$0xf]
      %v496 = vld [vmem:[%s3 + $0x28] sm:$0xf]
      %v497 = vld [vmem:[%s3 + $0x2c] sm:$0xf]
      %v498 = vld [vmem:[%s3 + $0x30] sm:$0xf]
      %v499 = vld [vmem:[%s3 + $0x34] sm:$0xf]
      %v500 = vld [vmem:[%s3 + $0x38] sm:$0xf]
      %v501 = vld [vmem:[%s3 + $0x3c] sm:$0xf]
      %v502 = vld [vmem:[%s4] sm:$0x1]
      %v504 = vlaneseq
      %v505 = vshrl.u32 %v504, 7
      %v506 = vsub.s32 0, %v505
      %v507 = vrot.slane %v502, %v506
      %v549 = vunpack.c.l.b16 %v446
      %v550 = vunpack.c.l.b16 %v447
      %v551 = vunpack.c.l.b16 %v448
      %v552 = vunpack.c.l.b16 %v449
      %v553 = vunpack.c.l.b16 %v450
      %v554 = vunpack.c.l.b16 %v451
      %v555 = vunpack.c.l.b16 %v452
      %v556 = vunpack.c.l.b16 %v453
      %v557 = vunpack.c.l.b16 %v454
      %v558 = vunpack.c.l.b16 %v455
      %v559 = vunpack.c.l.b16 %v456
      %v560 = vunpack.c.l.b16 %v457
      %v561 = vunpack.c.l.b16 %v458
      %v562 = vunpack.c.l.b16 %v459
      %v563 = vunpack.c.l.b16 %v460
      %v564 = vunpack.c.l.b16 %v461
      %v565 = vunpack.c.l.b16 %v462
      %v566 = vunpack.c.l.b16 %v463
      %v567 = vunpack.c.l.b16 %v464
      %v568 = vunpack.c.l.b16 %v465
      %v569 = vunpack.c.l.b16 %v466
      %v570 = vunpack.c.l.b16 %v467
      %v571 = vunpack.c.l.b16 %v468
      %v572 = vunpack.c.l.b16 %v469
      %v573 = vunpack.c.l.b16 %v470
      %v574 = vunpack.c.l.b16 %v471
      %v575 = vunpack.c.l.b16 %v472
      %v576 = vunpack.c.l.b16 %v473
      %v577 = vunpack.c.l.b16 %v474
      %v578 = vunpack.c.l.b16 %v475
      %v579 = vunpack.c.l.b16 %v476
      %v580 = vunpack.c.l.b16 %v477
      %v581 = vunpack.c.l.b16 %v478
      %v582 = vunpack.c.l.b16 %v479
      %v583 = vunpack.c.l.b16 %v480
      %v584 = vunpack.c.l.b16 %v481
      %v585 = vunpack.c.l.b16 %v482
      %v586 = vunpack.c.l.b16 %v483
      %v587 = vunpack.c.l.b16 %v484
      %v588 = vunpack.c.l.b16 %v485
      %v589 = vpack.c.b16 %v550, %v549
      %v590 = vpack.c.b16 %v552, %v551
      %v591 = vpack.c.b16 %v554, %v553
      %v592 = vpack.c.b16 %v556, %v555
      %v593 = vpack.c.b16 %v558, %v557
      %v594 = vpack.c.b16 %v560, %v559
      %v595 = vpack.c.b16 %v562, %v561
      %v596 = vpack.c.b16 %v564, %v563
      %v597 = vpack.c.b16 %v566, %v565
      %v598 = vpack.c.b16 %v568, %v567
      %v599 = vpack.c.b16 %v570, %v569
      %v600 = vpack.c.b16 %v572, %v571
      %v601 = vpack.c.b16 %v574, %v573
      %v602 = vpack.c.b16 %v576, %v575
      %v603 = vpack.c.b16 %v578, %v577
      %v604 = vpack.c.b16 %v580, %v579
      %v605 = vpack.c.b16 %v582, %v581
      %v606 = vpack.c.b16 %v584, %v583
      %v607 = vpack.c.b16 %v586, %v585
      %v608 = vpack.c.b16 %v588, %v587
      %v645 = vunpack.c.l.b16 %v486
      %v646 = vunpack.c.l.b16 %v487
      %v647 = vunpack.c.l.b16 %v488
      %v648 = vunpack.c.l.b16 %v489
      %v649 = vunpack.c.l.b16 %v490
      %v650 = vunpack.c.l.b16 %v491
      %v651 = vunpack.c.l.b16 %v492
      %v652 = vunpack.c.l.b16 %v493
      %v653 = vunpack.c.l.b16 %v494
      %v654 = vunpack.c.l.b16 %v495
      %v655 = vunpack.c.l.b16 %v496
      %v656 = vunpack.c.l.b16 %v497
      %v657 = vunpack.c.l.b16 %v498
      %v658 = vunpack.c.l.b16 %v499
      %v659 = vunpack.c.l.b16 %v500
      %v660 = vunpack.c.l.b16 %v501
      %v661 = vpack.c.b16 %v646, %v645
      %v662 = vpack.c.b16 %v648, %v647
      %v663 = vpack.c.b16 %v650, %v649
      %v664 = vpack.c.b16 %v652, %v651
      %v665 = vpack.c.b16 %v654, %v653
      %v666 = vpack.c.b16 %v656, %v655
      %v667 = vpack.c.b16 %v658, %v657
      %v668 = vpack.c.b16 %v660, %v659
      %677 = vmatprep.subr.bf16.mxu0 0
      %678 = vmatpush1.bf16.msra.mxu0 %v668
      %679 = vmatprep.subr.bf16.mxu0 0
      %680 = vmatpush1.bf16.msra.mxu0 %v667
      %681 = vmatprep.subr.bf16.mxu0 0
      %682 = vmatpush1.bf16.msra.mxu0 %v666
      %683 = vmatprep.subr.bf16.mxu0 0
      %684 = vmatpush1.bf16.msra.mxu0 %v665
      %685 = vmatprep.subr.bf16.mxu0 0
      %686 = vmatpush1.bf16.msra.mxu0 %v664
      %687 = vmatprep.subr.bf16.mxu0 0
      %688 = vmatpush1.bf16.msra.mxu0 %v663
      %689 = vmatprep.subr.bf16.mxu0 0
      %690 = vmatpush1.bf16.msra.mxu0 %v662
      %691 = vmatprep.subr.bf16.mxu0 0
      %692 = vmatpush1.bf16.msra.mxu0 %v661
      %693 = vmatprep.subr.bf16.mxu0 0
      %694 = vmatpush2.bf16.msra.mxu0 0
      %695 = vmatprep.subr.bf16.mxu0 0
      %696 = vmatpush2.bf16.msra.mxu0 0
      %697 = vmatprep.subr.bf16.mxu0 0
      %698 = vmatpush2.bf16.msra.mxu0 0
      %699 = vmatprep.subr.bf16.mxu0 0
      %700 = vmatpush2.bf16.msra.mxu0 0
      %701 = vmatprep.subr.bf16.mxu0 0
      %702 = vmatpush2.bf16.msra.mxu0 0
      %703 = vmatprep.subr.bf16.mxu0 0
      %704 = vmatpush2.bf16.msra.mxu0 0
      %705 = vmatprep.subr.bf16.mxu0 0
      %706 = vmatpush2.bf16.msra.mxu0 0
      %707 = vmatprep.subr.bf16.mxu0 0
      %708 = vmatpush2.bf16.msra.mxu0 0
      %709 = vmatprep.mubr.bf16.mxu0 0
      %710 = vmatmul.mubr.bf16.gmra.mxu0 %v589
      %v711 = vpop.f32.mrf.mxu0
      %v712 = vadd.f32 %v507, %v711
      %v713 = vpop.f32.mrf.mxu0
      %v714 = vpop.f32.mrf.mxu0
      %v715 = vadd.f32 %v507, %v714
      %v716 = vpop.f32.mrf.mxu0
      %717 = vmatprep.mubr.bf16.mxu0 0
      %718 = vmatmul.mubr.bf16.gmra.mxu0 %v590
      %v719 = vpop.f32.mrf.mxu0
      %v720 = vadd.f32 %v507, %v719
      %v721 = vpop.f32.mrf.mxu0
      %v722 = vpop.f32.mrf.mxu0
      %v723 = vadd.f32 %v507, %v722
      %v724 = vpop.f32.mrf.mxu0
      %725 = vmatprep.mubr.bf16.mxu0 0
      %726 = vmatmul.mubr.bf16.gmra.mxu0 %v591
      %v727 = vpop.f32.mrf.mxu0
      %v728 = vadd.f32 %v507, %v727
      %v729 = vpop.f32.mrf.mxu0
      %v730 = vpop.f32.mrf.mxu0
      %v731 = vadd.f32 %v507, %v730
      %v732 = vpop.f32.mrf.mxu0
      %733 = vmatprep.mubr.bf16.mxu0 0
      %734 = vmatmul.mubr.bf16.gmra.mxu0 %v592
      %v735 = vpop.f32.mrf.mxu0
      %v736 = vadd.f32 %v507, %v735
      %v737 = vpop.f32.mrf.mxu0
      %v738 = vpop.f32.mrf.mxu0
      %v739 = vadd.f32 %v507, %v738
      %v740 = vpop.f32.mrf.mxu0
      %741 = vmatprep.mubr.bf16.mxu0 0
      %742 = vmatmul.mubr.bf16.gmra.mxu0 %v593
      %v743 = vpop.f32.mrf.mxu0
      %v744 = vadd.f32 %v507, %v743
      %v745 = vpop.f32.mrf.mxu0
      %v746 = vpop.f32.mrf.mxu0
      %v747 = vadd.f32 %v507, %v746
      %v748 = vpop.f32.mrf.mxu0
      %749 = vmatprep.mubr.bf16.mxu0 0
      %750 = vmatmul.mubr.bf16.gmra.mxu0 %v594
      %v751 = vpop.f32.mrf.mxu0
      %v752 = vadd.f32 %v507, %v751
      %v753 = vpop.f32.mrf.mxu0
      %v754 = vpop.f32.mrf.mxu0
      %v755 = vadd.f32 %v507, %v754
      %v756 = vpop.f32.mrf.mxu0
      %757 = vmatprep.mubr.bf16.mxu0 0
      %758 = vmatmul.mubr.bf16.gmra.mxu0 %v595
      %v759 = vpop.f32.mrf.mxu0
      %v760 = vadd.f32 %v507, %v759
      %v761 = vpop.f32.mrf.mxu0
      %v762 = vpop.f32.mrf.mxu0
      %v763 = vadd.f32 %v507, %v762
      %v764 = vpop.f32.mrf.mxu0
      %765 = vmatprep.mubr.bf16.mxu0 0
      %766 = vmatmul.mubr.bf16.gmra.mxu0 %v596
      %v767 = vpop.f32.mrf.mxu0
      %v768 = vadd.f32 %v507, %v767
      %v769 = vpop.f32.mrf.mxu0
      %v770 = vpop.f32.mrf.mxu0
      %v771 = vadd.f32 %v507, %v770
      %v772 = vpop.f32.mrf.mxu0
      %773 = vmatprep.mubr.bf16.mxu0 0
      %774 = vmatmul.mubr.bf16.gmra.mxu0 %v597
      %v775 = vpop.f32.mrf.mxu0
      %v776 = vadd.f32 %v507, %v775
      %v777 = vpop.f32.mrf.mxu0
      %v778 = vpop.f32.mrf.mxu0
      %v779 = vadd.f32 %v507, %v778
      %v780 = vpop.f32.mrf.mxu0
      %781 = vmatprep.mubr.bf16.mxu0 0
      %782 = vmatmul.mubr.bf16.gmra.mxu0 %v598
      %v783 = vpop.f32.mrf.mxu0
      %v784 = vadd.f32 %v507, %v783
      %v785 = vpop.f32.mrf.mxu0
      %v786 = vpop.f32.mrf.mxu0
      %v787 = vadd.f32 %v507, %v786
      %v788 = vpop.f32.mrf.mxu0
      %789 = vmatprep.mubr.bf16.mxu0 0
      %790 = vmatmul.mubr.bf16.gmra.mxu0 %v599
      %v791 = vpop.f32.mrf.mxu0
      %v792 = vadd.f32 %v507, %v791
      %v793 = vpop.f32.mrf.mxu0
      %v794 = vpop.f32.mrf.mxu0
      %v795 = vadd.f32 %v507, %v794
      %v796 = vpop.f32.mrf.mxu0
      %797 = vmatprep.mubr.bf16.mxu0 0
      %798 = vmatmul.mubr.bf16.gmra.mxu0 %v600
      %v799 = vpop.f32.mrf.mxu0
      %v800 = vadd.f32 %v507, %v799
      %v801 = vpop.f32.mrf.mxu0
      %v802 = vpop.f32.mrf.mxu0
      %v803 = vadd.f32 %v507, %v802
      %v804 = vpop.f32.mrf.mxu0
      %805 = vmatprep.mubr.bf16.mxu0 0
      %806 = vmatmul.mubr.bf16.gmra.mxu0 %v601
      %v807 = vpop.f32.mrf.mxu0
      %v808 = vadd.f32 %v507, %v807
      %v809 = vpop.f32.mrf.mxu0
      %v810 = vpop.f32.mrf.mxu0
      %v811 = vadd.f32 %v507, %v810
      %v812 = vpop.f32.mrf.mxu0
      %813 = vmatprep.mubr.bf16.mxu0 0
      %814 = vmatmul.mubr.bf16.gmra.mxu0 %v602
      %v815 = vpop.f32.mrf.mxu0
      %v816 = vadd.f32 %v507, %v815
      %v817 = vpop.f32.mrf.mxu0
      %v818 = vpop.f32.mrf.mxu0
      %v819 = vadd.f32 %v507, %v818
      %v820 = vpop.f32.mrf.mxu0
      %821 = vmatprep.mubr.bf16.mxu0 0
      %822 = vmatmul.mubr.bf16.gmra.mxu0 %v603
      %v823 = vpop.f32.mrf.mxu0
      %v824 = vadd.f32 %v507, %v823
      %v825 = vpop.f32.mrf.mxu0
      %v826 = vpop.f32.mrf.mxu0
      %v827 = vadd.f32 %v507, %v826
      %v828 = vpop.f32.mrf.mxu0
      %829 = vmatprep.mubr.bf16.mxu0 0
      %830 = vmatmul.mubr.bf16.gmra.mxu0 %v604
      %v831 = vpop.f32.mrf.mxu0
      %v832 = vadd.f32 %v507, %v831
      %v833 = vpop.f32.mrf.mxu0
      %v834 = vpop.f32.mrf.mxu0
      %v835 = vadd.f32 %v507, %v834
      %v836 = vpop.f32.mrf.mxu0
      %837 = vmatprep.mubr.bf16.mxu0 0
      %838 = vmatmul.mubr.bf16.gmra.mxu0 %v605
      %v839 = vpop.f32.mrf.mxu0
      %v840 = vadd.f32 %v507, %v839
      %v841 = vpop.f32.mrf.mxu0
      %v842 = vpop.f32.mrf.mxu0
      %v843 = vadd.f32 %v507, %v842
      %v844 = vpop.f32.mrf.mxu0
      %845 = vmatprep.mubr.bf16.mxu0 0
      %846 = vmatmul.mubr.bf16.gmra.mxu0 %v606
      %v847 = vpop.f32.mrf.mxu0
      %v848 = vadd.f32 %v507, %v847
      %v849 = vpop.f32.mrf.mxu0
      %v850 = vpop.f32.mrf.mxu0
      %v851 = vadd.f32 %v507, %v850
      %v852 = vpop.f32.mrf.mxu0
      %853 = vmatprep.mubr.bf16.mxu0 0
      %854 = vmatmul.mubr.bf16.gmra.mxu0 %v607
      %v855 = vpop.f32.mrf.mxu0
      %v856 = vadd.f32 %v507, %v855
      %v857 = vpop.f32.mrf.mxu0
      %v858 = vpop.f32.mrf.mxu0
      %v859 = vadd.f32 %v507, %v858
      %v860 = vpop.f32.mrf.mxu0
      %861 = vmatprep.mubr.bf16.mxu0 0
      %862 = vmatmul.mubr.bf16.gmra.mxu0 %v608
      %v863 = vpop.f32.mrf.mxu0
      %v864 = vadd.f32 %v507, %v863
      %v865 = vpop.f32.mrf.mxu0
      %v866 = vpop.f32.mrf.mxu0
      %v867 = vadd.f32 %v507, %v866
      %v868 = vpop.f32.mrf.mxu0
      %869 = vdwg.mxu0
      %v870 = vmax.f32 %v712, 0.0
      %v871 = vmax.f32 %v715, 0.0
      %v872 = vmax.f32 %v720, 0.0
      %v873 = vmax.f32 %v723, 0.0
      %v874 = vmax.f32 %v728, 0.0
      %v875 = vmax.f32 %v731, 0.0
      %v876 = vmax.f32 %v736, 0.0
      %v877 = vmax.f32 %v739, 0.0
      %v878 = vmax.f32 %v744, 0.0
      %v879 = vmax.f32 %v747, 0.0
      %v880 = vmax.f32 %v752, 0.0
      %v881 = vmax.f32 %v755, 0.0
      %v882 = vmax.f32 %v760, 0.0
      %v883 = vmax.f32 %v763, 0.0
      %v884 = vmax.f32 %v768, 0.0
      %v885 = vmax.f32 %v771, 0.0
      %v886 = vmax.f32 %v776, 0.0
      %v887 = vmax.f32 %v779, 0.0
      %v888 = vmax.f32 %v784, 0.0
      %v889 = vmax.f32 %v787, 0.0
      %v890 = vmax.f32 %v792, 0.0
      %v891 = vmax.f32 %v795, 0.0
      %v892 = vmax.f32 %v800, 0.0
      %v893 = vmax.f32 %v803, 0.0
      %v894 = vmax.f32 %v808, 0.0
      %v895 = vmax.f32 %v811, 0.0
      %v896 = vmax.f32 %v816, 0.0
      %v897 = vmax.f32 %v819, 0.0
      %v898 = vmax.f32 %v824, 0.0
      %v899 = vmax.f32 %v827, 0.0
      %v900 = vmax.f32 %v832, 0.0
      %v901 = vmax.f32 %v835, 0.0
      %v902 = vmax.f32 %v840, 0.0
      %v903 = vmax.f32 %v843, 0.0
      %v904 = vmax.f32 %v848, 0.0
      %v905 = vmax.f32 %v851, 0.0
      %v906 = vmax.f32 %v856, 0.0
      %v907 = vmax.f32 %v859, 0.0
      %v908 = vmax.f32 %v864, 0.0
      %v909 = vmax.f32 %v867, 0.0
      %v910 = vlaneseq
      %v911 = vshrl.u32 %v910, 7
      %v912 = vadd.s32 %v911, 8
      %v913 = vadd.s32 %v911, 16
      %v914 = vadd.s32 %v911, 24
      %vm915 = vcmp.ge.s32.totalorder %v911, 1
      %vm916 = vcmp.ge.s32.totalorder %v912, 1
      %vm917 = vcmp.ge.s32.totalorder %v913, 1
      %vm918 = vcmp.ge.s32.totalorder %v914, 1
      %vm919 = vcmp.le.s32.totalorder %v911, 16
      %vm920 = vcmp.le.s32.totalorder %v912, 16
      %vm921 = vcmp.le.s32.totalorder %v913, 16
      %vm922 = vcmp.le.s32.totalorder %v914, 16
      %vm923 = vmand %vm915, %vm919
      %vm924 = vmand %vm916, %vm920
      %vm925 = vmand %vm917, %vm921
      %vm926 = vmand %vm918, %vm922
      %p927 = scmp.gt.s32.totalorder %s25, 0
      %s928 = scalar_select %p927, 1, 0
      %v929 = vstv %s928
      %vm930 = vcmp.eq.s32.totalorder %v929, 1
      %vm931 = vmand %vm923, %vm930
      %vm932 = vmand %vm924, %vm930
      %vm933 = vmand %vm925, %vm930
      %vm934 = vmand %vm926, %vm930
      %vm935 = vmand %vm923, 1
      %vm936 = vmand %vm924, 1
      %vm937 = vmand %vm925, 1
      %vm938 = vmand %vm926, 1
      %p939 = scmp.lt.s32.totalorder %s25, 1
      %s940 = scalar_select %p939, 1, 0
      %v941 = vstv %s940
      %vm942 = vcmp.eq.s32.totalorder %v941, 1
      %vm943 = vmand %vm931, 1
      %vm944 = vmand %vm932, 1
      %vm945 = vmand %vm933, 1
      %vm946 = vmand %vm934, 1
      %vm947 = vmand %vm935, %vm942
      %vm948 = vmand %vm936, %vm942
      %vm949 = vmand %vm937, %vm942
      %vm950 = vmand %vm938, %vm942
      %v951 = vsel %vm943, %v870, 0.0
      %v952 = vsel %vm944, %v871, 0.0
      %v953 = vsel %vm945, %v872, 0.0
      %v954 = vsel %vm946, %v873, 0.0
      %v955 = vsel %vm935, %v874, 0.0
      %v956 = vsel %vm936, %v875, 0.0
      %v957 = vsel %vm937, %v876, 0.0
      %v958 = vsel %vm938, %v877, 0.0
      %v959 = vsel %vm935, %v878, 0.0
      %v960 = vsel %vm936, %v879, 0.0
      %v961 = vsel %vm937, %v880, 0.0
      %v962 = vsel %vm938, %v881, 0.0
      %v963 = vsel %vm935, %v882, 0.0
      %v964 = vsel %vm936, %v883, 0.0
      %v965 = vsel %vm937, %v884, 0.0
      %v966 = vsel %vm938, %v885, 0.0
      %v967 = vsel %vm935, %v886, 0.0
      %v968 = vsel %vm936, %v887, 0.0
      %v969 = vsel %vm937, %v888, 0.0
      %v970 = vsel %vm938, %v889, 0.0
      %v971 = vsel %vm935, %v890, 0.0
      %v972 = vsel %vm936, %v891, 0.0
      %v973 = vsel %vm937, %v892, 0.0
      %v974 = vsel %vm938, %v893, 0.0
      %v975 = vsel %vm935, %v894, 0.0
      %v976 = vsel %vm936, %v895, 0.0
      %v977 = vsel %vm937, %v896, 0.0
      %v978 = vsel %vm938, %v897, 0.0
      %v979 = vsel %vm935, %v898, 0.0
      %v980 = vsel %vm936, %v899, 0.0
      %v981 = vsel %vm937, %v900, 0.0
      %v982 = vsel %vm938, %v901, 0.0
      %v983 = vsel %vm935, %v902, 0.0
      %v984 = vsel %vm936, %v903, 0.0
      %v985 = vsel %vm937, %v904, 0.0
      %v986 = vsel %vm938, %v905, 0.0
      %v987 = vsel %vm947, %v906, 0.0
      %v988 = vsel %vm948, %v907, 0.0
      %v989 = vsel %vm949, %v908, 0.0
      %v990 = vsel %vm950, %v909, 0.0
      %v991 = vpack.c.bf16 %v952, %v951
      %v992 = vpack.c.bf16 %v954, %v953
      %v993 = vpack.c.bf16 %v956, %v955
      %v994 = vpack.c.bf16 %v958, %v957
      %v995 = vpack.c.bf16 %v960, %v959
      %v996 = vpack.c.bf16 %v962, %v961
      %v997 = vpack.c.bf16 %v964, %v963
      %v998 = vpack.c.bf16 %v966, %v965
      %v999 = vpack.c.bf16 %v968, %v967
      %v1000 = vpack.c.bf16 %v970, %v969
      %v1001 = vpack.c.bf16 %v972, %v971
      %v1002 = vpack.c.bf16 %v974, %v973
      %v1003 = vpack.c.bf16 %v976, %v975
      %v1004 = vpack.c.bf16 %v978, %v977
      %v1005 = vpack.c.bf16 %v980, %v979
      %v1006 = vpack.c.bf16 %v982, %v981
      %v1007 = vpack.c.bf16 %v984, %v983
      %v1008 = vpack.c.bf16 %v986, %v985
      %v1009 = vpack.c.bf16 %v988, %v987
      %v1010 = vpack.c.bf16 %v990, %v989
      %v1011 = vld [vmem:[%s5] sm:$0xf]
      %v1012 = vld [vmem:[%s5 + $0x4] sm:$0xf]
      %v1013 = vld [vmem:[%s5 + $0x8] sm:$0xf]
      %v1014 = vld [vmem:[%s5 + $0xc] sm:$0xf]
      %v1015 = vld [vmem:[%s5 + $0x10] sm:$0xf]
      %v1016 = vld [vmem:[%s5 + $0x14] sm:$0xf]
      %v1017 = vld [vmem:[%s5 + $0x18] sm:$0xf]
      %v1018 = vld [vmem:[%s5 + $0x1c] sm:$0xf]
      %v1019 = vld [vmem:[%s5 + $0x20] sm:$0xf]
      %v1020 = vld [vmem:[%s5 + $0x24] sm:$0xf]
      %v1021 = vld [vmem:[%s5 + $0x28] sm:$0xf]
      %v1022 = vld [vmem:[%s5 + $0x2c] sm:$0xf]
      %v1023 = vld [vmem:[%s5 + $0x30] sm:$0xf]
      %v1024 = vld [vmem:[%s5 + $0x34] sm:$0xf]
      %v1025 = vld [vmem:[%s5 + $0x38] sm:$0xf]
      %v1026 = vld [vmem:[%s5 + $0x3c] sm:$0xf]
      %vm1027 = vsmask.f32 7424
      %v1029 = vshrl.u32 %v991, 16
      %v1031 = vshll.u32 %v991, 16
      %v1033 = vrot.slane %v1031, 1
      %v1034 = vor.u32 %v1029, %v1033
      %v1036 = vshll.u32 %v992, 16
      %v1038 = vrot.slane %v1036, 1
      %v1039 = vsel %vm1027, %v1034, %v1038
      %v1041 = vshrl.u32 %v993, 16
      %v1043 = vshll.u32 %v993, 16
      %v1045 = vrot.slane %v1043, 1
      %v1046 = vor.u32 %v1041, %v1045
      %v1048 = vshll.u32 %v994, 16
      %v1050 = vrot.slane %v1048, 1
      %v1051 = vsel %vm1027, %v1046, %v1050
      %v1053 = vshrl.u32 %v995, 16
      %v1055 = vshll.u32 %v995, 16
      %v1057 = vrot.slane %v1055, 1
      %v1058 = vor.u32 %v1053, %v1057
      %v1060 = vshll.u32 %v996, 16
      %v1062 = vrot.slane %v1060, 1
      %v1063 = vsel %vm1027, %v1058, %v1062
      %v1065 = vshrl.u32 %v997, 16
      %v1067 = vshll.u32 %v997, 16
      %v1069 = vrot.slane %v1067, 1
      %v1070 = vor.u32 %v1065, %v1069
      %v1072 = vshll.u32 %v998, 16
      %v1074 = vrot.slane %v1072, 1
      %v1075 = vsel %vm1027, %v1070, %v1074
      %v1077 = vshrl.u32 %v999, 16
      %v1079 = vshll.u32 %v999, 16
      %v1081 = vrot.slane %v1079, 1
      %v1082 = vor.u32 %v1077, %v1081
      %v1084 = vshll.u32 %v1000, 16
      %v1086 = vrot.slane %v1084, 1
      %v1087 = vsel %vm1027, %v1082, %v1086
      %v1089 = vshrl.u32 %v1001, 16
      %v1091 = vshll.u32 %v1001, 16
      %v1093 = vrot.slane %v1091, 1
      %v1094 = vor.u32 %v1089, %v1093
      %v1096 = vshll.u32 %v1002, 16
      %v1098 = vrot.slane %v1096, 1
      %v1099 = vsel %vm1027, %v1094, %v1098
      %v1101 = vshrl.u32 %v1003, 16
      %v1103 = vshll.u32 %v1003, 16
      %v1105 = vrot.slane %v1103, 1
      %v1106 = vor.u32 %v1101, %v1105
      %v1108 = vshll.u32 %v1004, 16
      %v1110 = vrot.slane %v1108, 1
      %v1111 = vsel %vm1027, %v1106, %v1110
      %v1113 = vshrl.u32 %v1005, 16
      %v1115 = vshll.u32 %v1005, 16
      %v1117 = vrot.slane %v1115, 1
      %v1118 = vor.u32 %v1113, %v1117
      %v1120 = vshll.u32 %v1006, 16
      %v1122 = vrot.slane %v1120, 1
      %v1123 = vsel %vm1027, %v1118, %v1122
      %s1132 = scalar_lea.vmem %s5, 64
      %v1133 = vld [vmem:[%s1132] sm:$0xf]
      %v1134 = vld [vmem:[%s1132 + $0x4] sm:$0xf]
      %v1135 = vld [vmem:[%s1132 + $0x8] sm:$0xf]
      %v1136 = vld [vmem:[%s1132 + $0xc] sm:$0xf]
      %v1137 = vld [vmem:[%s1132 + $0x10] sm:$0xf]
      %v1138 = vld [vmem:[%s1132 + $0x14] sm:$0xf]
      %v1139 = vld [vmem:[%s1132 + $0x18] sm:$0xf]
      %v1140 = vld [vmem:[%s1132 + $0x1c] sm:$0xf]
      %v1141 = vld [vmem:[%s1132 + $0x20] sm:$0xf]
      %v1142 = vld [vmem:[%s1132 + $0x24] sm:$0xf]
      %v1143 = vld [vmem:[%s1132 + $0x28] sm:$0xf]
      %v1144 = vld [vmem:[%s1132 + $0x2c] sm:$0xf]
      %v1145 = vld [vmem:[%s1132 + $0x30] sm:$0xf]
      %v1146 = vld [vmem:[%s1132 + $0x34] sm:$0xf]
      %v1147 = vld [vmem:[%s1132 + $0x38] sm:$0xf]
      %v1148 = vld [vmem:[%s1132 + $0x3c] sm:$0xf]
      %v1165 = vunpack.c.l.b16 %v1133
      %v1166 = vunpack.c.l.b16 %v1134
      %v1167 = vunpack.c.l.b16 %v1135
      %v1168 = vunpack.c.l.b16 %v1136
      %v1169 = vunpack.c.l.b16 %v1137
      %v1170 = vunpack.c.l.b16 %v1138
      %v1171 = vunpack.c.l.b16 %v1139
      %v1172 = vunpack.c.l.b16 %v1140
      %v1173 = vunpack.c.l.b16 %v1141
      %v1174 = vunpack.c.l.b16 %v1142
      %v1175 = vunpack.c.l.b16 %v1143
      %v1176 = vunpack.c.l.b16 %v1144
      %v1177 = vunpack.c.l.b16 %v1145
      %v1178 = vunpack.c.l.b16 %v1146
      %v1179 = vunpack.c.l.b16 %v1147
      %v1180 = vunpack.c.l.b16 %v1148
      %v1181 = vpack.c.b16 %v1166, %v1165
      %v1182 = vpack.c.b16 %v1168, %v1167
      %v1183 = vpack.c.b16 %v1170, %v1169
      %v1184 = vpack.c.b16 %v1172, %v1171
      %v1185 = vpack.c.b16 %v1174, %v1173
      %v1186 = vpack.c.b16 %v1176, %v1175
      %v1187 = vpack.c.b16 %v1178, %v1177
      %v1188 = vpack.c.b16 %v1180, %v1179
      %1197 = vmatprep.subr.bf16.mxu0 0
      %1198 = vmatpush1.bf16.msra.mxu0 %v1188
      %1199 = vmatprep.subr.bf16.mxu0 0
      %1200 = vmatpush1.bf16.msra.mxu0 %v1187
      %1201 = vmatprep.subr.bf16.mxu0 0
      %1202 = vmatpush1.bf16.msra.mxu0 %v1186
      %1203 = vmatprep.subr.bf16.mxu0 0
      %1204 = vmatpush1.bf16.msra.mxu0 %v1185
      %1205 = vmatprep.subr.bf16.mxu0 0
      %1206 = vmatpush1.bf16.msra.mxu0 %v1184
      %1207 = vmatprep.subr.bf16.mxu0 0
      %1208 = vmatpush1.bf16.msra.mxu0 %v1183
      %1209 = vmatprep.subr.bf16.mxu0 0
      %1210 = vmatpush1.bf16.msra.mxu0 %v1182
      %1211 = vmatprep.subr.bf16.mxu0 0
      %1212 = vmatpush1.bf16.msra.mxu0 %v1181
      %1213 = vmatprep.subr.bf16.mxu0 0
      %1214 = vmatpush2.bf16.msra.mxu0 0
      %1215 = vmatprep.subr.bf16.mxu0 0
      %1216 = vmatpush2.bf16.msra.mxu0 0
      %1217 = vmatprep.subr.bf16.mxu0 0
      %1218 = vmatpush2.bf16.msra.mxu0 0
      %1219 = vmatprep.subr.bf16.mxu0 0
      %1220 = vmatpush2.bf16.msra.mxu0 0
      %1221 = vmatprep.subr.bf16.mxu0 0
      %1222 = vmatpush2.bf16.msra.mxu0 0
      %1223 = vmatprep.subr.bf16.mxu0 0
      %1224 = vmatpush2.bf16.msra.mxu0 0
      %1225 = vmatprep.subr.bf16.mxu0 0
      %1226 = vmatpush2.bf16.msra.mxu0 0
      %1227 = vmatprep.subr.bf16.mxu0 0
      %1228 = vmatpush2.bf16.msra.mxu0 0
      %1229 = vmatprep.mubr.bf16.mxu0 0
      %1230 = vmatmul.mubr.bf16.gmra.mxu0 %v1039
      %v1231 = vpop.f32.mrf.mxu0
      %v1232 = vadd.f32 0.0, %v1231
      %v1233 = vpop.f32.mrf.mxu0
      %v1234 = vpop.f32.mrf.mxu0
      %v1235 = vadd.f32 0.0, %v1234
      %v1236 = vpop.f32.mrf.mxu0
      %1237 = vmatprep.mubr.bf16.mxu0 0
      %1238 = vmatmul.mubr.bf16.gmra.mxu0 %v1051
      %v1239 = vpop.f32.mrf.mxu0
      %v1240 = vadd.f32 0.0, %v1239
      %v1241 = vpop.f32.mrf.mxu0
      %v1242 = vpop.f32.mrf.mxu0
      %v1243 = vadd.f32 0.0, %v1242
      %v1244 = vpop.f32.mrf.mxu0
      %1245 = vmatprep.mubr.bf16.mxu0 0
      %1246 = vmatmul.mubr.bf16.gmra.mxu0 %v1063
      %v1247 = vpop.f32.mrf.mxu0
      %v1248 = vadd.f32 0.0, %v1247
      %v1249 = vpop.f32.mrf.mxu0
      %v1250 = vpop.f32.mrf.mxu0
      %v1251 = vadd.f32 0.0, %v1250
      %v1252 = vpop.f32.mrf.mxu0
      %1253 = vmatprep.mubr.bf16.mxu0 0
      %1254 = vmatmul.mubr.bf16.gmra.mxu0 %v1075
      %v1255 = vpop.f32.mrf.mxu0
      %v1256 = vadd.f32 0.0, %v1255
      %v1257 = vpop.f32.mrf.mxu0
      %v1258 = vpop.f32.mrf.mxu0
      %v1259 = vadd.f32 0.0, %v1258
      %v1260 = vpop.f32.mrf.mxu0
      %1261 = vmatprep.mubr.bf16.mxu0 0
      %1262 = vmatmul.mubr.bf16.gmra.mxu0 %v1087
      %v1263 = vpop.f32.mrf.mxu0
      %v1264 = vadd.f32 0.0, %v1263
      %v1265 = vpop.f32.mrf.mxu0
      %v1266 = vpop.f32.mrf.mxu0
      %v1267 = vadd.f32 0.0, %v1266
      %v1268 = vpop.f32.mrf.mxu0
      %1269 = vmatprep.mubr.bf16.mxu0 0
      %1270 = vmatmul.mubr.bf16.gmra.mxu0 %v1099
      %v1271 = vpop.f32.mrf.mxu0
      %v1272 = vadd.f32 0.0, %v1271
      %v1273 = vpop.f32.mrf.mxu0
      %v1274 = vpop.f32.mrf.mxu0
      %v1275 = vadd.f32 0.0, %v1274
      %v1276 = vpop.f32.mrf.mxu0
      %1277 = vmatprep.mubr.bf16.mxu0 0
      %1278 = vmatmul.mubr.bf16.gmra.mxu0 %v1111
      %v1279 = vpop.f32.mrf.mxu0
      %v1280 = vadd.f32 0.0, %v1279
      %v1281 = vpop.f32.mrf.mxu0
      %v1282 = vpop.f32.mrf.mxu0
      %v1283 = vadd.f32 0.0, %v1282
      %v1284 = vpop.f32.mrf.mxu0
      %1285 = vmatprep.mubr.bf16.mxu0 0
      %1286 = vmatmul.mubr.bf16.gmra.mxu0 %v1123
      %v1287 = vpop.f32.mrf.mxu0
      %v1288 = vadd.f32 0.0, %v1287
      %v1289 = vpop.f32.mrf.mxu0
      %v1290 = vpop.f32.mrf.mxu0
      %v1291 = vadd.f32 0.0, %v1290
      %v1292 = vpop.f32.mrf.mxu0
      %1293 = vdwg.mxu0
      %v1310 = vunpack.c.l.b16 %v1011
      %v1311 = vunpack.c.l.b16 %v1012
      %v1312 = vunpack.c.l.b16 %v1013
      %v1313 = vunpack.c.l.b16 %v1014
      %v1314 = vunpack.c.l.b16 %v1015
      %v1315 = vunpack.c.l.b16 %v1016
      %v1316 = vunpack.c.l.b16 %v1017
      %v1317 = vunpack.c.l.b16 %v1018
      %v1318 = vunpack.c.l.b16 %v1019
      %v1319 = vunpack.c.l.b16 %v1020
      %v1320 = vunpack.c.l.b16 %v1021
      %v1321 = vunpack.c.l.b16 %v1022
      %v1322 = vunpack.c.l.b16 %v1023
      %v1323 = vunpack.c.l.b16 %v1024
      %v1324 = vunpack.c.l.b16 %v1025
      %v1325 = vunpack.c.l.b16 %v1026
      %v1326 = vpack.c.b16 %v1311, %v1310
      %v1327 = vpack.c.b16 %v1313, %v1312
      %v1328 = vpack.c.b16 %v1315, %v1314
      %v1329 = vpack.c.b16 %v1317, %v1316
      %v1330 = vpack.c.b16 %v1319, %v1318
      %v1331 = vpack.c.b16 %v1321, %v1320
      %v1332 = vpack.c.b16 %v1323, %v1322
      %v1333 = vpack.c.b16 %v1325, %v1324
      %1342 = vmatprep.subr.bf16.mxu0 0
      %1343 = vmatpush1.bf16.msra.mxu0 %v1333
      %1344 = vmatprep.subr.bf16.mxu0 0
      %1345 = vmatpush1.bf16.msra.mxu0 %v1332
      %1346 = vmatprep.subr.bf16.mxu0 0
      %1347 = vmatpush1.bf16.msra.mxu0 %v1331
      %1348 = vmatprep.subr.bf16.mxu0 0
      %1349 = vmatpush1.bf16.msra.mxu0 %v1330
      %1350 = vmatprep.subr.bf16.mxu0 0
      %1351 = vmatpush1.bf16.msra.mxu0 %v1329
      %1352 = vmatprep.subr.bf16.mxu0 0
      %1353 = vmatpush1.bf16.msra.mxu0 %v1328
      %1354 = vmatprep.subr.bf16.mxu0 0
      %1355 = vmatpush1.bf16.msra.mxu0 %v1327
      %1356 = vmatprep.subr.bf16.mxu0 0
      %1357 = vmatpush1.bf16.msra.mxu0 %v1326
      %1358 = vmatprep.subr.bf16.mxu0 0
      %1359 = vmatpush2.bf16.msra.mxu0 0
      %1360 = vmatprep.subr.bf16.mxu0 0
      %1361 = vmatpush2.bf16.msra.mxu0 0
      %1362 = vmatprep.subr.bf16.mxu0 0
      %1363 = vmatpush2.bf16.msra.mxu0 0
      %1364 = vmatprep.subr.bf16.mxu0 0
      %1365 = vmatpush2.bf16.msra.mxu0 0
      %1366 = vmatprep.subr.bf16.mxu0 0
      %1367 = vmatpush2.bf16.msra.mxu0 0
      %1368 = vmatprep.subr.bf16.mxu0 0
      %1369 = vmatpush2.bf16.msra.mxu0 0
      %1370 = vmatprep.subr.bf16.mxu0 0
      %1371 = vmatpush2.bf16.msra.mxu0 0
      %1372 = vmatprep.subr.bf16.mxu0 0
      %1373 = vmatpush2.bf16.msra.mxu0 0
      %1374 = vmatprep.mubr.bf16.mxu0 0
      %1375 = vmatmul.mubr.bf16.gmra.mxu0 %v991
      %v1376 = vpop.f32.mrf.mxu0
      %v1377 = vadd.f32 %v1232, %v1376
      %v1378 = vpop.f32.mrf.mxu0
      %v1379 = vpop.f32.mrf.mxu0
      %v1380 = vadd.f32 %v1235, %v1379
      %v1381 = vpop.f32.mrf.mxu0
      %1382 = vmatprep.mubr.bf16.mxu0 0
      %1383 = vmatmul.mubr.bf16.gmra.mxu0 %v993
      %v1384 = vpop.f32.mrf.mxu0
      %v1385 = vadd.f32 %v1240, %v1384
      %v1386 = vpop.f32.mrf.mxu0
      %v1387 = vpop.f32.mrf.mxu0
      %v1388 = vadd.f32 %v1243, %v1387
      %v1389 = vpop.f32.mrf.mxu0
      %1390 = vmatprep.mubr.bf16.mxu0 0
      %1391 = vmatmul.mubr.bf16.gmra.mxu0 %v995
      %v1392 = vpop.f32.mrf.mxu0
      %v1393 = vadd.f32 %v1248, %v1392
      %v1394 = vpop.f32.mrf.mxu0
      %v1395 = vpop.f32.mrf.mxu0
      %v1396 = vadd.f32 %v1251, %v1395
      %v1397 = vpop.f32.mrf.mxu0
      %1398 = vmatprep.mubr.bf16.mxu0 0
      %1399 = vmatmul.mubr.bf16.gmra.mxu0 %v997
      %v1400 = vpop.f32.mrf.mxu0
      %v1401 = vadd.f32 %v1256, %v1400
      %v1402 = vpop.f32.mrf.mxu0
      %v1403 = vpop.f32.mrf.mxu0
      %v1404 = vadd.f32 %v1259, %v1403
      %v1405 = vpop.f32.mrf.mxu0
      %1406 = vmatprep.mubr.bf16.mxu0 0
      %1407 = vmatmul.mubr.bf16.gmra.mxu0 %v999
      %v1408 = vpop.f32.mrf.mxu0
      %v1409 = vadd.f32 %v1264, %v1408
      %v1410 = vpop.f32.mrf.mxu0
      %v1411 = vpop.f32.mrf.mxu0
      %v1412 = vadd.f32 %v1267, %v1411
      %v1413 = vpop.f32.mrf.mxu0
      %1414 = vmatprep.mubr.bf16.mxu0 0
      %1415 = vmatmul.mubr.bf16.gmra.mxu0 %v1001
      %v1416 = vpop.f32.mrf.mxu0
      %v1417 = vadd.f32 %v1272, %v1416
      %v1418 = vpop.f32.mrf.mxu0
      %v1419 = vpop.f32.mrf.mxu0
      %v1420 = vadd.f32 %v1275, %v1419
      %v1421 = vpop.f32.mrf.mxu0
      %1422 = vmatprep.mubr.bf16.mxu0 0
      %1423 = vmatmul.mubr.bf16.gmra.mxu0 %v1003
      %v1424 = vpop.f32.mrf.mxu0
      %v1425 = vadd.f32 %v1280, %v1424
      %v1426 = vpop.f32.mrf.mxu0
      %v1427 = vpop.f32.mrf.mxu0
      %v1428 = vadd.f32 %v1283, %v1427
      %v1429 = vpop.f32.mrf.mxu0
      %1430 = vmatprep.mubr.bf16.mxu0 0
      %1431 = vmatmul.mubr.bf16.gmra.mxu0 %v1005
      %v1432 = vpop.f32.mrf.mxu0
      %v1433 = vadd.f32 %v1288, %v1432
      %v1434 = vpop.f32.mrf.mxu0
      %v1435 = vpop.f32.mrf.mxu0
      %v1436 = vadd.f32 %v1291, %v1435
      %v1437 = vpop.f32.mrf.mxu0
      %1438 = vdwg.mxu0
      %vm1455 = vcmask 1046528
      %v1456 = vrot.slane %v991, 1
      %v1457 = vrot.slane %v992, 1
      %v1458 = vsel %vm1455, %v1456, %v1457
      %v1459 = vrot.slane %v993, 1
      %v1460 = vrot.slane %v994, 1
      %v1461 = vsel %vm1455, %v1459, %v1460
      %v1462 = vrot.slane %v995, 1
      %v1463 = vrot.slane %v996, 1
      %v1464 = vsel %vm1455, %v1462, %v1463
      %v1465 = vrot.slane %v997, 1
      %v1466 = vrot.slane %v998, 1
      %v1467 = vsel %vm1455, %v1465, %v1466
      %v1468 = vrot.slane %v999, 1
      %v1469 = vrot.slane %v1000, 1
      %v1470 = vsel %vm1455, %v1468, %v1469
      %v1471 = vrot.slane %v1001, 1
      %v1472 = vrot.slane %v1002, 1
      %v1473 = vsel %vm1455, %v1471, %v1472
      %v1474 = vrot.slane %v1003, 1
      %v1475 = vrot.slane %v1004, 1
      %v1476 = vsel %vm1455, %v1474, %v1475
      %v1477 = vrot.slane %v1005, 1
      %v1478 = vrot.slane %v1006, 1
      %v1479 = vsel %vm1455, %v1477, %v1478
      %s1488 = scalar_lea.vmem %s5, 128
      %v1489 = vld [vmem:[%s1488] sm:$0xf]
      %v1490 = vld [vmem:[%s1488 + $0x4] sm:$0xf]
      %v1491 = vld [vmem:[%s1488 + $0x8] sm:$0xf]
      %v1492 = vld [vmem:[%s1488 + $0xc] sm:$0xf]
      %v1493 = vld [vmem:[%s1488 + $0x10] sm:$0xf]
      %v1494 = vld [vmem:[%s1488 + $0x14] sm:$0xf]
      %v1495 = vld [vmem:[%s1488 + $0x18] sm:$0xf]
      %v1496 = vld [vmem:[%s1488 + $0x1c] sm:$0xf]
      %v1497 = vld [vmem:[%s1488 + $0x20] sm:$0xf]
      %v1498 = vld [vmem:[%s1488 + $0x24] sm:$0xf]
      %v1499 = vld [vmem:[%s1488 + $0x28] sm:$0xf]
      %v1500 = vld [vmem:[%s1488 + $0x2c] sm:$0xf]
      %v1501 = vld [vmem:[%s1488 + $0x30] sm:$0xf]
      %v1502 = vld [vmem:[%s1488 + $0x34] sm:$0xf]
      %v1503 = vld [vmem:[%s1488 + $0x38] sm:$0xf]
      %v1504 = vld [vmem:[%s1488 + $0x3c] sm:$0xf]
      %v1521 = vunpack.c.l.b16 %v1489
      %v1522 = vunpack.c.l.b16 %v1490
      %v1523 = vunpack.c.l.b16 %v1491
      %v1524 = vunpack.c.l.b16 %v1492
      %v1525 = vunpack.c.l.b16 %v1493
      %v1526 = vunpack.c.l.b16 %v1494
      %v1527 = vunpack.c.l.b16 %v1495
      %v1528 = vunpack.c.l.b16 %v1496
      %v1529 = vunpack.c.l.b16 %v1497
      %v1530 = vunpack.c.l.b16 %v1498
      %v1531 = vunpack.c.l.b16 %v1499
      %v1532 = vunpack.c.l.b16 %v1500
      %v1533 = vunpack.c.l.b16 %v1501
      %v1534 = vunpack.c.l.b16 %v1502
      %v1535 = vunpack.c.l.b16 %v1503
      %v1536 = vunpack.c.l.b16 %v1504
      %v1537 = vpack.c.b16 %v1522, %v1521
      %v1538 = vpack.c.b16 %v1524, %v1523
      %v1539 = vpack.c.b16 %v1526, %v1525
      %v1540 = vpack.c.b16 %v1528, %v1527
      %v1541 = vpack.c.b16 %v1530, %v1529
      %v1542 = vpack.c.b16 %v1532, %v1531
      %v1543 = vpack.c.b16 %v1534, %v1533
      %v1544 = vpack.c.b16 %v1536, %v1535
      %1553 = vmatprep.subr.bf16.mxu0 0
      %1554 = vmatpush1.bf16.msra.mxu0 %v1544
      %1555 = vmatprep.subr.bf16.mxu0 0
      %1556 = vmatpush1.bf16.msra.mxu0 %v1543
      %1557 = vmatprep.subr.bf16.mxu0 0
      %1558 = vmatpush1.bf16.msra.mxu0 %v1542
      %1559 = vmatprep.subr.bf16.mxu0 0
      %1560 = vmatpush1.bf16.msra.mxu0 %v1541
      %1561 = vmatprep.subr.bf16.mxu0 0
      %1562 = vmatpush1.bf16.msra.mxu0 %v1540
      %1563 = vmatprep.subr.bf16.mxu0 0
      %1564 = vmatpush1.bf16.msra.mxu0 %v1539
      %1565 = vmatprep.subr.bf16.mxu0 0
      %1566 = vmatpush1.bf16.msra.mxu0 %v1538
      %1567 = vmatprep.subr.bf16.mxu0 0
      %1568 = vmatpush1.bf16.msra.mxu0 %v1537
      %1569 = vmatprep.subr.bf16.mxu0 0
      %1570 = vmatpush2.bf16.msra.mxu0 0
      %1571 = vmatprep.subr.bf16.mxu0 0
      %1572 = vmatpush2.bf16.msra.mxu0 0
      %1573 = vmatprep.subr.bf16.mxu0 0
      %1574 = vmatpush2.bf16.msra.mxu0 0
      %1575 = vmatprep.subr.bf16.mxu0 0
      %1576 = vmatpush2.bf16.msra.mxu0 0
      %1577 = vmatprep.subr.bf16.mxu0 0
      %1578 = vmatpush2.bf16.msra.mxu0 0
      %1579 = vmatprep.subr.bf16.mxu0 0
      %1580 = vmatpush2.bf16.msra.mxu0 0
      %1581 = vmatprep.subr.bf16.mxu0 0
      %1582 = vmatpush2.bf16.msra.mxu0 0
      %1583 = vmatprep.subr.bf16.mxu0 0
      %1584 = vmatpush2.bf16.msra.mxu0 0
      %1585 = vmatprep.mubr.bf16.mxu0 0
      %1586 = vmatmul.mubr.bf16.gmra.mxu0 %v1458
      %v1587 = vpop.f32.mrf.mxu0
      %v1588 = vadd.f32 0.0, %v1587
      %v1589 = vpop.f32.mrf.mxu0
      %v1590 = vpop.f32.mrf.mxu0
      %v1591 = vadd.f32 0.0, %v1590
      %v1592 = vpop.f32.mrf.mxu0
      %1593 = vmatprep.mubr.bf16.mxu0 0
      %1594 = vmatmul.mubr.bf16.gmra.mxu0 %v1461
      %v1595 = vpop.f32.mrf.mxu0
      %v1596 = vadd.f32 0.0, %v1595
      %v1597 = vpop.f32.mrf.mxu0
      %v1598 = vpop.f32.mrf.mxu0
      %v1599 = vadd.f32 0.0, %v1598
      %v1600 = vpop.f32.mrf.mxu0
      %1601 = vmatprep.mubr.bf16.mxu0 0
      %1602 = vmatmul.mubr.bf16.gmra.mxu0 %v1464
      %v1603 = vpop.f32.mrf.mxu0
      %v1604 = vadd.f32 0.0, %v1603
      %v1605 = vpop.f32.mrf.mxu0
      %v1606 = vpop.f32.mrf.mxu0
      %v1607 = vadd.f32 0.0, %v1606
      %v1608 = vpop.f32.mrf.mxu0
      %1609 = vmatprep.mubr.bf16.mxu0 0
      %1610 = vmatmul.mubr.bf16.gmra.mxu0 %v1467
      %v1611 = vpop.f32.mrf.mxu0
      %v1612 = vadd.f32 0.0, %v1611
      %v1613 = vpop.f32.mrf.mxu0
      %v1614 = vpop.f32.mrf.mxu0
      %v1615 = vadd.f32 0.0, %v1614
      %v1616 = vpop.f32.mrf.mxu0
      %1617 = vmatprep.mubr.bf16.mxu0 0
      %1618 = vmatmul.mubr.bf16.gmra.mxu0 %v1470
      %v1619 = vpop.f32.mrf.mxu0
      %v1620 = vadd.f32 0.0, %v1619
      %v1621 = vpop.f32.mrf.mxu0
      %v1622 = vpop.f32.mrf.mxu0
      %v1623 = vadd.f32 0.0, %v1622
      %v1624 = vpop.f32.mrf.mxu0
      %1625 = vmatprep.mubr.bf16.mxu0 0
      %1626 = vmatmul.mubr.bf16.gmra.mxu0 %v1473
      %v1627 = vpop.f32.mrf.mxu0
      %v1628 = vadd.f32 0.0, %v1627
      %v1629 = vpop.f32.mrf.mxu0
      %v1630 = vpop.f32.mrf.mxu0
      %v1631 = vadd.f32 0.0, %v1630
      %v1632 = vpop.f32.mrf.mxu0
      %1633 = vmatprep.mubr.bf16.mxu0 0
      %1634 = vmatmul.mubr.bf16.gmra.mxu0 %v1476
      %v1635 = vpop.f32.mrf.mxu0
      %v1636 = vadd.f32 0.0, %v1635
      %v1637 = vpop.f32.mrf.mxu0
      %v1638 = vpop.f32.mrf.mxu0
      %v1639 = vadd.f32 0.0, %v1638
      %v1640 = vpop.f32.mrf.mxu0
      %1641 = vmatprep.mubr.bf16.mxu0 0
      %1642 = vmatmul.mubr.bf16.gmra.mxu0 %v1479
      %v1643 = vpop.f32.mrf.mxu0
      %v1644 = vadd.f32 0.0, %v1643
      %v1645 = vpop.f32.mrf.mxu0
      %v1646 = vpop.f32.mrf.mxu0
      %v1647 = vadd.f32 0.0, %v1646
      %v1648 = vpop.f32.mrf.mxu0
      %1649 = vdwg.mxu0
      %v1650 = vadd.f32 %v1377, %v1588
      %v1651 = vadd.f32 %v1380, %v1591
      %v1652 = vadd.f32 %v1385, %v1596
      %v1653 = vadd.f32 %v1388, %v1599
      %v1654 = vadd.f32 %v1393, %v1604
      %v1655 = vadd.f32 %v1396, %v1607
      %v1656 = vadd.f32 %v1401, %v1612
      %v1657 = vadd.f32 %v1404, %v1615
      %v1658 = vadd.f32 %v1409, %v1620
      %v1659 = vadd.f32 %v1412, %v1623
      %v1660 = vadd.f32 %v1417, %v1628
      %v1661 = vadd.f32 %v1420, %v1631
      %v1662 = vadd.f32 %v1425, %v1636
      %v1663 = vadd.f32 %v1428, %v1639
      %v1664 = vadd.f32 %v1433, %v1644
      %v1665 = vadd.f32 %v1436, %v1647
      %s1666 = scalar_lea.vmem %s5, 192
      %v1667 = vld [vmem:[%s1666] sm:$0xf]
      %v1668 = vld [vmem:[%s1666 + $0x4] sm:$0xf]
      %v1669 = vld [vmem:[%s1666 + $0x8] sm:$0xf]
      %v1670 = vld [vmem:[%s1666 + $0xc] sm:$0xf]
      %v1671 = vld [vmem:[%s1666 + $0x10] sm:$0xf]
      %v1672 = vld [vmem:[%s1666 + $0x14] sm:$0xf]
      %v1673 = vld [vmem:[%s1666 + $0x18] sm:$0xf]
      %v1674 = vld [vmem:[%s1666 + $0x1c] sm:$0xf]
      %v1675 = vld [vmem:[%s1666 + $0x20] sm:$0xf]
      %v1676 = vld [vmem:[%s1666 + $0x24] sm:$0xf]
      %v1677 = vld [vmem:[%s1666 + $0x28] sm:$0xf]
      %v1678 = vld [vmem:[%s1666 + $0x2c] sm:$0xf]
      %v1679 = vld [vmem:[%s1666 + $0x30] sm:$0xf]
      %v1680 = vld [vmem:[%s1666 + $0x34] sm:$0xf]
      %v1681 = vld [vmem:[%s1666 + $0x38] sm:$0xf]
      %v1682 = vld [vmem:[%s1666 + $0x3c] sm:$0xf]
      %v1699 = vunpack.c.l.b16 %v1667
      %v1700 = vunpack.c.l.b16 %v1668
      %v1701 = vunpack.c.l.b16 %v1669
      %v1702 = vunpack.c.l.b16 %v1670
      %v1703 = vunpack.c.l.b16 %v1671
      %v1704 = vunpack.c.l.b16 %v1672
      %v1705 = vunpack.c.l.b16 %v1673
      %v1706 = vunpack.c.l.b16 %v1674
      %v1707 = vunpack.c.l.b16 %v1675
      %v1708 = vunpack.c.l.b16 %v1676
      %v1709 = vunpack.c.l.b16 %v1677
      %v1710 = vunpack.c.l.b16 %v1678
      %v1711 = vunpack.c.l.b16 %v1679
      %v1712 = vunpack.c.l.b16 %v1680
      %v1713 = vunpack.c.l.b16 %v1681
      %v1714 = vunpack.c.l.b16 %v1682
      %v1715 = vpack.c.b16 %v1700, %v1699
      %v1716 = vpack.c.b16 %v1702, %v1701
      %v1717 = vpack.c.b16 %v1704, %v1703
      %v1718 = vpack.c.b16 %v1706, %v1705
      %v1719 = vpack.c.b16 %v1708, %v1707
      %v1720 = vpack.c.b16 %v1710, %v1709
      %v1721 = vpack.c.b16 %v1712, %v1711
      %v1722 = vpack.c.b16 %v1714, %v1713
      %1731 = vmatprep.subr.bf16.mxu0 0
      %1732 = vmatpush1.bf16.msra.mxu0 %v1722
      %1733 = vmatprep.subr.bf16.mxu0 0
      %1734 = vmatpush1.bf16.msra.mxu0 %v1721
      %1735 = vmatprep.subr.bf16.mxu0 0
      %1736 = vmatpush1.bf16.msra.mxu0 %v1720
      %1737 = vmatprep.subr.bf16.mxu0 0
      %1738 = vmatpush1.bf16.msra.mxu0 %v1719
      %1739 = vmatprep.subr.bf16.mxu0 0
      %1740 = vmatpush1.bf16.msra.mxu0 %v1718
      %1741 = vmatprep.subr.bf16.mxu0 0
      %1742 = vmatpush1.bf16.msra.mxu0 %v1717
      %1743 = vmatprep.subr.bf16.mxu0 0
      %1744 = vmatpush1.bf16.msra.mxu0 %v1716
      %1745 = vmatprep.subr.bf16.mxu0 0
      %1746 = vmatpush1.bf16.msra.mxu0 %v1715
      %1747 = vmatprep.subr.bf16.mxu0 0
      %1748 = vmatpush2.bf16.msra.mxu0 0
      %1749 = vmatprep.subr.bf16.mxu0 0
      %1750 = vmatpush2.bf16.msra.mxu0 0
      %1751 = vmatprep.subr.bf16.mxu0 0
      %1752 = vmatpush2.bf16.msra.mxu0 0
      %1753 = vmatprep.subr.bf16.mxu0 0
      %1754 = vmatpush2.bf16.msra.mxu0 0
      %1755 = vmatprep.subr.bf16.mxu0 0
      %1756 = vmatpush2.bf16.msra.mxu0 0
      %1757 = vmatprep.subr.bf16.mxu0 0
      %1758 = vmatpush2.bf16.msra.mxu0 0
      %1759 = vmatprep.subr.bf16.mxu0 0
      %1760 = vmatpush2.bf16.msra.mxu0 0
      %1761 = vmatprep.subr.bf16.mxu0 0
      %1762 = vmatpush2.bf16.msra.mxu0 0
      %1763 = vmatprep.mubr.bf16.mxu0 0
      %1764 = vmatmul.mubr.bf16.gmra.mxu0 %v993
      %v1765 = vpop.f32.mrf.mxu0
      %v1766 = vadd.f32 0.0, %v1765
      %v1767 = vpop.f32.mrf.mxu0
      %v1768 = vpop.f32.mrf.mxu0
      %v1769 = vadd.f32 0.0, %v1768
      %v1770 = vpop.f32.mrf.mxu0
      %1771 = vmatprep.mubr.bf16.mxu0 0
      %1772 = vmatmul.mubr.bf16.gmra.mxu0 %v995
      %v1773 = vpop.f32.mrf.mxu0
      %v1774 = vadd.f32 0.0, %v1773
      %v1775 = vpop.f32.mrf.mxu0
      %v1776 = vpop.f32.mrf.mxu0
      %v1777 = vadd.f32 0.0, %v1776
      %v1778 = vpop.f32.mrf.mxu0
      %1779 = vmatprep.mubr.bf16.mxu0 0
      %1780 = vmatmul.mubr.bf16.gmra.mxu0 %v997
      %v1781 = vpop.f32.mrf.mxu0
      %v1782 = vadd.f32 0.0, %v1781
      %v1783 = vpop.f32.mrf.mxu0
      %v1784 = vpop.f32.mrf.mxu0
      %v1785 = vadd.f32 0.0, %v1784
      %v1786 = vpop.f32.mrf.mxu0
      %1787 = vmatprep.mubr.bf16.mxu0 0
      %1788 = vmatmul.mubr.bf16.gmra.mxu0 %v999
      %v1789 = vpop.f32.mrf.mxu0
      %v1790 = vadd.f32 0.0, %v1789
      %v1791 = vpop.f32.mrf.mxu0
      %v1792 = vpop.f32.mrf.mxu0
      %v1793 = vadd.f32 0.0, %v1792
      %v1794 = vpop.f32.mrf.mxu0
      %1795 = vmatprep.mubr.bf16.mxu0 0
      %1796 = vmatmul.mubr.bf16.gmra.mxu0 %v1001
      %v1797 = vpop.f32.mrf.mxu0
      %v1798 = vadd.f32 0.0, %v1797
      %v1799 = vpop.f32.mrf.mxu0
      %v1800 = vpop.f32.mrf.mxu0
      %v1801 = vadd.f32 0.0, %v1800
      %v1802 = vpop.f32.mrf.mxu0
      %1803 = vmatprep.mubr.bf16.mxu0 0
      %1804 = vmatmul.mubr.bf16.gmra.mxu0 %v1003
      %v1805 = vpop.f32.mrf.mxu0
      %v1806 = vadd.f32 0.0, %v1805
      %v1807 = vpop.f32.mrf.mxu0
      %v1808 = vpop.f32.mrf.mxu0
      %v1809 = vadd.f32 0.0, %v1808
      %v1810 = vpop.f32.mrf.mxu0
      %1811 = vmatprep.mubr.bf16.mxu0 0
      %1812 = vmatmul.mubr.bf16.gmra.mxu0 %v1005
      %v1813 = vpop.f32.mrf.mxu0
      %v1814 = vadd.f32 0.0, %v1813
      %v1815 = vpop.f32.mrf.mxu0
      %v1816 = vpop.f32.mrf.mxu0
      %v1817 = vadd.f32 0.0, %v1816
      %v1818 = vpop.f32.mrf.mxu0
      %1819 = vmatprep.mubr.bf16.mxu0 0
      %1820 = vmatmul.mubr.bf16.gmra.mxu0 %v1007
      %v1821 = vpop.f32.mrf.mxu0
      %v1822 = vadd.f32 0.0, %v1821
      %v1823 = vpop.f32.mrf.mxu0
      %v1824 = vpop.f32.mrf.mxu0
      %v1825 = vadd.f32 0.0, %v1824
      %v1826 = vpop.f32.mrf.mxu0
      %1827 = vdwg.mxu0
      %v1828 = vadd.f32 %v1650, %v1766
      %v1829 = vadd.f32 %v1651, %v1769
      %v1830 = vadd.f32 %v1652, %v1774
      %v1831 = vadd.f32 %v1653, %v1777
      %v1832 = vadd.f32 %v1654, %v1782
      %v1833 = vadd.f32 %v1655, %v1785
      %v1834 = vadd.f32 %v1656, %v1790
      %v1835 = vadd.f32 %v1657, %v1793
      %v1836 = vadd.f32 %v1658, %v1798
      %v1837 = vadd.f32 %v1659, %v1801
      %v1838 = vadd.f32 %v1660, %v1806
      %v1839 = vadd.f32 %v1661, %v1809
      %v1840 = vadd.f32 %v1662, %v1814
      %v1841 = vadd.f32 %v1663, %v1817
      %v1842 = vadd.f32 %v1664, %v1822
      %v1843 = vadd.f32 %v1665, %v1825
      %v1845 = vshrl.u32 %v1007, 16
      %v1847 = vshll.u32 %v1007, 16
      %v1849 = vrot.slane %v1847, 1
      %v1850 = vor.u32 %v1845, %v1849
      %v1852 = vshll.u32 %v1008, 16
      %v1854 = vrot.slane %v1852, 1
      %v1855 = vsel %vm1027, %v1850, %v1854
      %s1857 = scalar_lea.vmem %s5, 256
      %v1858 = vld [vmem:[%s1857] sm:$0xf]
      %v1859 = vld [vmem:[%s1857 + $0x4] sm:$0xf]
      %v1860 = vld [vmem:[%s1857 + $0x8] sm:$0xf]
      %v1861 = vld [vmem:[%s1857 + $0xc] sm:$0xf]
      %v1862 = vld [vmem:[%s1857 + $0x10] sm:$0xf]
      %v1863 = vld [vmem:[%s1857 + $0x14] sm:$0xf]
      %v1864 = vld [vmem:[%s1857 + $0x18] sm:$0xf]
      %v1865 = vld [vmem:[%s1857 + $0x1c] sm:$0xf]
      %v1866 = vld [vmem:[%s1857 + $0x20] sm:$0xf]
      %v1867 = vld [vmem:[%s1857 + $0x24] sm:$0xf]
      %v1868 = vld [vmem:[%s1857 + $0x28] sm:$0xf]
      %v1869 = vld [vmem:[%s1857 + $0x2c] sm:$0xf]
      %v1870 = vld [vmem:[%s1857 + $0x30] sm:$0xf]
      %v1871 = vld [vmem:[%s1857 + $0x34] sm:$0xf]
      %v1872 = vld [vmem:[%s1857 + $0x38] sm:$0xf]
      %v1873 = vld [vmem:[%s1857 + $0x3c] sm:$0xf]
      %v1890 = vunpack.c.l.b16 %v1858
      %v1891 = vunpack.c.l.b16 %v1859
      %v1892 = vunpack.c.l.b16 %v1860
      %v1893 = vunpack.c.l.b16 %v1861
      %v1894 = vunpack.c.l.b16 %v1862
      %v1895 = vunpack.c.l.b16 %v1863
      %v1896 = vunpack.c.l.b16 %v1864
      %v1897 = vunpack.c.l.b16 %v1865
      %v1898 = vunpack.c.l.b16 %v1866
      %v1899 = vunpack.c.l.b16 %v1867
      %v1900 = vunpack.c.l.b16 %v1868
      %v1901 = vunpack.c.l.b16 %v1869
      %v1902 = vunpack.c.l.b16 %v1870
      %v1903 = vunpack.c.l.b16 %v1871
      %v1904 = vunpack.c.l.b16 %v1872
      %v1905 = vunpack.c.l.b16 %v1873
      %v1906 = vpack.c.b16 %v1891, %v1890
      %v1907 = vpack.c.b16 %v1893, %v1892
      %v1908 = vpack.c.b16 %v1895, %v1894
      %v1909 = vpack.c.b16 %v1897, %v1896
      %v1910 = vpack.c.b16 %v1899, %v1898
      %v1911 = vpack.c.b16 %v1901, %v1900
      %v1912 = vpack.c.b16 %v1903, %v1902
      %v1913 = vpack.c.b16 %v1905, %v1904
      %1922 = vmatprep.subr.bf16.mxu0 0
      %1923 = vmatpush1.bf16.msra.mxu0 %v1913
      %1924 = vmatprep.subr.bf16.mxu0 0
      %1925 = vmatpush1.bf16.msra.mxu0 %v1912
      %1926 = vmatprep.subr.bf16.mxu0 0
      %1927 = vmatpush1.bf16.msra.mxu0 %v1911
      %1928 = vmatprep.subr.bf16.mxu0 0
      %1929 = vmatpush1.bf16.msra.mxu0 %v1910
      %1930 = vmatprep.subr.bf16.mxu0 0
      %1931 = vmatpush1.bf16.msra.mxu0 %v1909
      %1932 = vmatprep.subr.bf16.mxu0 0
      %1933 = vmatpush1.bf16.msra.mxu0 %v1908
      %1934 = vmatprep.subr.bf16.mxu0 0
      %1935 = vmatpush1.bf16.msra.mxu0 %v1907
      %1936 = vmatprep.subr.bf16.mxu0 0
      %1937 = vmatpush1.bf16.msra.mxu0 %v1906
      %1938 = vmatprep.subr.bf16.mxu0 0
      %1939 = vmatpush2.bf16.msra.mxu0 0
      %1940 = vmatprep.subr.bf16.mxu0 0
      %1941 = vmatpush2.bf16.msra.mxu0 0
      %1942 = vmatprep.subr.bf16.mxu0 0
      %1943 = vmatpush2.bf16.msra.mxu0 0
      %1944 = vmatprep.subr.bf16.mxu0 0
      %1945 = vmatpush2.bf16.msra.mxu0 0
      %1946 = vmatprep.subr.bf16.mxu0 0
      %1947 = vmatpush2.bf16.msra.mxu0 0
      %1948 = vmatprep.subr.bf16.mxu0 0
      %1949 = vmatpush2.bf16.msra.mxu0 0
      %1950 = vmatprep.subr.bf16.mxu0 0
      %1951 = vmatpush2.bf16.msra.mxu0 0
      %1952 = vmatprep.subr.bf16.mxu0 0
      %1953 = vmatpush2.bf16.msra.mxu0 0
      %1954 = vmatprep.mubr.bf16.mxu0 0
      %1955 = vmatmul.mubr.bf16.gmra.mxu0 %v1051
      %v1956 = vpop.f32.mrf.mxu0
      %v1957 = vadd.f32 0.0, %v1956
      %v1958 = vpop.f32.mrf.mxu0
      %v1959 = vpop.f32.mrf.mxu0
      %v1960 = vadd.f32 0.0, %v1959
      %v1961 = vpop.f32.mrf.mxu0
      %1962 = vmatprep.mubr.bf16.mxu0 0
      %1963 = vmatmul.mubr.bf16.gmra.mxu0 %v1063
      %v1964 = vpop.f32.mrf.mxu0
      %v1965 = vadd.f32 0.0, %v1964
      %v1966 = vpop.f32.mrf.mxu0
      %v1967 = vpop.f32.mrf.mxu0
      %v1968 = vadd.f32 0.0, %v1967
      %v1969 = vpop.f32.mrf.mxu0
      %1970 = vmatprep.mubr.bf16.mxu0 0
      %1971 = vmatmul.mubr.bf16.gmra.mxu0 %v1075
      %v1972 = vpop.f32.mrf.mxu0
      %v1973 = vadd.f32 0.0, %v1972
      %v1974 = vpop.f32.mrf.mxu0
      %v1975 = vpop.f32.mrf.mxu0
      %v1976 = vadd.f32 0.0, %v1975
      %v1977 = vpop.f32.mrf.mxu0
      %1978 = vmatprep.mubr.bf16.mxu0 0
      %1979 = vmatmul.mubr.bf16.gmra.mxu0 %v1087
      %v1980 = vpop.f32.mrf.mxu0
      %v1981 = vadd.f32 0.0, %v1980
      %v1982 = vpop.f32.mrf.mxu0
      %v1983 = vpop.f32.mrf.mxu0
      %v1984 = vadd.f32 0.0, %v1983
      %v1985 = vpop.f32.mrf.mxu0
      %1986 = vmatprep.mubr.bf16.mxu0 0
      %1987 = vmatmul.mubr.bf16.gmra.mxu0 %v1099
      %v1988 = vpop.f32.mrf.mxu0
      %v1989 = vadd.f32 0.0, %v1988
      %v1990 = vpop.f32.mrf.mxu0
      %v1991 = vpop.f32.mrf.mxu0
      %v1992 = vadd.f32 0.0, %v1991
      %v1993 = vpop.f32.mrf.mxu0
      %1994 = vmatprep.mubr.bf16.mxu0 0
      %1995 = vmatmul.mubr.bf16.gmra.mxu0 %v1111
      %v1996 = vpop.f32.mrf.mxu0
      %v1997 = vadd.f32 0.0, %v1996
      %v1998 = vpop.f32.mrf.mxu0
      %v1999 = vpop.f32.mrf.mxu0
      %v2000 = vadd.f32 0.0, %v1999
      %v2001 = vpop.f32.mrf.mxu0
      %2002 = vmatprep.mubr.bf16.mxu0 0
      %2003 = vmatmul.mubr.bf16.gmra.mxu0 %v1123
      %v2004 = vpop.f32.mrf.mxu0
      %v2005 = vadd.f32 0.0, %v2004
      %v2006 = vpop.f32.mrf.mxu0
      %v2007 = vpop.f32.mrf.mxu0
      %v2008 = vadd.f32 0.0, %v2007
      %v2009 = vpop.f32.mrf.mxu0
      %2010 = vmatprep.mubr.bf16.mxu0 0
      %2011 = vmatmul.mubr.bf16.gmra.mxu0 %v1855
      %v2012 = vpop.f32.mrf.mxu0
      %v2013 = vadd.f32 0.0, %v2012
      %v2014 = vpop.f32.mrf.mxu0
      %v2015 = vpop.f32.mrf.mxu0
      %v2016 = vadd.f32 0.0, %v2015
      %v2017 = vpop.f32.mrf.mxu0
      %2018 = vdwg.mxu0
      %v2019 = vadd.f32 %v1828, %v1957
      %v2020 = vadd.f32 %v1829, %v1960
      %v2021 = vadd.f32 %v1830, %v1965
      %v2022 = vadd.f32 %v1831, %v1968
      %v2023 = vadd.f32 %v1832, %v1973
      %v2024 = vadd.f32 %v1833, %v1976
      %v2025 = vadd.f32 %v1834, %v1981
      %v2026 = vadd.f32 %v1835, %v1984
      %v2027 = vadd.f32 %v1836, %v1989
      %v2028 = vadd.f32 %v1837, %v1992
      %v2029 = vadd.f32 %v1838, %v1997
      %v2030 = vadd.f32 %v1839, %v2000
      %v2031 = vadd.f32 %v1840, %v2005
      %v2032 = vadd.f32 %v1841, %v2008
      %v2033 = vadd.f32 %v1842, %v2013
      %v2034 = vadd.f32 %v1843, %v2016
      %v2037 = vrot.slane %v1007, 1
      %v2038 = vrot.slane %v1008, 1
      %v2039 = vsel %vm1455, %v2037, %v2038
      %s2041 = scalar_lea.vmem %s5, 320
      %v2042 = vld [vmem:[%s2041] sm:$0xf]
      %v2043 = vld [vmem:[%s2041 + $0x4] sm:$0xf]
      %v2044 = vld [vmem:[%s2041 + $0x8] sm:$0xf]
      %v2045 = vld [vmem:[%s2041 + $0xc] sm:$0xf]
      %v2046 = vld [vmem:[%s2041 + $0x10] sm:$0xf]
      %v2047 = vld [vmem:[%s2041 + $0x14] sm:$0xf]
      %v2048 = vld [vmem:[%s2041 + $0x18] sm:$0xf]
      %v2049 = vld [vmem:[%s2041 + $0x1c] sm:$0xf]
      %v2050 = vld [vmem:[%s2041 + $0x20] sm:$0xf]
      %v2051 = vld [vmem:[%s2041 + $0x24] sm:$0xf]
      %v2052 = vld [vmem:[%s2041 + $0x28] sm:$0xf]
      %v2053 = vld [vmem:[%s2041 + $0x2c] sm:$0xf]
      %v2054 = vld [vmem:[%s2041 + $0x30] sm:$0xf]
      %v2055 = vld [vmem:[%s2041 + $0x34] sm:$0xf]
      %v2056 = vld [vmem:[%s2041 + $0x38] sm:$0xf]
      %v2057 = vld [vmem:[%s2041 + $0x3c] sm:$0xf]
      %v2074 = vunpack.c.l.b16 %v2042
      %v2075 = vunpack.c.l.b16 %v2043
      %v2076 = vunpack.c.l.b16 %v2044
      %v2077 = vunpack.c.l.b16 %v2045
      %v2078 = vunpack.c.l.b16 %v2046
      %v2079 = vunpack.c.l.b16 %v2047
      %v2080 = vunpack.c.l.b16 %v2048
      %v2081 = vunpack.c.l.b16 %v2049
      %v2082 = vunpack.c.l.b16 %v2050
      %v2083 = vunpack.c.l.b16 %v2051
      %v2084 = vunpack.c.l.b16 %v2052
      %v2085 = vunpack.c.l.b16 %v2053
      %v2086 = vunpack.c.l.b16 %v2054
      %v2087 = vunpack.c.l.b16 %v2055
      %v2088 = vunpack.c.l.b16 %v2056
      %v2089 = vunpack.c.l.b16 %v2057
      %v2090 = vpack.c.b16 %v2075, %v2074
      %v2091 = vpack.c.b16 %v2077, %v2076
      %v2092 = vpack.c.b16 %v2079, %v2078
      %v2093 = vpack.c.b16 %v2081, %v2080
      %v2094 = vpack.c.b16 %v2083, %v2082
      %v2095 = vpack.c.b16 %v2085, %v2084
      %v2096 = vpack.c.b16 %v2087, %v2086
      %v2097 = vpack.c.b16 %v2089, %v2088
      %2106 = vmatprep.subr.bf16.mxu0 0
      %2107 = vmatpush1.bf16.msra.mxu0 %v2097
      %2108 = vmatprep.subr.bf16.mxu0 0
      %2109 = vmatpush1.bf16.msra.mxu0 %v2096
      %2110 = vmatprep.subr.bf16.mxu0 0
      %2111 = vmatpush1.bf16.msra.mxu0 %v2095
      %2112 = vmatprep.subr.bf16.mxu0 0
      %2113 = vmatpush1.bf16.msra.mxu0 %v2094
      %2114 = vmatprep.subr.bf16.mxu0 0
      %2115 = vmatpush1.bf16.msra.mxu0 %v2093
      %2116 = vmatprep.subr.bf16.mxu0 0
      %2117 = vmatpush1.bf16.msra.mxu0 %v2092
      %2118 = vmatprep.subr.bf16.mxu0 0
      %2119 = vmatpush1.bf16.msra.mxu0 %v2091
      %2120 = vmatprep.subr.bf16.mxu0 0
      %2121 = vmatpush1.bf16.msra.mxu0 %v2090
      %2122 = vmatprep.subr.bf16.mxu0 0
      %2123 = vmatpush2.bf16.msra.mxu0 0
      %2124 = vmatprep.subr.bf16.mxu0 0
      %2125 = vmatpush2.bf16.msra.mxu0 0
      %2126 = vmatprep.subr.bf16.mxu0 0
      %2127 = vmatpush2.bf16.msra.mxu0 0
      %2128 = vmatprep.subr.bf16.mxu0 0
      %2129 = vmatpush2.bf16.msra.mxu0 0
      %2130 = vmatprep.subr.bf16.mxu0 0
      %2131 = vmatpush2.bf16.msra.mxu0 0
      %2132 = vmatprep.subr.bf16.mxu0 0
      %2133 = vmatpush2.bf16.msra.mxu0 0
      %2134 = vmatprep.subr.bf16.mxu0 0
      %2135 = vmatpush2.bf16.msra.mxu0 0
      %2136 = vmatprep.subr.bf16.mxu0 0
      %2137 = vmatpush2.bf16.msra.mxu0 0
      %2138 = vmatprep.mubr.bf16.mxu0 0
      %2139 = vmatmul.mubr.bf16.gmra.mxu0 %v1461
      %v2140 = vpop.f32.mrf.mxu0
      %v2141 = vadd.f32 0.0, %v2140
      %v2142 = vpop.f32.mrf.mxu0
      %v2143 = vpop.f32.mrf.mxu0
      %v2144 = vadd.f32 0.0, %v2143
      %v2145 = vpop.f32.mrf.mxu0
      %2146 = vmatprep.mubr.bf16.mxu0 0
      %2147 = vmatmul.mubr.bf16.gmra.mxu0 %v1464
      %v2148 = vpop.f32.mrf.mxu0
      %v2149 = vadd.f32 0.0, %v2148
      %v2150 = vpop.f32.mrf.mxu0
      %v2151 = vpop.f32.mrf.mxu0
      %v2152 = vadd.f32 0.0, %v2151
      %v2153 = vpop.f32.mrf.mxu0
      %2154 = vmatprep.mubr.bf16.mxu0 0
      %2155 = vmatmul.mubr.bf16.gmra.mxu0 %v1467
      %v2156 = vpop.f32.mrf.mxu0
      %v2157 = vadd.f32 0.0, %v2156
      %v2158 = vpop.f32.mrf.mxu0
      %v2159 = vpop.f32.mrf.mxu0
      %v2160 = vadd.f32 0.0, %v2159
      %v2161 = vpop.f32.mrf.mxu0
      %2162 = vmatprep.mubr.bf16.mxu0 0
      %2163 = vmatmul.mubr.bf16.gmra.mxu0 %v1470
      %v2164 = vpop.f32.mrf.mxu0
      %v2165 = vadd.f32 0.0, %v2164
      %v2166 = vpop.f32.mrf.mxu0
      %v2167 = vpop.f32.mrf.mxu0
      %v2168 = vadd.f32 0.0, %v2167
      %v2169 = vpop.f32.mrf.mxu0
      %2170 = vmatprep.mubr.bf16.mxu0 0
      %2171 = vmatmul.mubr.bf16.gmra.mxu0 %v1473
      %v2172 = vpop.f32.mrf.mxu0
      %v2173 = vadd.f32 0.0, %v2172
      %v2174 = vpop.f32.mrf.mxu0
      %v2175 = vpop.f32.mrf.mxu0
      %v2176 = vadd.f32 0.0, %v2175
      %v2177 = vpop.f32.mrf.mxu0
      %2178 = vmatprep.mubr.bf16.mxu0 0
      %2179 = vmatmul.mubr.bf16.gmra.mxu0 %v1476
      %v2180 = vpop.f32.mrf.mxu0
      %v2181 = vadd.f32 0.0, %v2180
      %v2182 = vpop.f32.mrf.mxu0
      %v2183 = vpop.f32.mrf.mxu0
      %v2184 = vadd.f32 0.0, %v2183
      %v2185 = vpop.f32.mrf.mxu0
      %2186 = vmatprep.mubr.bf16.mxu0 0
      %2187 = vmatmul.mubr.bf16.gmra.mxu0 %v1479
      %v2188 = vpop.f32.mrf.mxu0
      %v2189 = vadd.f32 0.0, %v2188
      %v2190 = vpop.f32.mrf.mxu0
      %v2191 = vpop.f32.mrf.mxu0
      %v2192 = vadd.f32 0.0, %v2191
      %v2193 = vpop.f32.mrf.mxu0
      %2194 = vmatprep.mubr.bf16.mxu0 0
      %2195 = vmatmul.mubr.bf16.gmra.mxu0 %v2039
      %v2196 = vpop.f32.mrf.mxu0
      %v2197 = vadd.f32 0.0, %v2196
      %v2198 = vpop.f32.mrf.mxu0
      %v2199 = vpop.f32.mrf.mxu0
      %v2200 = vadd.f32 0.0, %v2199
      %v2201 = vpop.f32.mrf.mxu0
      %2202 = vdwg.mxu0
      %v2203 = vadd.f32 %v2019, %v2141
      %v2204 = vadd.f32 %v2020, %v2144
      %v2205 = vadd.f32 %v2021, %v2149
      %v2206 = vadd.f32 %v2022, %v2152
      %v2207 = vadd.f32 %v2023, %v2157
      %v2208 = vadd.f32 %v2024, %v2160
      %v2209 = vadd.f32 %v2025, %v2165
      %v2210 = vadd.f32 %v2026, %v2168
      %v2211 = vadd.f32 %v2027, %v2173
      %v2212 = vadd.f32 %v2028, %v2176
      %v2213 = vadd.f32 %v2029, %v2181
      %v2214 = vadd.f32 %v2030, %v2184
      %v2215 = vadd.f32 %v2031, %v2189
      %v2216 = vadd.f32 %v2032, %v2192
      %v2217 = vadd.f32 %v2033, %v2197
      %v2218 = vadd.f32 %v2034, %v2200
      %s2219 = scalar_lea.vmem %s5, 384
      %v2220 = vld [vmem:[%s2219] sm:$0xf]
      %v2221 = vld [vmem:[%s2219 + $0x4] sm:$0xf]
      %v2222 = vld [vmem:[%s2219 + $0x8] sm:$0xf]
      %v2223 = vld [vmem:[%s2219 + $0xc] sm:$0xf]
      %v2224 = vld [vmem:[%s2219 + $0x10] sm:$0xf]
      %v2225 = vld [vmem:[%s2219 + $0x14] sm:$0xf]
      %v2226 = vld [vmem:[%s2219 + $0x18] sm:$0xf]
      %v2227 = vld [vmem:[%s2219 + $0x1c] sm:$0xf]
      %v2228 = vld [vmem:[%s2219 + $0x20] sm:$0xf]
      %v2229 = vld [vmem:[%s2219 + $0x24] sm:$0xf]
      %v2230 = vld [vmem:[%s2219 + $0x28] sm:$0xf]
      %v2231 = vld [vmem:[%s2219 + $0x2c] sm:$0xf]
      %v2232 = vld [vmem:[%s2219 + $0x30] sm:$0xf]
      %v2233 = vld [vmem:[%s2219 + $0x34] sm:$0xf]
      %v2234 = vld [vmem:[%s2219 + $0x38] sm:$0xf]
      %v2235 = vld [vmem:[%s2219 + $0x3c] sm:$0xf]
      %v2252 = vunpack.c.l.b16 %v2220
      %v2253 = vunpack.c.l.b16 %v2221
      %v2254 = vunpack.c.l.b16 %v2222
      %v2255 = vunpack.c.l.b16 %v2223
      %v2256 = vunpack.c.l.b16 %v2224
      %v2257 = vunpack.c.l.b16 %v2225
      %v2258 = vunpack.c.l.b16 %v2226
      %v2259 = vunpack.c.l.b16 %v2227
      %v2260 = vunpack.c.l.b16 %v2228
      %v2261 = vunpack.c.l.b16 %v2229
      %v2262 = vunpack.c.l.b16 %v2230
      %v2263 = vunpack.c.l.b16 %v2231
      %v2264 = vunpack.c.l.b16 %v2232
      %v2265 = vunpack.c.l.b16 %v2233
      %v2266 = vunpack.c.l.b16 %v2234
      %v2267 = vunpack.c.l.b16 %v2235
      %v2268 = vpack.c.b16 %v2253, %v2252
      %v2269 = vpack.c.b16 %v2255, %v2254
      %v2270 = vpack.c.b16 %v2257, %v2256
      %v2271 = vpack.c.b16 %v2259, %v2258
      %v2272 = vpack.c.b16 %v2261, %v2260
      %v2273 = vpack.c.b16 %v2263, %v2262
      %v2274 = vpack.c.b16 %v2265, %v2264
      %v2275 = vpack.c.b16 %v2267, %v2266
      %2284 = vmatprep.subr.bf16.mxu0 0
      %2285 = vmatpush1.bf16.msra.mxu0 %v2275
      %2286 = vmatprep.subr.bf16.mxu0 0
      %2287 = vmatpush1.bf16.msra.mxu0 %v2274
      %2288 = vmatprep.subr.bf16.mxu0 0
      %2289 = vmatpush1.bf16.msra.mxu0 %v2273
      %2290 = vmatprep.subr.bf16.mxu0 0
      %2291 = vmatpush1.bf16.msra.mxu0 %v2272
      %2292 = vmatprep.subr.bf16.mxu0 0
      %2293 = vmatpush1.bf16.msra.mxu0 %v2271
      %2294 = vmatprep.subr.bf16.mxu0 0
      %2295 = vmatpush1.bf16.msra.mxu0 %v2270
      %2296 = vmatprep.subr.bf16.mxu0 0
      %2297 = vmatpush1.bf16.msra.mxu0 %v2269
      %2298 = vmatprep.subr.bf16.mxu0 0
      %2299 = vmatpush1.bf16.msra.mxu0 %v2268
      %2300 = vmatprep.subr.bf16.mxu0 0
      %2301 = vmatpush2.bf16.msra.mxu0 0
      %2302 = vmatprep.subr.bf16.mxu0 0
      %2303 = vmatpush2.bf16.msra.mxu0 0
      %2304 = vmatprep.subr.bf16.mxu0 0
      %2305 = vmatpush2.bf16.msra.mxu0 0
      %2306 = vmatprep.subr.bf16.mxu0 0
      %2307 = vmatpush2.bf16.msra.mxu0 0
      %2308 = vmatprep.subr.bf16.mxu0 0
      %2309 = vmatpush2.bf16.msra.mxu0 0
      %2310 = vmatprep.subr.bf16.mxu0 0
      %2311 = vmatpush2.bf16.msra.mxu0 0
      %2312 = vmatprep.subr.bf16.mxu0 0
      %2313 = vmatpush2.bf16.msra.mxu0 0
      %2314 = vmatprep.subr.bf16.mxu0 0
      %2315 = vmatpush2.bf16.msra.mxu0 0
      %2316 = vmatprep.mubr.bf16.mxu0 0
      %2317 = vmatmul.mubr.bf16.gmra.mxu0 %v995
      %v2318 = vpop.f32.mrf.mxu0
      %v2319 = vadd.f32 0.0, %v2318
      %v2320 = vpop.f32.mrf.mxu0
      %v2321 = vpop.f32.mrf.mxu0
      %v2322 = vadd.f32 0.0, %v2321
      %v2323 = vpop.f32.mrf.mxu0
      %2324 = vmatprep.mubr.bf16.mxu0 0
      %2325 = vmatmul.mubr.bf16.gmra.mxu0 %v997
      %v2326 = vpop.f32.mrf.mxu0
      %v2327 = vadd.f32 0.0, %v2326
      %v2328 = vpop.f32.mrf.mxu0
      %v2329 = vpop.f32.mrf.mxu0
      %v2330 = vadd.f32 0.0, %v2329
      %v2331 = vpop.f32.mrf.mxu0
      %2332 = vmatprep.mubr.bf16.mxu0 0
      %2333 = vmatmul.mubr.bf16.gmra.mxu0 %v999
      %v2334 = vpop.f32.mrf.mxu0
      %v2335 = vadd.f32 0.0, %v2334
      %v2336 = vpop.f32.mrf.mxu0
      %v2337 = vpop.f32.mrf.mxu0
      %v2338 = vadd.f32 0.0, %v2337
      %v2339 = vpop.f32.mrf.mxu0
      %2340 = vmatprep.mubr.bf16.mxu0 0
      %2341 = vmatmul.mubr.bf16.gmra.mxu0 %v1001
      %v2342 = vpop.f32.mrf.mxu0
      %v2343 = vadd.f32 0.0, %v2342
      %v2344 = vpop.f32.mrf.mxu0
      %v2345 = vpop.f32.mrf.mxu0
      %v2346 = vadd.f32 0.0, %v2345
      %v2347 = vpop.f32.mrf.mxu0
      %2348 = vmatprep.mubr.bf16.mxu0 0
      %2349 = vmatmul.mubr.bf16.gmra.mxu0 %v1003
      %v2350 = vpop.f32.mrf.mxu0
      %v2351 = vadd.f32 0.0, %v2350
      %v2352 = vpop.f32.mrf.mxu0
      %v2353 = vpop.f32.mrf.mxu0
      %v2354 = vadd.f32 0.0, %v2353
      %v2355 = vpop.f32.mrf.mxu0
      %2356 = vmatprep.mubr.bf16.mxu0 0
      %2357 = vmatmul.mubr.bf16.gmra.mxu0 %v1005
      %v2358 = vpop.f32.mrf.mxu0
      %v2359 = vadd.f32 0.0, %v2358
      %v2360 = vpop.f32.mrf.mxu0
      %v2361 = vpop.f32.mrf.mxu0
      %v2362 = vadd.f32 0.0, %v2361
      %v2363 = vpop.f32.mrf.mxu0
      %2364 = vmatprep.mubr.bf16.mxu0 0
      %2365 = vmatmul.mubr.bf16.gmra.mxu0 %v1007
      %v2366 = vpop.f32.mrf.mxu0
      %v2367 = vadd.f32 0.0, %v2366
      %v2368 = vpop.f32.mrf.mxu0
      %v2369 = vpop.f32.mrf.mxu0
      %v2370 = vadd.f32 0.0, %v2369
      %v2371 = vpop.f32.mrf.mxu0
      %2372 = vmatprep.mubr.bf16.mxu0 0
      %2373 = vmatmul.mubr.bf16.gmra.mxu0 %v1009
      %v2374 = vpop.f32.mrf.mxu0
      %v2375 = vadd.f32 0.0, %v2374
      %v2376 = vpop.f32.mrf.mxu0
      %v2377 = vpop.f32.mrf.mxu0
      %v2378 = vadd.f32 0.0, %v2377
      %v2379 = vpop.f32.mrf.mxu0
      %2380 = vdwg.mxu0
      %v2381 = vadd.f32 %v2203, %v2319
      %v2382 = vadd.f32 %v2204, %v2322
      %v2383 = vadd.f32 %v2205, %v2327
      %v2384 = vadd.f32 %v2206, %v2330
      %v2385 = vadd.f32 %v2207, %v2335
      %v2386 = vadd.f32 %v2208, %v2338
      %v2387 = vadd.f32 %v2209, %v2343
      %v2388 = vadd.f32 %v2210, %v2346
      %v2389 = vadd.f32 %v2211, %v2351
      %v2390 = vadd.f32 %v2212, %v2354
      %v2391 = vadd.f32 %v2213, %v2359
      %v2392 = vadd.f32 %v2214, %v2362
      %v2393 = vadd.f32 %v2215, %v2367
      %v2394 = vadd.f32 %v2216, %v2370
      %v2395 = vadd.f32 %v2217, %v2375
      %v2396 = vadd.f32 %v2218, %v2378
      %v2398 = vshrl.u32 %v1009, 16
      %v2400 = vshll.u32 %v1009, 16
      %v2402 = vrot.slane %v2400, 1
      %v2403 = vor.u32 %v2398, %v2402
      %v2405 = vshll.u32 %v1010, 16
      %v2407 = vrot.slane %v2405, 1
      %v2408 = vsel %vm1027, %v2403, %v2407
      %s2410 = scalar_lea.vmem %s5, 448
      %v2411 = vld [vmem:[%s2410] sm:$0xf]
      %v2412 = vld [vmem:[%s2410 + $0x4] sm:$0xf]
      %v2413 = vld [vmem:[%s2410 + $0x8] sm:$0xf]
      %v2414 = vld [vmem:[%s2410 + $0xc] sm:$0xf]
      %v2415 = vld [vmem:[%s2410 + $0x10] sm:$0xf]
      %v2416 = vld [vmem:[%s2410 + $0x14] sm:$0xf]
      %v2417 = vld [vmem:[%s2410 + $0x18] sm:$0xf]
      %v2418 = vld [vmem:[%s2410 + $0x1c] sm:$0xf]
      %v2419 = vld [vmem:[%s2410 + $0x20] sm:$0xf]
      %v2420 = vld [vmem:[%s2410 + $0x24] sm:$0xf]
      %v2421 = vld [vmem:[%s2410 + $0x28] sm:$0xf]
      %v2422 = vld [vmem:[%s2410 + $0x2c] sm:$0xf]
      %v2423 = vld [vmem:[%s2410 + $0x30] sm:$0xf]
      %v2424 = vld [vmem:[%s2410 + $0x34] sm:$0xf]
      %v2425 = vld [vmem:[%s2410 + $0x38] sm:$0xf]
      %v2426 = vld [vmem:[%s2410 + $0x3c] sm:$0xf]
      %v2443 = vunpack.c.l.b16 %v2411
      %v2444 = vunpack.c.l.b16 %v2412
      %v2445 = vunpack.c.l.b16 %v2413
      %v2446 = vunpack.c.l.b16 %v2414
      %v2447 = vunpack.c.l.b16 %v2415
      %v2448 = vunpack.c.l.b16 %v2416
      %v2449 = vunpack.c.l.b16 %v2417
      %v2450 = vunpack.c.l.b16 %v2418
      %v2451 = vunpack.c.l.b16 %v2419
      %v2452 = vunpack.c.l.b16 %v2420
      %v2453 = vunpack.c.l.b16 %v2421
      %v2454 = vunpack.c.l.b16 %v2422
      %v2455 = vunpack.c.l.b16 %v2423
      %v2456 = vunpack.c.l.b16 %v2424
      %v2457 = vunpack.c.l.b16 %v2425
      %v2458 = vunpack.c.l.b16 %v2426
      %v2459 = vpack.c.b16 %v2444, %v2443
      %v2460 = vpack.c.b16 %v2446, %v2445
      %v2461 = vpack.c.b16 %v2448, %v2447
      %v2462 = vpack.c.b16 %v2450, %v2449
      %v2463 = vpack.c.b16 %v2452, %v2451
      %v2464 = vpack.c.b16 %v2454, %v2453
      %v2465 = vpack.c.b16 %v2456, %v2455
      %v2466 = vpack.c.b16 %v2458, %v2457
      %2475 = vmatprep.subr.bf16.mxu0 0
      %2476 = vmatpush1.bf16.msra.mxu0 %v2466
      %2477 = vmatprep.subr.bf16.mxu0 0
      %2478 = vmatpush1.bf16.msra.mxu0 %v2465
      %2479 = vmatprep.subr.bf16.mxu0 0
      %2480 = vmatpush1.bf16.msra.mxu0 %v2464
      %2481 = vmatprep.subr.bf16.mxu0 0
      %2482 = vmatpush1.bf16.msra.mxu0 %v2463
      %2483 = vmatprep.subr.bf16.mxu0 0
      %2484 = vmatpush1.bf16.msra.mxu0 %v2462
      %2485 = vmatprep.subr.bf16.mxu0 0
      %2486 = vmatpush1.bf16.msra.mxu0 %v2461
      %2487 = vmatprep.subr.bf16.mxu0 0
      %2488 = vmatpush1.bf16.msra.mxu0 %v2460
      %2489 = vmatprep.subr.bf16.mxu0 0
      %2490 = vmatpush1.bf16.msra.mxu0 %v2459
      %2491 = vmatprep.subr.bf16.mxu0 0
      %2492 = vmatpush2.bf16.msra.mxu0 0
      %2493 = vmatprep.subr.bf16.mxu0 0
      %2494 = vmatpush2.bf16.msra.mxu0 0
      %2495 = vmatprep.subr.bf16.mxu0 0
      %2496 = vmatpush2.bf16.msra.mxu0 0
      %2497 = vmatprep.subr.bf16.mxu0 0
      %2498 = vmatpush2.bf16.msra.mxu0 0
      %2499 = vmatprep.subr.bf16.mxu0 0
      %2500 = vmatpush2.bf16.msra.mxu0 0
      %2501 = vmatprep.subr.bf16.mxu0 0
      %2502 = vmatpush2.bf16.msra.mxu0 0
      %2503 = vmatprep.subr.bf16.mxu0 0
      %2504 = vmatpush2.bf16.msra.mxu0 0
      %2505 = vmatprep.subr.bf16.mxu0 0
      %2506 = vmatpush2.bf16.msra.mxu0 0
      %2507 = vmatprep.mubr.bf16.mxu0 0
      %2508 = vmatmul.mubr.bf16.gmra.mxu0 %v1063
      %v2509 = vpop.f32.mrf.mxu0
      %v2510 = vadd.f32 0.0, %v2509
      %v2511 = vpop.f32.mrf.mxu0
      %v2512 = vpop.f32.mrf.mxu0
      %v2513 = vadd.f32 0.0, %v2512
      %v2514 = vpop.f32.mrf.mxu0
      %2515 = vmatprep.mubr.bf16.mxu0 0
      %2516 = vmatmul.mubr.bf16.gmra.mxu0 %v1075
      %v2517 = vpop.f32.mrf.mxu0
      %v2518 = vadd.f32 0.0, %v2517
      %v2519 = vpop.f32.mrf.mxu0
      %v2520 = vpop.f32.mrf.mxu0
      %v2521 = vadd.f32 0.0, %v2520
      %v2522 = vpop.f32.mrf.mxu0
      %2523 = vmatprep.mubr.bf16.mxu0 0
      %2524 = vmatmul.mubr.bf16.gmra.mxu0 %v1087
      %v2525 = vpop.f32.mrf.mxu0
      %v2526 = vadd.f32 0.0, %v2525
      %v2527 = vpop.f32.mrf.mxu0
      %v2528 = vpop.f32.mrf.mxu0
      %v2529 = vadd.f32 0.0, %v2528
      %v2530 = vpop.f32.mrf.mxu0
      %2531 = vmatprep.mubr.bf16.mxu0 0
      %2532 = vmatmul.mubr.bf16.gmra.mxu0 %v1099
      %v2533 = vpop.f32.mrf.mxu0
      %v2534 = vadd.f32 0.0, %v2533
      %v2535 = vpop.f32.mrf.mxu0
      %v2536 = vpop.f32.mrf.mxu0
      %v2537 = vadd.f32 0.0, %v2536
      %v2538 = vpop.f32.mrf.mxu0
      %2539 = vmatprep.mubr.bf16.mxu0 0
      %2540 = vmatmul.mubr.bf16.gmra.mxu0 %v1111
      %v2541 = vpop.f32.mrf.mxu0
      %v2542 = vadd.f32 0.0, %v2541
      %v2543 = vpop.f32.mrf.mxu0
      %v2544 = vpop.f32.mrf.mxu0
      %v2545 = vadd.f32 0.0, %v2544
      %v2546 = vpop.f32.mrf.mxu0
      %2547 = vmatprep.mubr.bf16.mxu0 0
      %2548 = vmatmul.mubr.bf16.gmra.mxu0 %v1123
      %v2549 = vpop.f32.mrf.mxu0
      %v2550 = vadd.f32 0.0, %v2549
      %v2551 = vpop.f32.mrf.mxu0
      %v2552 = vpop.f32.mrf.mxu0
      %v2553 = vadd.f32 0.0, %v2552
      %v2554 = vpop.f32.mrf.mxu0
      %2555 = vmatprep.mubr.bf16.mxu0 0
      %2556 = vmatmul.mubr.bf16.gmra.mxu0 %v1855
      %v2557 = vpop.f32.mrf.mxu0
      %v2558 = vadd.f32 0.0, %v2557
      %v2559 = vpop.f32.mrf.mxu0
      %v2560 = vpop.f32.mrf.mxu0
      %v2561 = vadd.f32 0.0, %v2560
      %v2562 = vpop.f32.mrf.mxu0
      %2563 = vmatprep.mubr.bf16.mxu0 0
      %2564 = vmatmul.mubr.bf16.gmra.mxu0 %v2408
      %v2565 = vpop.f32.mrf.mxu0
      %v2566 = vadd.f32 0.0, %v2565
      %v2567 = vpop.f32.mrf.mxu0
      %v2568 = vpop.f32.mrf.mxu0
      %v2569 = vadd.f32 0.0, %v2568
      %v2570 = vpop.f32.mrf.mxu0
      %2571 = vdwg.mxu0
      %v2572 = vadd.f32 %v2381, %v2510
      %v2573 = vadd.f32 %v2382, %v2513
      %v2574 = vadd.f32 %v2383, %v2518
      %v2575 = vadd.f32 %v2384, %v2521
      %v2576 = vadd.f32 %v2385, %v2526
      %v2577 = vadd.f32 %v2386, %v2529
      %v2578 = vadd.f32 %v2387, %v2534
      %v2579 = vadd.f32 %v2388, %v2537
      %v2580 = vadd.f32 %v2389, %v2542
      %v2581 = vadd.f32 %v2390, %v2545
      %v2582 = vadd.f32 %v2391, %v2550
      %v2583 = vadd.f32 %v2392, %v2553
      %v2584 = vadd.f32 %v2393, %v2558
      %v2585 = vadd.f32 %v2394, %v2561
      %v2586 = vadd.f32 %v2395, %v2566
      %v2587 = vadd.f32 %v2396, %v2569
      %v2590 = vrot.slane %v1009, 1
      %v2591 = vrot.slane %v1010, 1
      %v2592 = vsel %vm1455, %v2590, %v2591
      %s2594 = scalar_lea.vmem %s5, 512
      %v2595 = vld [vmem:[%s2594] sm:$0xf]
      %v2596 = vld [vmem:[%s2594 + $0x4] sm:$0xf]
      %v2597 = vld [vmem:[%s2594 + $0x8] sm:$0xf]
      %v2598 = vld [vmem:[%s2594 + $0xc] sm:$0xf]
      %v2599 = vld [vmem:[%s2594 + $0x10] sm:$0xf]
      %v2600 = vld [vmem:[%s2594 + $0x14] sm:$0xf]
      %v2601 = vld [vmem:[%s2594 + $0x18] sm:$0xf]
      %v2602 = vld [vmem:[%s2594 + $0x1c] sm:$0xf]
      %v2603 = vld [vmem:[%s2594 + $0x20] sm:$0xf]
      %v2604 = vld [vmem:[%s2594 + $0x24] sm:$0xf]
      %v2605 = vld [vmem:[%s2594 + $0x28] sm:$0xf]
      %v2606 = vld [vmem:[%s2594 + $0x2c] sm:$0xf]
      %v2607 = vld [vmem:[%s2594 + $0x30] sm:$0xf]
      %v2608 = vld [vmem:[%s2594 + $0x34] sm:$0xf]
      %v2609 = vld [vmem:[%s2594 + $0x38] sm:$0xf]
      %v2610 = vld [vmem:[%s2594 + $0x3c] sm:$0xf]
      %v2627 = vunpack.c.l.b16 %v2595
      %v2628 = vunpack.c.l.b16 %v2596
      %v2629 = vunpack.c.l.b16 %v2597
      %v2630 = vunpack.c.l.b16 %v2598
      %v2631 = vunpack.c.l.b16 %v2599
      %v2632 = vunpack.c.l.b16 %v2600
      %v2633 = vunpack.c.l.b16 %v2601
      %v2634 = vunpack.c.l.b16 %v2602
      %v2635 = vunpack.c.l.b16 %v2603
      %v2636 = vunpack.c.l.b16 %v2604
      %v2637 = vunpack.c.l.b16 %v2605
      %v2638 = vunpack.c.l.b16 %v2606
      %v2639 = vunpack.c.l.b16 %v2607
      %v2640 = vunpack.c.l.b16 %v2608
      %v2641 = vunpack.c.l.b16 %v2609
      %v2642 = vunpack.c.l.b16 %v2610
      %v2643 = vpack.c.b16 %v2628, %v2627
      %v2644 = vpack.c.b16 %v2630, %v2629
      %v2645 = vpack.c.b16 %v2632, %v2631
      %v2646 = vpack.c.b16 %v2634, %v2633
      %v2647 = vpack.c.b16 %v2636, %v2635
      %v2648 = vpack.c.b16 %v2638, %v2637
      %v2649 = vpack.c.b16 %v2640, %v2639
      %v2650 = vpack.c.b16 %v2642, %v2641
      %2659 = vmatprep.subr.bf16.mxu0 0
      %2660 = vmatpush1.bf16.msra.mxu0 %v2650
      %2661 = vmatprep.subr.bf16.mxu0 0
      %2662 = vmatpush1.bf16.msra.mxu0 %v2649
      %2663 = vmatprep.subr.bf16.mxu0 0
      %2664 = vmatpush1.bf16.msra.mxu0 %v2648
      %2665 = vmatprep.subr.bf16.mxu0 0
      %2666 = vmatpush1.bf16.msra.mxu0 %v2647
      %2667 = vmatprep.subr.bf16.mxu0 0
      %2668 = vmatpush1.bf16.msra.mxu0 %v2646
      %2669 = vmatprep.subr.bf16.mxu0 0
      %2670 = vmatpush1.bf16.msra.mxu0 %v2645
      %2671 = vmatprep.subr.bf16.mxu0 0
      %2672 = vmatpush1.bf16.msra.mxu0 %v2644
      %2673 = vmatprep.subr.bf16.mxu0 0
      %2674 = vmatpush1.bf16.msra.mxu0 %v2643
      %2675 = vmatprep.subr.bf16.mxu0 0
      %2676 = vmatpush2.bf16.msra.mxu0 0
      %2677 = vmatprep.subr.bf16.mxu0 0
      %2678 = vmatpush2.bf16.msra.mxu0 0
      %2679 = vmatprep.subr.bf16.mxu0 0
      %2680 = vmatpush2.bf16.msra.mxu0 0
      %2681 = vmatprep.subr.bf16.mxu0 0
      %2682 = vmatpush2.bf16.msra.mxu0 0
      %2683 = vmatprep.subr.bf16.mxu0 0
      %2684 = vmatpush2.bf16.msra.mxu0 0
      %2685 = vmatprep.subr.bf16.mxu0 0
      %2686 = vmatpush2.bf16.msra.mxu0 0
      %2687 = vmatprep.subr.bf16.mxu0 0
      %2688 = vmatpush2.bf16.msra.mxu0 0
      %2689 = vmatprep.subr.bf16.mxu0 0
      %2690 = vmatpush2.bf16.msra.mxu0 0
      %2691 = vmatprep.mubr.bf16.mxu0 0
      %2692 = vmatmul.mubr.bf16.gmra.mxu0 %v1464
      %v2693 = vpop.f32.mrf.mxu0
      %v2694 = vadd.f32 0.0, %v2693
      %v2695 = vpop.f32.mrf.mxu0
      %v2696 = vpop.f32.mrf.mxu0
      %v2697 = vadd.f32 0.0, %v2696
      %v2698 = vpop.f32.mrf.mxu0
      %2699 = vmatprep.mubr.bf16.mxu0 0
      %2700 = vmatmul.mubr.bf16.gmra.mxu0 %v1467
      %v2701 = vpop.f32.mrf.mxu0
      %v2702 = vadd.f32 0.0, %v2701
      %v2703 = vpop.f32.mrf.mxu0
      %v2704 = vpop.f32.mrf.mxu0
      %v2705 = vadd.f32 0.0, %v2704
      %v2706 = vpop.f32.mrf.mxu0
      %2707 = vmatprep.mubr.bf16.mxu0 0
      %2708 = vmatmul.mubr.bf16.gmra.mxu0 %v1470
      %v2709 = vpop.f32.mrf.mxu0
      %v2710 = vadd.f32 0.0, %v2709
      %v2711 = vpop.f32.mrf.mxu0
      %v2712 = vpop.f32.mrf.mxu0
      %v2713 = vadd.f32 0.0, %v2712
      %v2714 = vpop.f32.mrf.mxu0
      %2715 = vmatprep.mubr.bf16.mxu0 0
      %2716 = vmatmul.mubr.bf16.gmra.mxu0 %v1473
      %v2717 = vpop.f32.mrf.mxu0
      %v2718 = vadd.f32 0.0, %v2717
      %v2719 = vpop.f32.mrf.mxu0
      %v2720 = vpop.f32.mrf.mxu0
      %v2721 = vadd.f32 0.0, %v2720
      %v2722 = vpop.f32.mrf.mxu0
      %2723 = vmatprep.mubr.bf16.mxu0 0
      %2724 = vmatmul.mubr.bf16.gmra.mxu0 %v1476
      %v2725 = vpop.f32.mrf.mxu0
      %v2726 = vadd.f32 0.0, %v2725
      %v2727 = vpop.f32.mrf.mxu0
      %v2728 = vpop.f32.mrf.mxu0
      %v2729 = vadd.f32 0.0, %v2728
      %v2730 = vpop.f32.mrf.mxu0
      %2731 = vmatprep.mubr.bf16.mxu0 0
      %2732 = vmatmul.mubr.bf16.gmra.mxu0 %v1479
      %v2733 = vpop.f32.mrf.mxu0
      %v2734 = vadd.f32 0.0, %v2733
      %v2735 = vpop.f32.mrf.mxu0
      %v2736 = vpop.f32.mrf.mxu0
      %v2737 = vadd.f32 0.0, %v2736
      %v2738 = vpop.f32.mrf.mxu0
      %2739 = vmatprep.mubr.bf16.mxu0 0
      %2740 = vmatmul.mubr.bf16.gmra.mxu0 %v2039
      %v2741 = vpop.f32.mrf.mxu0
      %v2742 = vadd.f32 0.0, %v2741
      %v2743 = vpop.f32.mrf.mxu0
      %v2744 = vpop.f32.mrf.mxu0
      %v2745 = vadd.f32 0.0, %v2744
      %v2746 = vpop.f32.mrf.mxu0
      %2747 = vmatprep.mubr.bf16.mxu0 0
      %2748 = vmatmul.mubr.bf16.gmra.mxu0 %v2592
      %v2749 = vpop.f32.mrf.mxu0
      %v2750 = vadd.f32 0.0, %v2749
      %v2751 = vpop.f32.mrf.mxu0
      %v2752 = vpop.f32.mrf.mxu0
      %v2753 = vadd.f32 0.0, %v2752
      %v2754 = vpop.f32.mrf.mxu0
      %2755 = vdwg.mxu0
      %v2756 = vadd.f32 %v2572, %v2694
      %v2757 = vadd.f32 %v2573, %v2697
      %v2758 = vadd.f32 %v2574, %v2702
      %v2759 = vadd.f32 %v2575, %v2705
      %v2760 = vadd.f32 %v2576, %v2710
      %v2761 = vadd.f32 %v2577, %v2713
      %v2762 = vadd.f32 %v2578, %v2718
      %v2763 = vadd.f32 %v2579, %v2721
      %v2764 = vadd.f32 %v2580, %v2726
      %v2765 = vadd.f32 %v2581, %v2729
      %v2766 = vadd.f32 %v2582, %v2734
      %v2767 = vadd.f32 %v2583, %v2737
      %v2768 = vadd.f32 %v2584, %v2742
      %v2769 = vadd.f32 %v2585, %v2745
      %v2770 = vadd.f32 %v2586, %v2750
      %v2771 = vadd.f32 %v2587, %v2753
      %v2772 = vld [vmem:[%s6] sm:$0x1]
      %v2774 = vlaneseq
      %v2775 = vshrl.u32 %v2774, 7
      %v2776 = vsub.s32 0, %v2775
      %v2777 = vrot.slane %v2772, %v2776
      %v2779 = vadd.f32 %v2756, %v2777
      %v2780 = vadd.f32 %v2757, %v2777
      %v2781 = vadd.f32 %v2758, %v2777
      %v2782 = vadd.f32 %v2759, %v2777
      %v2783 = vadd.f32 %v2760, %v2777
      %v2784 = vadd.f32 %v2761, %v2777
      %v2785 = vadd.f32 %v2762, %v2777
      %v2786 = vadd.f32 %v2763, %v2777
      %v2787 = vadd.f32 %v2764, %v2777
      %v2788 = vadd.f32 %v2765, %v2777
      %v2789 = vadd.f32 %v2766, %v2777
      %v2790 = vadd.f32 %v2767, %v2777
      %v2791 = vadd.f32 %v2768, %v2777
      %v2792 = vadd.f32 %v2769, %v2777
      %v2793 = vadd.f32 %v2770, %v2777
      %v2794 = vadd.f32 %v2771, %v2777
      %v2795 = vmax.f32 %v2779, 0.0
      %v2796 = vmax.f32 %v2780, 0.0
      %v2797 = vmax.f32 %v2781, 0.0
      %v2798 = vmax.f32 %v2782, 0.0
      %v2799 = vmax.f32 %v2783, 0.0
      %v2800 = vmax.f32 %v2784, 0.0
      %v2801 = vmax.f32 %v2785, 0.0
      %v2802 = vmax.f32 %v2786, 0.0
      %v2803 = vmax.f32 %v2787, 0.0
      %v2804 = vmax.f32 %v2788, 0.0
      %v2805 = vmax.f32 %v2789, 0.0
      %v2806 = vmax.f32 %v2790, 0.0
      %v2807 = vmax.f32 %v2791, 0.0
      %v2808 = vmax.f32 %v2792, 0.0
      %v2809 = vmax.f32 %v2793, 0.0
      %v2810 = vmax.f32 %v2794, 0.0
      %v2811 = vpack.c.bf16 %v2796, %v2795
      %v2812 = vpack.c.bf16 %v2798, %v2797
      %v2813 = vpack.c.bf16 %v2800, %v2799
      %v2814 = vpack.c.bf16 %v2802, %v2801
      %v2815 = vpack.c.bf16 %v2804, %v2803
      %v2816 = vpack.c.bf16 %v2806, %v2805
      %v2817 = vpack.c.bf16 %v2808, %v2807
      %v2818 = vpack.c.bf16 %v2810, %v2809
      %v2819 = vld [vmem:[%s7] sm:$0xf]
      %v2820 = vld [vmem:[%s7 + $0x4] sm:$0xf]
      %v2821 = vld [vmem:[%s7 + $0x8] sm:$0xf]
      %v2822 = vld [vmem:[%s7 + $0xc] sm:$0xf]
      %v2823 = vld [vmem:[%s7 + $0x10] sm:$0xf]
      %v2824 = vld [vmem:[%s7 + $0x14] sm:$0xf]
      %v2825 = vld [vmem:[%s7 + $0x18] sm:$0xf]
      %v2826 = vld [vmem:[%s7 + $0x1c] sm:$0xf]
      %v2827 = vld [vmem:[%s7 + $0x20] sm:$0xf]
      %v2828 = vld [vmem:[%s7 + $0x24] sm:$0xf]
      %v2829 = vld [vmem:[%s7 + $0x28] sm:$0xf]
      %v2830 = vld [vmem:[%s7 + $0x2c] sm:$0xf]
      %v2831 = vld [vmem:[%s7 + $0x30] sm:$0xf]
      %v2832 = vld [vmem:[%s7 + $0x34] sm:$0xf]
      %v2833 = vld [vmem:[%s7 + $0x38] sm:$0xf]
      %v2834 = vld [vmem:[%s7 + $0x3c] sm:$0xf]
      %v2835 = vld [vmem:[%s8] sm:$0x1]
      %v2837 = vlaneseq
      %v2838 = vshrl.u32 %v2837, 7
      %v2839 = vsub.s32 0, %v2838
      %v2840 = vrot.slane %v2835, %v2839
      %v2858 = vunpack.c.l.b16 %v2819
      %v2859 = vunpack.c.l.b16 %v2820
      %v2860 = vunpack.c.l.b16 %v2821
      %v2861 = vunpack.c.l.b16 %v2822
      %v2862 = vunpack.c.l.b16 %v2823
      %v2863 = vunpack.c.l.b16 %v2824
      %v2864 = vunpack.c.l.b16 %v2825
      %v2865 = vunpack.c.l.b16 %v2826
      %v2866 = vunpack.c.l.b16 %v2827
      %v2867 = vunpack.c.l.b16 %v2828
      %v2868 = vunpack.c.l.b16 %v2829
      %v2869 = vunpack.c.l.b16 %v2830
      %v2870 = vunpack.c.l.b16 %v2831
      %v2871 = vunpack.c.l.b16 %v2832
      %v2872 = vunpack.c.l.b16 %v2833
      %v2873 = vunpack.c.l.b16 %v2834
      %v2874 = vpack.c.b16 %v2859, %v2858
      %v2875 = vpack.c.b16 %v2861, %v2860
      %v2876 = vpack.c.b16 %v2863, %v2862
      %v2877 = vpack.c.b16 %v2865, %v2864
      %v2878 = vpack.c.b16 %v2867, %v2866
      %v2879 = vpack.c.b16 %v2869, %v2868
      %v2880 = vpack.c.b16 %v2871, %v2870
      %v2881 = vpack.c.b16 %v2873, %v2872
      %2890 = vmatprep.subr.bf16.mxu0 0
      %2891 = vmatpush1.bf16.msra.mxu0 %v2881
      %2892 = vmatprep.subr.bf16.mxu0 0
      %2893 = vmatpush1.bf16.msra.mxu0 %v2880
      %2894 = vmatprep.subr.bf16.mxu0 0
      %2895 = vmatpush1.bf16.msra.mxu0 %v2879
      %2896 = vmatprep.subr.bf16.mxu0 0
      %2897 = vmatpush1.bf16.msra.mxu0 %v2878
      %2898 = vmatprep.subr.bf16.mxu0 0
      %2899 = vmatpush1.bf16.msra.mxu0 %v2877
      %2900 = vmatprep.subr.bf16.mxu0 0
      %2901 = vmatpush1.bf16.msra.mxu0 %v2876
      %2902 = vmatprep.subr.bf16.mxu0 0
      %2903 = vmatpush1.bf16.msra.mxu0 %v2875
      %2904 = vmatprep.subr.bf16.mxu0 0
      %2905 = vmatpush1.bf16.msra.mxu0 %v2874
      %2906 = vmatprep.subr.bf16.mxu0 0
      %2907 = vmatpush2.bf16.msra.mxu0 0
      %2908 = vmatprep.subr.bf16.mxu0 0
      %2909 = vmatpush2.bf16.msra.mxu0 0
      %2910 = vmatprep.subr.bf16.mxu0 0
      %2911 = vmatpush2.bf16.msra.mxu0 0
      %2912 = vmatprep.subr.bf16.mxu0 0
      %2913 = vmatpush2.bf16.msra.mxu0 0
      %2914 = vmatprep.subr.bf16.mxu0 0
      %2915 = vmatpush2.bf16.msra.mxu0 0
      %2916 = vmatprep.subr.bf16.mxu0 0
      %2917 = vmatpush2.bf16.msra.mxu0 0
      %2918 = vmatprep.subr.bf16.mxu0 0
      %2919 = vmatpush2.bf16.msra.mxu0 0
      %2920 = vmatprep.subr.bf16.mxu0 0
      %2921 = vmatpush2.bf16.msra.mxu0 0
      %2922 = vmatprep.mubr.bf16.mxu0 0
      %2923 = vmatmul.mubr.bf16.gmra.mxu0 %v2811
      %v2924 = vpop.f32.mrf.mxu0
      %v2925 = vadd.f32 %v2840, %v2924
      %v2926 = vpop.f32.mrf.mxu0
      %v2927 = vpop.f32.mrf.mxu0
      %v2928 = vadd.f32 %v2840, %v2927
      %v2929 = vpop.f32.mrf.mxu0
      %2930 = vmatprep.mubr.bf16.mxu0 0
      %2931 = vmatmul.mubr.bf16.gmra.mxu0 %v2812
      %v2932 = vpop.f32.mrf.mxu0
      %v2933 = vadd.f32 %v2840, %v2932
      %v2934 = vpop.f32.mrf.mxu0
      %v2935 = vpop.f32.mrf.mxu0
      %v2936 = vadd.f32 %v2840, %v2935
      %v2937 = vpop.f32.mrf.mxu0
      %2938 = vmatprep.mubr.bf16.mxu0 0
      %2939 = vmatmul.mubr.bf16.gmra.mxu0 %v2813
      %v2940 = vpop.f32.mrf.mxu0
      %v2941 = vadd.f32 %v2840, %v2940
      %v2942 = vpop.f32.mrf.mxu0
      %v2943 = vpop.f32.mrf.mxu0
      %v2944 = vadd.f32 %v2840, %v2943
      %v2945 = vpop.f32.mrf.mxu0
      %2946 = vmatprep.mubr.bf16.mxu0 0
      %2947 = vmatmul.mubr.bf16.gmra.mxu0 %v2814
      %v2948 = vpop.f32.mrf.mxu0
      %v2949 = vadd.f32 %v2840, %v2948
      %v2950 = vpop.f32.mrf.mxu0
      %v2951 = vpop.f32.mrf.mxu0
      %v2952 = vadd.f32 %v2840, %v2951
      %v2953 = vpop.f32.mrf.mxu0
      %2954 = vmatprep.mubr.bf16.mxu0 0
      %2955 = vmatmul.mubr.bf16.gmra.mxu0 %v2815
      %v2956 = vpop.f32.mrf.mxu0
      %v2957 = vadd.f32 %v2840, %v2956
      %v2958 = vpop.f32.mrf.mxu0
      %v2959 = vpop.f32.mrf.mxu0
      %v2960 = vadd.f32 %v2840, %v2959
      %v2961 = vpop.f32.mrf.mxu0
      %2962 = vmatprep.mubr.bf16.mxu0 0
      %2963 = vmatmul.mubr.bf16.gmra.mxu0 %v2816
      %v2964 = vpop.f32.mrf.mxu0
      %v2965 = vadd.f32 %v2840, %v2964
      %v2966 = vpop.f32.mrf.mxu0
      %v2967 = vpop.f32.mrf.mxu0
      %v2968 = vadd.f32 %v2840, %v2967
      %v2969 = vpop.f32.mrf.mxu0
      %2970 = vmatprep.mubr.bf16.mxu0 0
      %2971 = vmatmul.mubr.bf16.gmra.mxu0 %v2817
      %v2972 = vpop.f32.mrf.mxu0
      %v2973 = vadd.f32 %v2840, %v2972
      %v2974 = vpop.f32.mrf.mxu0
      %v2975 = vpop.f32.mrf.mxu0
      %v2976 = vadd.f32 %v2840, %v2975
      %v2977 = vpop.f32.mrf.mxu0
      %2978 = vmatprep.mubr.bf16.mxu0 0
      %2979 = vmatmul.mubr.bf16.gmra.mxu0 %v2818
      %v2980 = vpop.f32.mrf.mxu0
      %v2981 = vadd.f32 %v2840, %v2980
      %v2982 = vpop.f32.mrf.mxu0
      %v2983 = vpop.f32.mrf.mxu0
      %v2984 = vadd.f32 %v2840, %v2983
      %v2985 = vpop.f32.mrf.mxu0
      %2986 = vdwg.mxu0
      %vm2987 = vsmask.f32 3328
      %vm2988 = vsmask.f32 7440
      %vm2989 = vmor %vm2987, %vm2988
      %v2991 = vshrl.u32 %v450, 16
      %v2993 = vrot.slane %v2991, 4
      %v2994 = vshll.u32 %v450, 16
      %v2996 = vrot.slane %v2994, 5
      %v2997 = vor.u32 %v2993, %v2996
      %v2998 = vrot.slane %v2997, 4
      %v3000 = vshll.u32 %v451, 16
      %v3002 = vrot.slane %v3000, 5
      %v3003 = vsel %vm2989, %v2998, %v3002
      %v3004 = vshrl.u32 %v451, 16
      %v3006 = vrot.slane %v3004, 4
      %v3007 = vor.u32 %v3006, %v3002
      %v3008 = vrot.slane %v3007, 4
      %v3010 = vshll.u32 %v452, 16
      %v3012 = vrot.slane %v3010, 5
      %v3013 = vsel %vm2989, %v3008, %v3012
      %v3015 = vshrl.u32 %v454, 16
      %v3017 = vrot.slane %v3015, 4
      %v3018 = vshll.u32 %v454, 16
      %v3020 = vrot.slane %v3018, 5
      %v3021 = vor.u32 %v3017, %v3020
      %v3022 = vrot.slane %v3021, 4
      %v3024 = vshll.u32 %v455, 16
      %v3026 = vrot.slane %v3024, 5
      %v3027 = vsel %vm2989, %v3022, %v3026
      %v3028 = vshrl.u32 %v455, 16
      %v3030 = vrot.slane %v3028, 4
      %v3031 = vor.u32 %v3030, %v3026
      %v3032 = vrot.slane %v3031, 4
      %v3034 = vshll.u32 %v456, 16
      %v3036 = vrot.slane %v3034, 5
      %v3037 = vsel %vm2989, %v3032, %v3036
      %v3039 = vshrl.u32 %v458, 16
      %v3041 = vrot.slane %v3039, 4
      %v3042 = vshll.u32 %v458, 16
      %v3044 = vrot.slane %v3042, 5
      %v3045 = vor.u32 %v3041, %v3044
      %v3046 = vrot.slane %v3045, 4
      %v3048 = vshll.u32 %v459, 16
      %v3050 = vrot.slane %v3048, 5
      %v3051 = vsel %vm2989, %v3046, %v3050
      %v3052 = vshrl.u32 %v459, 16
      %v3054 = vrot.slane %v3052, 4
      %v3055 = vor.u32 %v3054, %v3050
      %v3056 = vrot.slane %v3055, 4
      %v3058 = vshll.u32 %v460, 16
      %v3060 = vrot.slane %v3058, 5
      %v3061 = vsel %vm2989, %v3056, %v3060
      %v3063 = vshrl.u32 %v462, 16
      %v3065 = vrot.slane %v3063, 4
      %v3066 = vshll.u32 %v462, 16
      %v3068 = vrot.slane %v3066, 5
      %v3069 = vor.u32 %v3065, %v3068
      %v3070 = vrot.slane %v3069, 4
      %v3072 = vshll.u32 %v463, 16
      %v3074 = vrot.slane %v3072, 5
      %v3075 = vsel %vm2989, %v3070, %v3074
      %v3076 = vshrl.u32 %v463, 16
      %v3078 = vrot.slane %v3076, 4
      %v3079 = vor.u32 %v3078, %v3074
      %v3080 = vrot.slane %v3079, 4
      %v3082 = vshll.u32 %v464, 16
      %v3084 = vrot.slane %v3082, 5
      %v3085 = vsel %vm2989, %v3080, %v3084
      %v3087 = vshrl.u32 %v466, 16
      %v3089 = vrot.slane %v3087, 4
      %v3090 = vshll.u32 %v466, 16
      %v3092 = vrot.slane %v3090, 5
      %v3093 = vor.u32 %v3089, %v3092
      %v3094 = vrot.slane %v3093, 4
      %v3096 = vshll.u32 %v467, 16
      %v3098 = vrot.slane %v3096, 5
      %v3099 = vsel %vm2989, %v3094, %v3098
      %v3100 = vshrl.u32 %v467, 16
      %v3102 = vrot.slane %v3100, 4
      %v3103 = vor.u32 %v3102, %v3098
      %v3104 = vrot.slane %v3103, 4
      %v3106 = vshll.u32 %v468, 16
      %v3108 = vrot.slane %v3106, 5
      %v3109 = vsel %vm2989, %v3104, %v3108
      %v3111 = vshrl.u32 %v470, 16
      %v3113 = vrot.slane %v3111, 4
      %v3114 = vshll.u32 %v470, 16
      %v3116 = vrot.slane %v3114, 5
      %v3117 = vor.u32 %v3113, %v3116
      %v3118 = vrot.slane %v3117, 4
      %v3120 = vshll.u32 %v471, 16
      %v3122 = vrot.slane %v3120, 5
      %v3123 = vsel %vm2989, %v3118, %v3122
      %v3124 = vshrl.u32 %v471, 16
      %v3126 = vrot.slane %v3124, 4
      %v3127 = vor.u32 %v3126, %v3122
      %v3128 = vrot.slane %v3127, 4
      %v3130 = vshll.u32 %v472, 16
      %v3132 = vrot.slane %v3130, 5
      %v3133 = vsel %vm2989, %v3128, %v3132
      %v3135 = vshrl.u32 %v474, 16
      %v3137 = vrot.slane %v3135, 4
      %v3138 = vshll.u32 %v474, 16
      %v3140 = vrot.slane %v3138, 5
      %v3141 = vor.u32 %v3137, %v3140
      %v3142 = vrot.slane %v3141, 4
      %v3144 = vshll.u32 %v475, 16
      %v3146 = vrot.slane %v3144, 5
      %v3147 = vsel %vm2989, %v3142, %v3146
      %v3148 = vshrl.u32 %v475, 16
      %v3150 = vrot.slane %v3148, 4
      %v3151 = vor.u32 %v3150, %v3146
      %v3152 = vrot.slane %v3151, 4
      %v3154 = vshll.u32 %v476, 16
      %v3156 = vrot.slane %v3154, 5
      %v3157 = vsel %vm2989, %v3152, %v3156
      %v3159 = vshrl.u32 %v478, 16
      %v3161 = vrot.slane %v3159, 4
      %v3162 = vshll.u32 %v478, 16
      %v3164 = vrot.slane %v3162, 5
      %v3165 = vor.u32 %v3161, %v3164
      %v3166 = vrot.slane %v3165, 4
      %v3168 = vshll.u32 %v479, 16
      %v3170 = vrot.slane %v3168, 5
      %v3171 = vsel %vm2989, %v3166, %v3170
      %v3172 = vshrl.u32 %v479, 16
      %v3174 = vrot.slane %v3172, 4
      %v3175 = vor.u32 %v3174, %v3170
      %v3176 = vrot.slane %v3175, 4
      %v3178 = vshll.u32 %v480, 16
      %v3180 = vrot.slane %v3178, 5
      %v3181 = vsel %vm2989, %v3176, %v3180
      %v3198 = vunpack.c.l.bf16 %v3003
      %v3199 = vunpack.c.l.bf16 %v3013
      %v3200 = vunpack.c.l.bf16 %v3027
      %v3201 = vunpack.c.l.bf16 %v3037
      %v3202 = vunpack.c.l.bf16 %v3051
      %v3203 = vunpack.c.l.bf16 %v3061
      %v3204 = vunpack.c.l.bf16 %v3075
      %v3205 = vunpack.c.l.bf16 %v3085
      %v3206 = vunpack.c.l.bf16 %v3099
      %v3207 = vunpack.c.l.bf16 %v3109
      %v3208 = vunpack.c.l.bf16 %v3123
      %v3209 = vunpack.c.l.bf16 %v3133
      %v3210 = vunpack.c.l.bf16 %v3147
      %v3211 = vunpack.c.l.bf16 %v3157
      %v3212 = vunpack.c.l.bf16 %v3171
      %v3213 = vunpack.c.l.bf16 %v3181
      %v3214 = vadd.f32 %v2925, %v3198
      %v3215 = vadd.f32 %v2928, %v3199
      %v3216 = vadd.f32 %v2933, %v3200
      %v3217 = vadd.f32 %v2936, %v3201
      %v3218 = vadd.f32 %v2941, %v3202
      %v3219 = vadd.f32 %v2944, %v3203
      %v3220 = vadd.f32 %v2949, %v3204
      %v3221 = vadd.f32 %v2952, %v3205
      %v3222 = vadd.f32 %v2957, %v3206
      %v3223 = vadd.f32 %v2960, %v3207
      %v3224 = vadd.f32 %v2965, %v3208
      %v3225 = vadd.f32 %v2968, %v3209
      %v3226 = vadd.f32 %v2973, %v3210
      %v3227 = vadd.f32 %v2976, %v3211
      %v3228 = vadd.f32 %v2981, %v3212
      %v3229 = vadd.f32 %v2984, %v3213
      %v3230 = vmax.f32 %v3214, 0.0
      %v3231 = vmax.f32 %v3215, 0.0
      %v3232 = vmax.f32 %v3216, 0.0
      %v3233 = vmax.f32 %v3217, 0.0
      %v3234 = vmax.f32 %v3218, 0.0
      %v3235 = vmax.f32 %v3219, 0.0
      %v3236 = vmax.f32 %v3220, 0.0
      %v3237 = vmax.f32 %v3221, 0.0
      %v3238 = vmax.f32 %v3222, 0.0
      %v3239 = vmax.f32 %v3223, 0.0
      %v3240 = vmax.f32 %v3224, 0.0
      %v3241 = vmax.f32 %v3225, 0.0
      %v3242 = vmax.f32 %v3226, 0.0
      %v3243 = vmax.f32 %v3227, 0.0
      %v3244 = vmax.f32 %v3228, 0.0
      %v3245 = vmax.f32 %v3229, 0.0
      %3246 = vst [vmem:[%s443] sm:$0xff] %v3230
      %3247 = vst [vmem:[%s443 + $0x8] sm:$0xff] %v3231
      %3248 = vst [vmem:[%s443 + $0x10] sm:$0xff] %v3232
      %3249 = vst [vmem:[%s443 + $0x18] sm:$0xff] %v3233
      %3250 = vst [vmem:[%s443 + $0x20] sm:$0xff] %v3234
      %3251 = vst [vmem:[%s443 + $0x28] sm:$0xff] %v3235
      %3252 = vst [vmem:[%s443 + $0x30] sm:$0xff] %v3236
      %3253 = vst [vmem:[%s443 + $0x38] sm:$0xff] %v3237
      %3254 = vst [vmem:[%s443 + $0x40] sm:$0xff] %v3238
      %3255 = vst [vmem:[%s443 + $0x48] sm:$0xff] %v3239
      %3256 = vst [vmem:[%s443 + $0x50] sm:$0xff] %v3240
      %3257 = vst [vmem:[%s443 + $0x58] sm:$0xff] %v3241
      %3258 = vst [vmem:[%s443 + $0x60] sm:$0xff] %v3242
      %3259 = vst [vmem:[%s443 + $0x68] sm:$0xff] %v3243
      %3260 = vst [vmem:[%s443 + $0x70] sm:$0xff] %v3244
      %3261 = vst [vmem:[%s443 + $0x78] sm:$0xff] %v3245
      %s3262 = smul.u32 8, %s25
      %p3263 = scmp.lt.s32.totalorder %s24, 1
      %s3264 = scalar_select %p3263, %s24, 1
      %p3265 = scmp.lt.s32.totalorder %s3262, 15
      %s3266 = scalar_select %p3265, %s3262, 15
      %s3267 = smul.addr %s3266, 2
      %s3268 = smul.addr %s3264, 32
      %s3269 = sadd.s32 %s3267, %s3268
      %s3270 = smul.addr %s3269, 8
      %s3271 = scalar_lea.vmem %s9, %s3270
      // Predicated region
      $region57: #{bottleneck_forward.1} parent=55 // pred_check
        %p3272 = pneg %p262
      $region58: #{bottleneck_forward.1} parent=55 // pred_check_branch
        %3274 = sbr.rel (%p3272) target = $region60
      $region59: #{bottleneck_forward.1} parent=55 // pred_region
        %s3275 = smul.u32 8, %s25
      $region60: #{bottleneck_forward.1} parent=55 // pred_fallthru
        _
    $region56: #{bottleneck_forward.1} parent=5 // pred_fallthru
      _
    %p3276 = scmp.le.s32.totalorder 2, %s15
    // Predicated region
    $region61: #{bottleneck_forward.1} parent=5 // pred_check
      %p3277 = pneg %p3276
    $region62: #{bottleneck_forward.1} parent=5 // pred_check_branch
      %3279 = sbr.rel (%p3277) target = $region64
    $region63: #{bottleneck_forward.1} parent=5 // pred_region
      %s3280 = ssub.s32 %s15, 2
      // Predicated region
      $region65: #{bottleneck_forward.1} parent=63 // pred_check
        %p3281 = pneg %p268
      $region66: #{bottleneck_forward.1} parent=63 // pred_check_branch
        %3283 = sbr.rel (%p3281) target = $region68
      $region67: #{bottleneck_forward.1} parent=63 // pred_region
        %s3284 = smul.u32 8, %s27
        %p3285 = scmp.lt.s32.totalorder %s26, 1
        %s3286 = scalar_select %p3285, %s26, 1
        %p3287 = scmp.lt.s32.totalorder %s3284, 15
        %s3288 = scalar_select %p3287, %s3284, 15
        %s3289 = smul.addr %s3288, 2
        %s3290 = smul.addr %s3286, 32
        %s3291 = sadd.s32 %s3289, %s3290
        %s3292 = smul.addr %s3291, 8
        %s3293 = scalar_lea.vmem %s9, %s3292
      $region68: #{bottleneck_forward.1} parent=63 // pred_fallthru
        _
    $region64: #{bottleneck_forward.1} parent=5 // pred_fallthru
      _
  $region6: #{bottleneck_forward.1} parent=0 // loop_footer
    %s19 = sadd.s32 1, %s15
  $region7: #{bottleneck_forward.1} parent=0 // loop_footer_branch
    %14 = sbr.rel target = $region3
  $region8: #{bottleneck_forward.1} parent=0 // loop_exit
    _

</llo_original>
